<compile_context>
chip_gen: v7x
topology: tpu7x:2x2x1
jax: 0.10.0
libtpu: 0.0.40
codegen_flags: <defaults>
</compile_context>

<pallas_src>
import jax
import jax.numpy as jnp
from jax import lax
from jax.experimental import pallas as pl
from jax.experimental.pallas import tpu as pltpu

F32 = jnp.float32


def _silu(x):
    return x * jax.nn.sigmoid(x)


# ----------------------------- parameter init -------------------------------

def init_mlp(key, dims, use_activation=True, activate_last=False, bias_last=True):
    """Mirrors the PyTorch MLP: Linear (+SiLU between layers)."""
    depth = len(dims) - 1
    layers, act_flags = [], []
    for i, (din, dout) in enumerate(zip(dims[:-1], dims[1:])):
        key, kw, kb = jax.random.split(key, 3)
        w = (jax.random.normal(kw, (din, dout), F32) / jnp.sqrt(din)).astype(F32)
        last = i == depth - 1
        b = None
        if (not last) or bias_last:
            b = (0.05 * jax.random.normal(kb, (1, dout), F32)).astype(F32)
        layers.append((w, b))
        act_flags.append(bool(use_activation and ((not last) or activate_last)))
    return (layers, tuple(act_flags)), key


def init_egnn_multi(key, *, in_dim, hidden_dim, out_dim, depth, feat_dims,
                    message_dims, position_dims, edge_attributes_dim,
                    num_vectors=1):
    message_dim = message_dims[-1]
    hidden_sizes = [hidden_dim] * depth + [out_dim]
    in_embed, key = init_mlp(key, [in_dim, hidden_dim], use_activation=False)
    layers = []
    # NOTE: zip(hidden_sizes, hidden_sizes[:-1]) -> all conv layers are
    # hidden_dim -> hidden_dim, exactly as in the PyTorch __init__.
    for i, (in_dim_, out_dim_) in enumerate(zip(hidden_sizes, hidden_sizes[:-1])):
        if i == 0:
            v_in, v_out = 1, num_vectors
        elif i < depth - 1:
            v_in, v_out = num_vectors, num_vectors
        else:
            v_in, v_out = num_vectors, 1
        edge_sizes = [2 * in_dim_ + v_in + edge_attributes_dim] + list(message_dims)
        position_sizes = [message_dim] + list(position_dims) + [v_in * v_out]
        feat_sizes = [in_dim_ + message_dim] + list(feat_dims) + [out_dim_]
        edge_mlp, key = init_mlp(key, edge_sizes, activate_last=True)
        pos_mlp, key = init_mlp(key, position_sizes, bias_last=False)
        feat_mlp, key = init_mlp(key, feat_sizes)
        layers.append(dict(edge=edge_mlp, pos=pos_mlp, feat=feat_mlp,
                           v_in=v_in, v_out=v_out, in_dim=in_dim_))
    return dict(in_embed=in_embed, layers=layers)


# ------------------------- single-slab parameter packing --------------------

class _Slab:
    """Packs every parameter array into ONE lane-padded f32 slab.

    Each array gets an 8-sublane-aligned row region; the slab width is padded
    to a multiple of 128 lanes.  add() returns the (row_offset, rows, cols)
    descriptor the kernel uses for a static ref slice.
    """

    def __init__(self):
        self._entries = []
        self._rows = 0
        self._maxcols = 1

    def add(self, a):
        a = jnp.asarray(a, F32)
        assert a.ndim == 2, a.shape
        rows, cols = a.shape
        off = self._rows
        self._rows += -(-max(rows, 1) // 8) * 8
        self._maxcols = max(self._maxcols, cols)
        self._entries.append((a, off))
        return (off, rows, cols)

    def build(self):
        width = -(-self._maxcols // 128) * 128
        nrows = max(self._rows, 8)
        slab = jnp.zeros((nrows, width), F32)
        for a, off in self._entries:
            r, c = a.shape
            if r and c:
                slab = slab.at[off:off + r, :c].set(a)
        return slab


def _rd(slab_ref, ent):
    off, rows, cols = ent
    return slab_ref[off:off + rows, :cols]


# ----------------------------- MLP plans ------------------------------------

def _pack_mlp(slab, mlp, *, reduce_last_if_width1=False):
    layers, acts = mlp
    plan, n = [], len(layers)
    for i, ((w, b), a) in enumerate(zip(layers, acts)):
        last = i == n - 1
        if reduce_last_if_width1 and last and w.shape[1] == 1 and w.shape[0] > 1:
            # Final [din,1] projection stored transposed -> VPU multiply +
            # lane reduce instead of an MXU matmul with N=1.
            plan.append(("rowvec", slab.add(jnp.transpose(w)),
                         slab.add(b) if b is not None else None, a))
        else:
            plan.append(("dot", slab.add(w),
                         slab.add(b) if b is not None else None, a))
    return tuple(plan)


def _apply_mlp(slab, plan, x):
    for kind, w_ent, b_ent, act in plan:
        w = _rd(slab, w_ent)
        if kind == "rowvec":
            x = jnp.sum(x * w, axis=-1, keepdims=True)
        else:
            x = jnp.dot(x, w, preferred_element_type=F32)
        if b_ent is not None:
            x = x + _rd(slab, b_ent)
        if act:
            x = _silu(x)
    return x


def _pack_edge_mlp(slab, mlp, *, hdim, v_in):
    """First layer split row-wise ([h_dst | h_src | radial | edge_attr]) so the
    kernel never concatenates along the lane axis for the edge MLP input."""
    layers, acts = mlp
    (w0, b0), a0 = layers[0], acts[0]
    split = (slab.add(w0[:hdim]),
             slab.add(w0[hdim:2 * hdim]),
             slab.add(w0[2 * hdim:2 * hdim + v_in]),
             slab.add(w0[2 * hdim + v_in:]),
             slab.add(b0) if b0 is not None else None,
             a0)
    rest = _pack_mlp(slab, (layers[1:], acts[1:]))
    return dict(split=split, rest=rest, v_in=v_in)


def _apply_edge_mlp(slab, plan, h_dst, h_src, radial, edge_attr):
    w_hd, w_hs, w_rad, w_ea, b0, a0 = plan["split"]
    y = (jnp.dot(h_dst, _rd(slab, w_hd), preferred_element_type=F32)
         + jnp.dot(h_src, _rd(slab, w_hs), preferred_element_type=F32)
         + jnp.dot(edge_attr, _rd(slab, w_ea), preferred_element_type=F32))
    if plan["v_in"] == 1:
        y = y + radial * _rd(slab, w_rad)          # [E,1] * [1,M] VPU broadcast
    else:
        y = y + jnp.dot(radial, _rd(slab, w_rad), preferred_element_type=F32)
    if b0 is not None:
        y = y + _rd(slab, b0)
    if a0:
        y = _silu(y)
    return _apply_mlp(slab, plan["rest"], y)


def _pack_feat_mlp(slab, mlp, *, hdim):
    """First layer split into ([h | m_agg]) row blocks (no concatenate)."""
    layers, acts = mlp
    (w0, b0), a0 = layers[0], acts[0]
    split = (slab.add(w0[:hdim]), slab.add(w0[hdim:]),
             slab.add(b0) if b0 is not None else None, a0)
    rest = _pack_mlp(slab, (layers[1:], acts[1:]))
    return dict(split=split, rest=rest)


def _apply_feat_mlp(slab, plan, h, m_agg):
    w_h, w_m, b0, a0 = plan["split"]
    y = (jnp.dot(h, _rd(slab, w_h), preferred_element_type=F32)
         + jnp.dot(m_agg, _rd(slab, w_m), preferred_element_type=F32))
    if b0 is not None:
        y = y + _rd(slab, b0)
    if a0:
        y = _silu(y)
    return _apply_mlp(slab, plan["rest"], y)


# ------------- constant vector-mixing matrices (num_vectors > 1) ------------

def _radial_group_matrix(v_in):
    # [3*v_in, v_in]: sums each contiguous xyz triple into its radial column.
    r = jnp.arange(3 * v_in)[:, None] // 3
    c = jnp.arange(v_in)[None, :]
    return (r == c).astype(F32)


def _norm_expand_matrix(v_in):
    # [v_in, 3*v_in]: broadcasts one per-vector norm over its xyz triple.
    r = jnp.arange(v_in)[:, None]
    c = jnp.arange(3 * v_in)[None, :] // 3
    return (r == c).astype(F32)


def _base_mix_matrix(v_in, v_out):
    r = jnp.arange(3 * v_in)[:, None] % 3
    c = jnp.arange(3 * v_out)[None, :] % 3
    return (r == c).astype(F32) / float(v_in)


# --------------------------- fused forward builder --------------------------

def build_egnn_forward(params, *, num_nodes, num_edges, num_graphs=1,
                       residual=True, normalize=True, tanh=True,
                       activate_last=False, interpret=False):
    """Returns forward(node_feats, positions, edge_attrs, src, dst) backed by a
    single fused Pallas kernel.  Inputs may be batched over `num_graphs`
    (leading axis) — the grid iterates graphs and is marked "parallel" so v7x
    can shard it across both TensorCores."""
    N, E, G = num_nodes, num_edges, num_graphs

    slab = _Slab()
    in_embed_plan = _pack_mlp(slab, params["in_embed"])
    depth = len(params["layers"])
    hidden_dim = params["in_embed"][0][-1][0].shape[1]
    in_dim = params["in_embed"][0][0][0].shape[0]

    layer_plans = []
    for i, layer in enumerate(params["layers"]):
        hdim = layer["in_dim"]
        v_in, v_out = layer["v_in"], layer["v_out"]
        layer_plans.append(dict(
            v_in=v_in, v_out=v_out,
            edge=_pack_edge_mlp(slab, layer["edge"], hdim=hdim, v_in=v_in),
            pos=_pack_mlp(slab, layer["pos"], reduce_last_if_width1=True),
            feat=_pack_feat_mlp(slab, layer["feat"], hdim=hdim),
            post_act=(i < depth - 1) or activate_last,
            # Constant mixing matrices hoisted host-side into the slab
            # (only needed when num_vectors > 1; never rebuilt per layer).
            g_ent=slab.add(_radial_group_matrix(v_in)) if v_in > 1 else None,
            gt_ent=slab.add(_norm_expand_matrix(v_in)) if v_in > 1 else None,
            mix_ent=(slab.add(_base_mix_matrix(v_in, v_out))
                     if (v_in != v_out and v_in != 1) else None),
        ))

    slab_arr = slab.build()
    slab_rows, slab_width = slab_arr.shape
    v_out_last = layer_plans[-1]["v_out"]
    # Edge-attribute width from the edge MLP's first-layer split (rows of the
    # edge_attr weight block).
    ea_dim = layer_plans[0]["edge"]["split"][3][1]
    H = hidden_dim

    # -------- generation-aware VMEM budget & dense-fallback size guard ------
    try:
        vmem_cap = int(pltpu.get_tpu_info().vmem_capacity_bytes)
    except Exception:   # non-TPU tracing / older runtimes
        vmem_cap = 64 * 1024 * 1024
    vmem_limit = min(vmem_cap * 3 // 4, 112 * 1024 * 1024)
    est_bytes = 4 * (2 * (2 * E) * N
                     + 6 * (2 * E) * max(H + 3, 128)
                     + 6 * N * max(H, 128)
                     + slab_rows * slab_width)
    if est_bytes > vmem_limit:
        # TODO(synk): switch to the edge-tiled PrefetchScalarGridSpec path for
        # graphs that do not fit the fused whole-graph-in-VMEM design.
        raise ValueError(
            f"Graph too large for fused VMEM path (~{est_bytes >> 20} MiB "
            f"needed, {vmem_limit >> 20} MiB budget).")

    def kernel(nf_ref, pos_ref, ea_ref, ends_ref, idg_ref, slab_ref,
               feat_out_ref, pos_out_ref):
        # One [2E, N] one-hot built from the packed [dst ; src] endpoint ids
        # drives BOTH the fused gather and (its dst half) the fused scatter.
        ends = ends_ref[0]                                    # [2E, 1] int32
        node_ids = lax.broadcasted_iota(jnp.int32, (2 * E, N), 1)
        onehot = (ends == node_ids).astype(F32)               # exact 0/1, f32
        d_onehot = onehot[:E]                                  # dst rows

        edge_attr = ea_ref[0]                                  # [E, ea_dim]
        inv_deg = idg_ref[0]                                   # [N, 1]

        h = _apply_mlp(slab_ref, in_embed_plan, nf_ref[0])     # [N, H]
        x = pos_ref[0]                                         # [N, 3] (v_in=1)

        for lp in layer_plans:
            v_in, v_out = lp["v_in"], lp["v_out"]

            # ---- fused gather: one f32 MXU pass for h/x at both endpoints --
            rhs = jnp.concatenate([h, x], axis=-1)             # [N, H + 3*v_in]
            gathered = jnp.dot(onehot, rhs, preferred_element_type=F32)
            h_dst, x_dst = gathered[:E, :H], gathered[:E, H:]
            h_src, x_src = gathered[E:, :H], gathered[E:, H:]
            diff = x_dst - x_src                               # [E, 3*v_in]

            if v_in == 1:
                radial = jnp.sum(diff * diff, axis=-1, keepdims=True)   # [E,1]
            else:
                radial = jnp.dot(diff * diff, _rd(slab_ref, lp["g_ent"]),
                                 preferred_element_type=F32)

            if normalize:
                norm = jnp.sqrt(radial) + 1e-8
                if v_in == 1:
                    diff = diff / norm                         # exact divide
                else:
                    diff = diff / jnp.dot(norm, _rd(slab_ref, lp["gt_ent"]),
                                          preferred_element_type=F32)

            # ---- edge / position MLPs (first layers split: no concats) -----
            m = _apply_edge_mlp(slab_ref, lp["edge"], h_dst, h_src, radial,
                                edge_attr)
            # TODO(synk): attention_func path (use_attention=True) not implemented.
            w = _apply_mlp(slab_ref, lp["pos"], m)             # [E, v_in*v_out]
            if tanh:
                w = jnp.tanh(w)

            if v_in == 1 and v_out == 1:
                trans = diff * w                               # [E,3] * [E,1]
            else:
                # TODO(synk): general multi-vector mixing kept as a reshape
                # contraction; only exercised when num_vectors > 1.
                d3 = diff.reshape(E, v_in, 1, 3)
                wv = w.reshape(E, v_in, v_out, 1)
                trans = jnp.sum(d3 * wv, axis=1).reshape(E, v_out * 3)

            # ---- fused scatter: [m | trans] in one DT-free MXU pass --------
            msg_dim = m.shape[-1]
            sc = jnp.concatenate([m, trans], axis=-1)          # [E, msg+3*v_out]
            agg = lax.dot_general(d_onehot, sc, (((0,), (0,)), ((), ())),
                                  preferred_element_type=F32)  # [N, msg+3*v_out]
            m_agg = agg[:, :msg_dim]                           # sum of messages
            t_agg = agg[:, msg_dim:] * inv_deg                 # mean of trans

            # TODO(synk): exact multi-vector base mixing of
            # EquiCoordGraphConv_Multi was not provided; identity / broadcast /
            # mean mixing is used here.
            if v_in == v_out:
                base = x
            elif v_in == 1:
                base = jnp.tile(x, (1, v_out))
            else:
                base = jnp.dot(x, _rd(slab_ref, lp["mix_ent"]),
                               preferred_element_type=F32)
            x = base + t_agg

            # ---- node/feature update (m_agg never leaves VMEM) -------------
            z = _apply_feat_mlp(slab_ref, lp["feat"], h, m_agg)
            if residual:
                z = z + h
            if lp["post_act"]:
                z = _silu(z)
            h = z

        feat_out_ref[0] = h
        # NOTE: narrow-lane [N, 3*v_out] store happens once per graph; padding
        # it lane-side is lowest-priority per profiling.
        pos_out_ref[0] = x

    fused = pl.pallas_call(
        kernel,
        grid=(G,),
        out_shape=(jax.ShapeDtypeStruct((G, N, hidden_dim), F32),
                   jax.ShapeDtypeStruct((G, N, 3 * v_out_last), F32)),
        in_specs=[
            pl.BlockSpec((1, N, in_dim), lambda g: (g, 0, 0)),          # node feats
            pl.BlockSpec((1, N, 3), lambda g: (g, 0, 0)),               # positions
            pl.BlockSpec((1, E, ea_dim), lambda g: (g, 0, 0)),          # edge attrs
            pl.BlockSpec((1, 2 * E, 1), lambda g: (g, 0, 0)),           # [dst;src]
            pl.BlockSpec((1, N, 1), lambda g: (g, 0, 0)),               # inv_deg
            pl.BlockSpec((slab_rows, slab_width), lambda g: (0, 0)),    # param slab
        ],
        out_specs=(
            pl.BlockSpec((1, N, hidden_dim), lambda g: (g, 0, 0)),
            pl.BlockSpec((1, N, 3 * v_out_last), lambda g: (g, 0, 0)),
        ),
        compiler_params=pltpu.CompilerParams(
            dimension_semantics=("parallel",),
            vmem_limit_bytes=int(vmem_limit)),
        interpret=interpret,
    )

    def forward(node_feats, positions, edge_attrs, src, dst):
        squeeze = node_feats.ndim == 2
        if squeeze:
            assert G == 1, "unbatched inputs require num_graphs == 1"
            node_feats, positions, edge_attrs = (node_feats[None], positions[None],
                                                 edge_attrs[None])
            src, dst = src[None], dst[None]
        src = src.astype(jnp.int32)
        dst = dst.astype(jnp.int32)
        # Endpoint ids packed [dst ; src]: one one-hot serves gather + scatter.
        ends = jnp.concatenate([dst, src], axis=1).reshape(G, 2 * E, 1)
        deg = jax.vmap(lambda d: jnp.zeros((N,), F32).at[d].add(1.0))(dst)
        # TODO(synk): verify the zero-in-degree / mean-over-in-edges convention
        # against the dgl aggregation used by the reference module.
        inv_deg = (1.0 / jnp.maximum(deg, 1.0)).reshape(G, N, 1)
        feats, pos = fused(node_feats.astype(F32), positions.astype(F32),
                           edge_attrs.astype(F32), ends, inv_deg, slab_arr)
        if squeeze:
            return feats[0], pos[0]
        return feats, pos

    return forward


# --------------------------------- main --------------------------------------

if __name__ == "__main__":
    key = jax.random.PRNGKey(0)
    NG, N, E = 2, 16, 48                       # batch-of-graphs exercises the grid
    in_dim, hidden_dim, out_dim, depth = 16, 32, 32, 3
    feat_dims, message_dims, position_dims = [32], [32, 32], [32]
    edge_attr_dim = 4

    kp, kf, kx, ke, ks, kd = jax.random.split(key, 6)
    params = init_egnn_multi(
        kp, in_dim=in_dim, hidden_dim=hidden_dim, out_dim=out_dim, depth=depth,
        feat_dims=feat_dims, message_dims=message_dims,
        position_dims=position_dims, edge_attributes_dim=edge_attr_dim,
        num_vectors=1)

    node_feats = jax.random.normal(kf, (NG, N, in_dim), F32)
    positions = jax.random.normal(kx, (NG, N, 3), F32)
    edge_attrs = jax.random.normal(ke, (NG, E, edge_attr_dim), F32)
    src = jax.random.randint(ks, (NG, E), 0, N)
    dst = jax.random.randint(kd, (NG, E), 0, N)

    forward = build_egnn_forward(
        params, num_nodes=N, num_edges=E, num_graphs=NG,
        residual=True, normalize=True, tanh=True, activate_last=False)

    feats, pos = jax.jit(forward)(node_feats, positions, edge_attrs, src, dst)
    jax.block_until_ready((feats, pos))

    assert feats.shape == (NG, N, hidden_dim), feats.shape
    assert pos.shape == (NG, N, 3), pos.shape
    assert bool(jnp.all(jnp.isfinite(feats))) and bool(jnp.all(jnp.isfinite(pos)))
    print("KERNEL_OK")
</pallas_src>

<mosaic_0001>
module attributes {stable_mosaic.version = 11 : i64} {
  func.func private @main(%arg0: i32) attributes {dimension_semantics = [#tpu.dimension_semantics<core_parallel>], iteration_bounds = array<i64: 2>, tpu.core_type = #tpu.core_type<sc_scalar_subcore>, window_params = []} {
    return
  }
}

module attributes {stable_mosaic.version = 11 : i64} {
  func.func private @main(%arg0: i32) attributes {dimension_semantics = [#tpu.dimension_semantics<core_parallel>], iteration_bounds = array<i64: 2>, tpu.core_type = #tpu.core_type<sc_scalar_subcore>, window_params = []} {
    return
  }
}

module attributes {stable_mosaic.version = 11 : i64} {
  func.func @kernel(%arg0: i32, %arg1: memref<1x16x16xf32, #tpu.memory_space<vmem>>, %arg2: memref<1x16x3xf32, #tpu.memory_space<vmem>>, %arg3: memref<1x48x4xf32, #tpu.memory_space<vmem>>, %arg4: memref<1x96x1xi32, #tpu.memory_space<vmem>>, %arg5: memref<1x16x1xf32, #tpu.memory_space<vmem>>, %arg6: memref<888x128xf32, #tpu.memory_space<vmem>>, %arg7: memref<1x16x32xf32, #tpu.memory_space<vmem>>, %arg8: memref<1x16x3xf32, #tpu.memory_space<vmem>>) attributes {dimension_semantics = [#tpu.dimension_semantics<parallel>], iteration_bounds = array<i64: 2>, scalar_prefetch = 0 : i64, scratch_operands = 0 : i64, tpu.core_type = #tpu.core_type<tc>, window_params = [{transform_indices = @transform_0, window_bounds = array<i64: 1, 16, 16>}, {transform_indices = @transform_1, window_bounds = array<i64: 1, 16, 3>}, {transform_indices = @transform_2, window_bounds = array<i64: 1, 48, 4>}, {transform_indices = @transform_3, window_bounds = array<i64: 1, 96, 1>}, {transform_indices = @transform_4, window_bounds = array<i64: 1, 16, 1>}, {pipeline_mode = #tpu.pipeline_mode<synchronous>, transform_indices = @transform_5, window_bounds = array<i64: 888, 128>}, {transform_indices = @transform_6, window_bounds = array<i64: 1, 16, 32>}, {transform_indices = @transform_7, window_bounds = array<i64: 1, 16, 3>}]} {
    %c0 = arith.constant 0 : index
    %c0_0 = arith.constant 0 : index
    %c0_1 = arith.constant 0 : index
    %0 = vector.load %arg4[%c0, %c0_0, %c0_1] : memref<1x96x1xi32, #tpu.memory_space<vmem>>, vector<1x96x1xi32>
    %1 = vector.shape_cast %0 : vector<1x96x1xi32> to vector<96x1xi32>
    %2 = tpu.iota {dimensions = array<i32: 1>} : vector<96x16xi32>
    %3 = vector.broadcast %1 : vector<96x1xi32> to vector<96x16xi32>
    %4 = arith.cmpi eq, %3, %2 : vector<96x16xi32>
    %5 = arith.extui %4 : vector<96x16xi1> to vector<96x16xi32>
    %6 = arith.sitofp %5 : vector<96x16xi32> to vector<96x16xf32>
    %7 = vector.extract_strided_slice %6 {offsets = [0, 0], sizes = [48, 16], strides = [1, 1]} : vector<96x16xf32> to vector<48x16xf32>
    %c0_2 = arith.constant 0 : index
    %c0_3 = arith.constant 0 : index
    %c0_4 = arith.constant 0 : index
    %8 = vector.load %arg3[%c0_2, %c0_3, %c0_4] : memref<1x48x4xf32, #tpu.memory_space<vmem>>, vector<1x48x4xf32>
    %9 = vector.shape_cast %8 : vector<1x48x4xf32> to vector<48x4xf32>
    %c0_5 = arith.constant 0 : index
    %c0_6 = arith.constant 0 : index
    %c0_7 = arith.constant 0 : index
    %10 = vector.load %arg5[%c0_5, %c0_6, %c0_7] : memref<1x16x1xf32, #tpu.memory_space<vmem>>, vector<1x16x1xf32>
    %11 = vector.shape_cast %10 : vector<1x16x1xf32> to vector<16x1xf32>
    %c0_8 = arith.constant 0 : index
    %c0_9 = arith.constant 0 : index
    %c0_10 = arith.constant 0 : index
    %12 = vector.load %arg1[%c0_8, %c0_9, %c0_10] : memref<1x16x16xf32, #tpu.memory_space<vmem>>, vector<1x16x16xf32>
    %13 = vector.shape_cast %12 : vector<1x16x16xf32> to vector<16x16xf32>
    %c0_11 = arith.constant 0 : index
    %c0_12 = arith.constant 0 : index
    %14 = vector.load %arg6[%c0_11, %c0_12] : memref<888x128xf32, #tpu.memory_space<vmem>>, vector<16x32xf32>
    %cst = arith.constant dense<0.000000e+00> : vector<16x32xf32>
    %15 = tpu.matmul %13, %14, %cst {dimension_numbers = #tpu.dot_dimension_numbers<[1], [0], [0], [1], [0, 0, 1, 1], [], []>} : vector<16x16xf32>, vector<16x32xf32>, vector<16x32xf32> -> vector<16x32xf32>
    %c16 = arith.constant 16 : index
    %c0_13 = arith.constant 0 : index
    %16 = vector.load %arg6[%c16, %c0_13] : memref<888x128xf32, #tpu.memory_space<vmem>>, vector<1x32xf32>
    %17 = vector.broadcast %16 : vector<1x32xf32> to vector<16x32xf32>
    %18 = arith.addf %15, %17 : vector<16x32xf32>
    %c0_14 = arith.constant 0 : index
    %c0_15 = arith.constant 0 : index
    %c0_16 = arith.constant 0 : index
    %19 = vector.load %arg2[%c0_14, %c0_15, %c0_16] : memref<1x16x3xf32, #tpu.memory_space<vmem>>, vector<1x16x3xf32>
    %20 = vector.shape_cast %19 : vector<1x16x3xf32> to vector<16x3xf32>
    %21 = tpu.concatenate %18, %20 in 1 : vector<16x32xf32>, vector<16x3xf32> -> vector<16x35xf32>
    %cst_17 = arith.constant dense<0.000000e+00> : vector<96x35xf32>
    %22 = tpu.matmul %6, %21, %cst_17 {dimension_numbers = #tpu.dot_dimension_numbers<[1], [0], [0], [1], [0, 0, 1, 1], [], []>} : vector<96x16xf32>, vector<16x35xf32>, vector<96x35xf32> -> vector<96x35xf32>
    %23 = vector.extract_strided_slice %22 {offsets = [0, 0], sizes = [48, 32], strides = [1, 1]} : vector<96x35xf32> to vector<48x32xf32>
    %24 = vector.extract_strided_slice %22 {offsets = [0, 32], sizes = [48, 3], strides = [1, 1]} : vector<96x35xf32> to vector<48x3xf32>
    %25 = vector.extract_strided_slice %22 {offsets = [48, 0], sizes = [48, 32], strides = [1, 1]} : vector<96x35xf32> to vector<48x32xf32>
    %26 = vector.extract_strided_slice %22 {offsets = [48, 32], sizes = [48, 3], strides = [1, 1]} : vector<96x35xf32> to vector<48x3xf32>
    %27 = arith.subf %24, %26 : vector<48x3xf32>
    %28 = arith.mulf %27, %27 : vector<48x3xf32>
    %cst_18 = arith.constant dense<0.000000e+00> : vector<48xf32>
    %29 = vector.multi_reduction <add>, %28, %cst_18 [1] : vector<48x3xf32> to vector<48xf32>
    %30 = vector.shape_cast %29 : vector<48xf32> to vector<48x1xf32>
    %31 = math.sqrt %30 : vector<48x1xf32>
    %cst_19 = arith.constant 9.99999993E-9 : f32
    %32 = vector.broadcast %cst_19 : f32 to vector<48x1xf32>
    %33 = arith.addf %31, %32 : vector<48x1xf32>
    %34 = vector.broadcast %33 : vector<48x1xf32> to vector<48x3xf32>
    %35 = arith.divf %27, %34 : vector<48x3xf32>
    %c24 = arith.constant 24 : index
    %c0_20 = arith.constant 0 : index
    %36 = vector.load %arg6[%c24, %c0_20] : memref<888x128xf32, #tpu.memory_space<vmem>>, vector<32x32xf32>
    %cst_21 = arith.constant dense<0.000000e+00> : vector<48x32xf32>
    %37 = tpu.matmul %23, %36, %cst_21 {dimension_numbers = #tpu.dot_dimension_numbers<[1], [0], [0], [1], [0, 0, 1, 1], [], []>} : vector<48x32xf32>, vector<32x32xf32>, vector<48x32xf32> -> vector<48x32xf32>
    %c56 = arith.constant 56 : index
    %c0_22 = arith.constant 0 : index
    %38 = vector.load %arg6[%c56, %c0_22] : memref<888x128xf32, #tpu.memory_space<vmem>>, vector<32x32xf32>
    %cst_23 = arith.constant dense<0.000000e+00> : vector<48x32xf32>
    %39 = tpu.matmul %25, %38, %cst_23 {dimension_numbers = #tpu.dot_dimension_numbers<[1], [0], [0], [1], [0, 0, 1, 1], [], []>} : vector<48x32xf32>, vector<32x32xf32>, vector<48x32xf32> -> vector<48x32xf32>
    %40 = arith.addf %37, %39 : vector<48x32xf32>
    %c96 = arith.constant 96 : index
    %c0_24 = arith.constant 0 : index
    %41 = vector.load %arg6[%c96, %c0_24] : memref<888x128xf32, #tpu.memory_space<vmem>>, vector<4x32xf32>
    %cst_25 = arith.constant dense<0.000000e+00> : vector<48x32xf32>
    %42 = tpu.matmul %9, %41, %cst_25 {dimension_numbers = #tpu.dot_dimension_numbers<[1], [0], [0], [1], [0, 0, 1, 1], [], []>} : vector<48x4xf32>, vector<4x32xf32>, vector<48x32xf32> -> vector<48x32xf32>
    %43 = arith.addf %40, %42 : vector<48x32xf32>
    %c88 = arith.constant 88 : index
    %c0_26 = arith.constant 0 : index
    %44 = vector.load %arg6[%c88, %c0_26] : memref<888x128xf32, #tpu.memory_space<vmem>>, vector<1x32xf32>
    %45 = vector.broadcast %30 : vector<48x1xf32> to vector<48x32xf32>
    %46 = vector.broadcast %44 : vector<1x32xf32> to vector<48x32xf32>
    %47 = arith.mulf %45, %46 : vector<48x32xf32>
    %48 = arith.addf %43, %47 : vector<48x32xf32>
    %c104 = arith.constant 104 : index
    %c0_27 = arith.constant 0 : index
    %49 = vector.load %arg6[%c104, %c0_27] : memref<888x128xf32, #tpu.memory_space<vmem>>, vector<1x32xf32>
    %50 = vector.broadcast %49 : vector<1x32xf32> to vector<48x32xf32>
    %51 = arith.addf %48, %50 : vector<48x32xf32>
    %52 = arith.negf %51 : vector<48x32xf32>
    %53 = math.exp %52 : vector<48x32xf32>
    %cst_28 = arith.constant 1.000000e+00 : f32
    %54 = vector.broadcast %cst_28 : f32 to vector<48x32xf32>
    %55 = arith.addf %54, %53 : vector<48x32xf32>
    %56 = arith.divf %54, %55 : vector<48x32xf32>
    %57 = arith.mulf %51, %56 : vector<48x32xf32>
    %c112 = arith.constant 112 : index
    %c0_29 = arith.constant 0 : index
    %58 = vector.load %arg6[%c112, %c0_29] : memref<888x128xf32, #tpu.memory_space<vmem>>, vector<32x32xf32>
    %cst_30 = arith.constant dense<0.000000e+00> : vector<48x32xf32>
    %59 = tpu.matmul %57, %58, %cst_30 {dimension_numbers = #tpu.dot_dimension_numbers<[1], [0], [0], [1], [0, 0, 1, 1], [], []>} : vector<48x32xf32>, vector<32x32xf32>, vector<48x32xf32> -> vector<48x32xf32>
    %c144 = arith.constant 144 : index
    %c0_31 = arith.constant 0 : index
    %60 = vector.load %arg6[%c144, %c0_31] : memref<888x128xf32, #tpu.memory_space<vmem>>, vector<1x32xf32>
    %61 = vector.broadcast %60 : vector<1x32xf32> to vector<48x32xf32>
    %62 = arith.addf %59, %61 : vector<48x32xf32>
    %63 = arith.negf %62 : vector<48x32xf32>
    %64 = math.exp %63 : vector<48x32xf32>
    %cst_32 = arith.constant 1.000000e+00 : f32
    %65 = vector.broadcast %cst_32 : f32 to vector<48x32xf32>
    %66 = arith.addf %65, %64 : vector<48x32xf32>
    %67 = arith.divf %65, %66 : vector<48x32xf32>
    %68 = arith.mulf %62, %67 : vector<48x32xf32>
    %c152 = arith.constant 152 : index
    %c0_33 = arith.constant 0 : index
    %69 = vector.load %arg6[%c152, %c0_33] : memref<888x128xf32, #tpu.memory_space<vmem>>, vector<32x32xf32>
    %cst_34 = arith.constant dense<0.000000e+00> : vector<48x32xf32>
    %70 = tpu.matmul %68, %69, %cst_34 {dimension_numbers = #tpu.dot_dimension_numbers<[1], [0], [0], [1], [0, 0, 1, 1], [], []>} : vector<48x32xf32>, vector<32x32xf32>, vector<48x32xf32> -> vector<48x32xf32>
    %c184 = arith.constant 184 : index
    %c0_35 = arith.constant 0 : index
    %71 = vector.load %arg6[%c184, %c0_35] : memref<888x128xf32, #tpu.memory_space<vmem>>, vector<1x32xf32>
    %72 = vector.broadcast %71 : vector<1x32xf32> to vector<48x32xf32>
    %73 = arith.addf %70, %72 : vector<48x32xf32>
    %74 = arith.negf %73 : vector<48x32xf32>
    %75 = math.exp %74 : vector<48x32xf32>
    %cst_36 = arith.constant 1.000000e+00 : f32
    %76 = vector.broadcast %cst_36 : f32 to vector<48x32xf32>
    %77 = arith.addf %76, %75 : vector<48x32xf32>
    %78 = arith.divf %76, %77 : vector<48x32xf32>
    %79 = arith.mulf %73, %78 : vector<48x32xf32>
    %c192 = arith.constant 192 : index
    %c0_37 = arith.constant 0 : index
    %80 = vector.load %arg6[%c192, %c0_37] : memref<888x128xf32, #tpu.memory_space<vmem>>, vector<1x32xf32>
    %81 = vector.broadcast %80 : vector<1x32xf32> to vector<48x32xf32>
    %82 = arith.mulf %79, %81 : vector<48x32xf32>
    %cst_38 = arith.constant dense<0.000000e+00> : vector<48xf32>
    %83 = vector.multi_reduction <add>, %82, %cst_38 [1] : vector<48x32xf32> to vector<48xf32>
    %84 = vector.shape_cast %83 : vector<48xf32> to vector<48x1xf32>
    %85 = math.tanh %84 : vector<48x1xf32>
    %86 = vector.broadcast %85 : vector<48x1xf32> to vector<48x3xf32>
    %87 = arith.mulf %35, %86 : vector<48x3xf32>
    %88 = tpu.concatenate %68, %87 in 1 : vector<48x32xf32>, vector<48x3xf32> -> vector<48x35xf32>
    %cst_39 = arith.constant dense<0.000000e+00> : vector<16x35xf32>
    %89 = tpu.matmul %7, %88, %cst_39 {dimension_numbers = #tpu.dot_dimension_numbers<[0], [0], [1], [1], [0, 1, 1, 1], [], []>} : vector<48x16xf32>, vector<48x35xf32>, vector<16x35xf32> -> vector<16x35xf32>
    %90 = vector.extract_strided_slice %89 {offsets = [0, 0], sizes = [16, 32], strides = [1, 1]} : vector<16x35xf32> to vector<16x32xf32>
    %91 = vector.extract_strided_slice %89 {offsets = [0, 32], sizes = [16, 3], strides = [1, 1]} : vector<16x35xf32> to vector<16x3xf32>
    %92 = vector.broadcast %11 : vector<16x1xf32> to vector<16x3xf32>
    %93 = arith.mulf %91, %92 : vector<16x3xf32>
    %94 = arith.addf %20, %93 : vector<16x3xf32>
    %c200 = arith.constant 200 : index
    %c0_40 = arith.constant 0 : index
    %95 = vector.load %arg6[%c200, %c0_40] : memref<888x128xf32, #tpu.memory_space<vmem>>, vector<32x32xf32>
    %cst_41 = arith.constant dense<0.000000e+00> : vector<16x32xf32>
    %96 = tpu.matmul %18, %95, %cst_41 {dimension_numbers = #tpu.dot_dimension_numbers<[1], [0], [0], [1], [0, 0, 1, 1], [], []>} : vector<16x32xf32>, vector<32x32xf32>, vector<16x32xf32> -> vector<16x32xf32>
    %c232 = arith.constant 232 : index
    %c0_42 = arith.constant 0 : index
    %97 = vector.load %arg6[%c232, %c0_42] : memref<888x128xf32, #tpu.memory_space<vmem>>, vector<32x32xf32>
    %cst_43 = arith.constant dense<0.000000e+00> : vector<16x32xf32>
    %98 = tpu.matmul %90, %97, %cst_43 {dimension_numbers = #tpu.dot_dimension_numbers<[1], [0], [0], [1], [0, 0, 1, 1], [], []>} : vector<16x32xf32>, vector<32x32xf32>, vector<16x32xf32> -> vector<16x32xf32>
    %99 = arith.addf %96, %98 : vector<16x32xf32>
    %c264 = arith.constant 264 : index
    %c0_44 = arith.constant 0 : index
    %100 = vector.load %arg6[%c264, %c0_44] : memref<888x128xf32, #tpu.memory_space<vmem>>, vector<1x32xf32>
    %101 = vector.broadcast %100 : vector<1x32xf32> to vector<16x32xf32>
    %102 = arith.addf %99, %101 : vector<16x32xf32>
    %103 = arith.negf %102 : vector<16x32xf32>
    %104 = math.exp %103 : vector<16x32xf32>
    %cst_45 = arith.constant 1.000000e+00 : f32
    %105 = vector.broadcast %cst_45 : f32 to vector<16x32xf32>
    %106 = arith.addf %105, %104 : vector<16x32xf32>
    %107 = arith.divf %105, %106 : vector<16x32xf32>
    %108 = arith.mulf %102, %107 : vector<16x32xf32>
    %c272 = arith.constant 272 : index
    %c0_46 = arith.constant 0 : index
    %109 = vector.load %arg6[%c272, %c0_46] : memref<888x128xf32, #tpu.memory_space<vmem>>, vector<32x32xf32>
    %cst_47 = arith.constant dense<0.000000e+00> : vector<16x32xf32>
    %110 = tpu.matmul %108, %109, %cst_47 {dimension_numbers = #tpu.dot_dimension_numbers<[1], [0], [0], [1], [0, 0, 1, 1], [], []>} : vector<16x32xf32>, vector<32x32xf32>, vector<16x32xf32> -> vector<16x32xf32>
    %c304 = arith.constant 304 : index
    %c0_48 = arith.constant 0 : index
    %111 = vector.load %arg6[%c304, %c0_48] : memref<888x128xf32, #tpu.memory_space<vmem>>, vector<1x32xf32>
    %112 = vector.broadcast %111 : vector<1x32xf32> to vector<16x32xf32>
    %113 = arith.addf %110, %112 : vector<16x32xf32>
    %114 = arith.addf %113, %18 : vector<16x32xf32>
    %115 = arith.negf %114 : vector<16x32xf32>
    %116 = math.exp %115 : vector<16x32xf32>
    %cst_49 = arith.constant 1.000000e+00 : f32
    %117 = vector.broadcast %cst_49 : f32 to vector<16x32xf32>
    %118 = arith.addf %117, %116 : vector<16x32xf32>
    %119 = arith.divf %117, %118 : vector<16x32xf32>
    %120 = arith.mulf %114, %119 : vector<16x32xf32>
    %121 = tpu.concatenate %120, %94 in 1 : vector<16x32xf32>, vector<16x3xf32> -> vector<16x35xf32>
    %cst_50 = arith.constant dense<0.000000e+00> : vector<96x35xf32>
    %122 = tpu.matmul %6, %121, %cst_50 {dimension_numbers = #tpu.dot_dimension_numbers<[1], [0], [0], [1], [0, 0, 1, 1], [], []>} : vector<96x16xf32>, vector<16x35xf32>, vector<96x35xf32> -> vector<96x35xf32>
    %123 = vector.extract_strided_slice %122 {offsets = [0, 0], sizes = [48, 32], strides = [1, 1]} : vector<96x35xf32> to vector<48x32xf32>
    %124 = vector.extract_strided_slice %122 {offsets = [0, 32], sizes = [48, 3], strides = [1, 1]} : vector<96x35xf32> to vector<48x3xf32>
    %125 = vector.extract_strided_slice %122 {offsets = [48, 0], sizes = [48, 32], strides = [1, 1]} : vector<96x35xf32> to vector<48x32xf32>
    %126 = vector.extract_strided_slice %122 {offsets = [48, 32], sizes = [48, 3], strides = [1, 1]} : vector<96x35xf32> to vector<48x3xf32>
    %127 = arith.subf %124, %126 : vector<48x3xf32>
    %128 = arith.mulf %127, %127 : vector<48x3xf32>
    %cst_51 = arith.constant dense<0.000000e+00> : vector<48xf32>
    %129 = vector.multi_reduction <add>, %128, %cst_51 [1] : vector<48x3xf32> to vector<48xf32>
    %130 = vector.shape_cast %129 : vector<48xf32> to vector<48x1xf32>
    %131 = math.sqrt %130 : vector<48x1xf32>
    %cst_52 = arith.constant 9.99999993E-9 : f32
    %132 = vector.broadcast %cst_52 : f32 to vector<48x1xf32>
    %133 = arith.addf %131, %132 : vector<48x1xf32>
    %134 = vector.broadcast %133 : vector<48x1xf32> to vector<48x3xf32>
    %135 = arith.divf %127, %134 : vector<48x3xf32>
    %c312 = arith.constant 312 : index
    %c0_53 = arith.constant 0 : index
    %136 = vector.load %arg6[%c312, %c0_53] : memref<888x128xf32, #tpu.memory_space<vmem>>, vector<32x32xf32>
    %cst_54 = arith.constant dense<0.000000e+00> : vector<48x32xf32>
    %137 = tpu.matmul %123, %136, %cst_54 {dimension_numbers = #tpu.dot_dimension_numbers<[1], [0], [0], [1], [0, 0, 1, 1], [], []>} : vector<48x32xf32>, vector<32x32xf32>, vector<48x32xf32> -> vector<48x32xf32>
    %c344 = arith.constant 344 : index
    %c0_55 = arith.constant 0 : index
    %138 = vector.load %arg6[%c344, %c0_55] : memref<888x128xf32, #tpu.memory_space<vmem>>, vector<32x32xf32>
    %cst_56 = arith.constant dense<0.000000e+00> : vector<48x32xf32>
    %139 = tpu.matmul %125, %138, %cst_56 {dimension_numbers = #tpu.dot_dimension_numbers<[1], [0], [0], [1], [0, 0, 1, 1], [], []>} : vector<48x32xf32>, vector<32x32xf32>, vector<48x32xf32> -> vector<48x32xf32>
    %140 = arith.addf %137, %139 : vector<48x32xf32>
    %c384 = arith.constant 384 : index
    %c0_57 = arith.constant 0 : index
    %141 = vector.load %arg6[%c384, %c0_57] : memref<888x128xf32, #tpu.memory_space<vmem>>, vector<4x32xf32>
    %cst_58 = arith.constant dense<0.000000e+00> : vector<48x32xf32>
    %142 = tpu.matmul %9, %141, %cst_58 {dimension_numbers = #tpu.dot_dimension_numbers<[1], [0], [0], [1], [0, 0, 1, 1], [], []>} : vector<48x4xf32>, vector<4x32xf32>, vector<48x32xf32> -> vector<48x32xf32>
    %143 = arith.addf %140, %142 : vector<48x32xf32>
    %c376 = arith.constant 376 : index
    %c0_59 = arith.constant 0 : index
    %144 = vector.load %arg6[%c376, %c0_59] : memref<888x128xf32, #tpu.memory_space<vmem>>, vector<1x32xf32>
    %145 = vector.broadcast %130 : vector<48x1xf32> to vector<48x32xf32>
    %146 = vector.broadcast %144 : vector<1x32xf32> to vector<48x32xf32>
    %147 = arith.mulf %145, %146 : vector<48x32xf32>
    %148 = arith.addf %143, %147 : vector<48x32xf32>
    %c392 = arith.constant 392 : index
    %c0_60 = arith.constant 0 : index
    %149 = vector.load %arg6[%c392, %c0_60] : memref<888x128xf32, #tpu.memory_space<vmem>>, vector<1x32xf32>
    %150 = vector.broadcast %149 : vector<1x32xf32> to vector<48x32xf32>
    %151 = arith.addf %148, %150 : vector<48x32xf32>
    %152 = arith.negf %151 : vector<48x32xf32>
    %153 = math.exp %152 : vector<48x32xf32>
    %cst_61 = arith.constant 1.000000e+00 : f32
    %154 = vector.broadcast %cst_61 : f32 to vector<48x32xf32>
    %155 = arith.addf %154, %153 : vector<48x32xf32>
    %156 = arith.divf %154, %155 : vector<48x32xf32>
    %157 = arith.mulf %151, %156 : vector<48x32xf32>
    %c400 = arith.constant 400 : index
    %c0_62 = arith.constant 0 : index
    %158 = vector.load %arg6[%c400, %c0_62] : memref<888x128xf32, #tpu.memory_space<vmem>>, vector<32x32xf32>
    %cst_63 = arith.constant dense<0.000000e+00> : vector<48x32xf32>
    %159 = tpu.matmul %157, %158, %cst_63 {dimension_numbers = #tpu.dot_dimension_numbers<[1], [0], [0], [1], [0, 0, 1, 1], [], []>} : vector<48x32xf32>, vector<32x32xf32>, vector<48x32xf32> -> vector<48x32xf32>
    %c432 = arith.constant 432 : index
    %c0_64 = arith.constant 0 : index
    %160 = vector.load %arg6[%c432, %c0_64] : memref<888x128xf32, #tpu.memory_space<vmem>>, vector<1x32xf32>
    %161 = vector.broadcast %160 : vector<1x32xf32> to vector<48x32xf32>
    %162 = arith.addf %159, %161 : vector<48x32xf32>
    %163 = arith.negf %162 : vector<48x32xf32>
    %164 = math.exp %163 : vector<48x32xf32>
    %cst_65 = arith.constant 1.000000e+00 : f32
    %165 = vector.broadcast %cst_65 : f32 to vector<48x32xf32>
    %166 = arith.addf %165, %164 : vector<48x32xf32>
    %167 = arith.divf %165, %166 : vector<48x32xf32>
    %168 = arith.mulf %162, %167 : vector<48x32xf32>
    %c440 = arith.constant 440 : index
    %c0_66 = arith.constant 0 : index
    %169 = vector.load %arg6[%c440, %c0_66] : memref<888x128xf32, #tpu.memory_space<vmem>>, vector<32x32xf32>
    %cst_67 = arith.constant dense<0.000000e+00> : vector<48x32xf32>
    %170 = tpu.matmul %168, %169, %cst_67 {dimension_numbers = #tpu.dot_dimension_numbers<[1], [0], [0], [1], [0, 0, 1, 1], [], []>} : vector<48x32xf32>, vector<32x32xf32>, vector<48x32xf32> -> vector<48x32xf32>
    %c472 = arith.constant 472 : index
    %c0_68 = arith.constant 0 : index
    %171 = vector.load %arg6[%c472, %c0_68] : memref<888x128xf32, #tpu.memory_space<vmem>>, vector<1x32xf32>
    %172 = vector.broadcast %171 : vector<1x32xf32> to vector<48x32xf32>
    %173 = arith.addf %170, %172 : vector<48x32xf32>
    %174 = arith.negf %173 : vector<48x32xf32>
    %175 = math.exp %174 : vector<48x32xf32>
    %cst_69 = arith.constant 1.000000e+00 : f32
    %176 = vector.broadcast %cst_69 : f32 to vector<48x32xf32>
    %177 = arith.addf %176, %175 : vector<48x32xf32>
    %178 = arith.divf %176, %177 : vector<48x32xf32>
    %179 = arith.mulf %173, %178 : vector<48x32xf32>
    %c480 = arith.constant 480 : index
    %c0_70 = arith.constant 0 : index
    %180 = vector.load %arg6[%c480, %c0_70] : memref<888x128xf32, #tpu.memory_space<vmem>>, vector<1x32xf32>
    %181 = vector.broadcast %180 : vector<1x32xf32> to vector<48x32xf32>
    %182 = arith.mulf %179, %181 : vector<48x32xf32>
    %cst_71 = arith.constant dense<0.000000e+00> : vector<48xf32>
    %183 = vector.multi_reduction <add>, %182, %cst_71 [1] : vector<48x32xf32> to vector<48xf32>
    %184 = vector.shape_cast %183 : vector<48xf32> to vector<48x1xf32>
    %185 = math.tanh %184 : vector<48x1xf32>
    %186 = vector.broadcast %185 : vector<48x1xf32> to vector<48x3xf32>
    %187 = arith.mulf %135, %186 : vector<48x3xf32>
    %188 = tpu.concatenate %168, %187 in 1 : vector<48x32xf32>, vector<48x3xf32> -> vector<48x35xf32>
    %cst_72 = arith.constant dense<0.000000e+00> : vector<16x35xf32>
    %189 = tpu.matmul %7, %188, %cst_72 {dimension_numbers = #tpu.dot_dimension_numbers<[0], [0], [1], [1], [0, 1, 1, 1], [], []>} : vector<48x16xf32>, vector<48x35xf32>, vector<16x35xf32> -> vector<16x35xf32>
    %190 = vector.extract_strided_slice %189 {offsets = [0, 0], sizes = [16, 32], strides = [1, 1]} : vector<16x35xf32> to vector<16x32xf32>
    %191 = vector.extract_strided_slice %189 {offsets = [0, 32], sizes = [16, 3], strides = [1, 1]} : vector<16x35xf32> to vector<16x3xf32>
    %192 = vector.broadcast %11 : vector<16x1xf32> to vector<16x3xf32>
    %193 = arith.mulf %191, %192 : vector<16x3xf32>
    %194 = arith.addf %94, %193 : vector<16x3xf32>
    %c488 = arith.constant 488 : index
    %c0_73 = arith.constant 0 : index
    %195 = vector.load %arg6[%c488, %c0_73] : memref<888x128xf32, #tpu.memory_space<vmem>>, vector<32x32xf32>
    %cst_74 = arith.constant dense<0.000000e+00> : vector<16x32xf32>
    %196 = tpu.matmul %120, %195, %cst_74 {dimension_numbers = #tpu.dot_dimension_numbers<[1], [0], [0], [1], [0, 0, 1, 1], [], []>} : vector<16x32xf32>, vector<32x32xf32>, vector<16x32xf32> -> vector<16x32xf32>
    %c520 = arith.constant 520 : index
    %c0_75 = arith.constant 0 : index
    %197 = vector.load %arg6[%c520, %c0_75] : memref<888x128xf32, #tpu.memory_space<vmem>>, vector<32x32xf32>
    %cst_76 = arith.constant dense<0.000000e+00> : vector<16x32xf32>
    %198 = tpu.matmul %190, %197, %cst_76 {dimension_numbers = #tpu.dot_dimension_numbers<[1], [0], [0], [1], [0, 0, 1, 1], [], []>} : vector<16x32xf32>, vector<32x32xf32>, vector<16x32xf32> -> vector<16x32xf32>
    %199 = arith.addf %196, %198 : vector<16x32xf32>
    %c552 = arith.constant 552 : index
    %c0_77 = arith.constant 0 : index
    %200 = vector.load %arg6[%c552, %c0_77] : memref<888x128xf32, #tpu.memory_space<vmem>>, vector<1x32xf32>
    %201 = vector.broadcast %200 : vector<1x32xf32> to vector<16x32xf32>
    %202 = arith.addf %199, %201 : vector<16x32xf32>
    %203 = arith.negf %202 : vector<16x32xf32>
    %204 = math.exp %203 : vector<16x32xf32>
    %cst_78 = arith.constant 1.000000e+00 : f32
    %205 = vector.broadcast %cst_78 : f32 to vector<16x32xf32>
    %206 = arith.addf %205, %204 : vector<16x32xf32>
    %207 = arith.divf %205, %206 : vector<16x32xf32>
    %208 = arith.mulf %202, %207 : vector<16x32xf32>
    %c560 = arith.constant 560 : index
    %c0_79 = arith.constant 0 : index
    %209 = vector.load %arg6[%c560, %c0_79] : memref<888x128xf32, #tpu.memory_space<vmem>>, vector<32x32xf32>
    %cst_80 = arith.constant dense<0.000000e+00> : vector<16x32xf32>
    %210 = tpu.matmul %208, %209, %cst_80 {dimension_numbers = #tpu.dot_dimension_numbers<[1], [0], [0], [1], [0, 0, 1, 1], [], []>} : vector<16x32xf32>, vector<32x32xf32>, vector<16x32xf32> -> vector<16x32xf32>
    %c592 = arith.constant 592 : index
    %c0_81 = arith.constant 0 : index
    %211 = vector.load %arg6[%c592, %c0_81] : memref<888x128xf32, #tpu.memory_space<vmem>>, vector<1x32xf32>
    %212 = vector.broadcast %211 : vector<1x32xf32> to vector<16x32xf32>
    %213 = arith.addf %210, %212 : vector<16x32xf32>
    %214 = arith.addf %213, %120 : vector<16x32xf32>
    %215 = arith.negf %214 : vector<16x32xf32>
    %216 = math.exp %215 : vector<16x32xf32>
    %cst_82 = arith.constant 1.000000e+00 : f32
    %217 = vector.broadcast %cst_82 : f32 to vector<16x32xf32>
    %218 = arith.addf %217, %216 : vector<16x32xf32>
    %219 = arith.divf %217, %218 : vector<16x32xf32>
    %220 = arith.mulf %214, %219 : vector<16x32xf32>
    %221 = tpu.concatenate %220, %194 in 1 : vector<16x32xf32>, vector<16x3xf32> -> vector<16x35xf32>
    %cst_83 = arith.constant dense<0.000000e+00> : vector<96x35xf32>
    %222 = tpu.matmul %6, %221, %cst_83 {dimension_numbers = #tpu.dot_dimension_numbers<[1], [0], [0], [1], [0, 0, 1, 1], [], []>} : vector<96x16xf32>, vector<16x35xf32>, vector<96x35xf32> -> vector<96x35xf32>
    %223 = vector.extract_strided_slice %222 {offsets = [0, 0], sizes = [48, 32], strides = [1, 1]} : vector<96x35xf32> to vector<48x32xf32>
    %224 = vector.extract_strided_slice %222 {offsets = [0, 32], sizes = [48, 3], strides = [1, 1]} : vector<96x35xf32> to vector<48x3xf32>
    %225 = vector.extract_strided_slice %222 {offsets = [48, 0], sizes = [48, 32], strides = [1, 1]} : vector<96x35xf32> to vector<48x32xf32>
    %226 = vector.extract_strided_slice %222 {offsets = [48, 32], sizes = [48, 3], strides = [1, 1]} : vector<96x35xf32> to vector<48x3xf32>
    %227 = arith.subf %224, %226 : vector<48x3xf32>
    %228 = arith.mulf %227, %227 : vector<48x3xf32>
    %cst_84 = arith.constant dense<0.000000e+00> : vector<48xf32>
    %229 = vector.multi_reduction <add>, %228, %cst_84 [1] : vector<48x3xf32> to vector<48xf32>
    %230 = vector.shape_cast %229 : vector<48xf32> to vector<48x1xf32>
    %231 = math.sqrt %230 : vector<48x1xf32>
    %cst_85 = arith.constant 9.99999993E-9 : f32
    %232 = vector.broadcast %cst_85 : f32 to vector<48x1xf32>
    %233 = arith.addf %231, %232 : vector<48x1xf32>
    %234 = vector.broadcast %233 : vector<48x1xf32> to vector<48x3xf32>
    %235 = arith.divf %227, %234 : vector<48x3xf32>
    %c600 = arith.constant 600 : index
    %c0_86 = arith.constant 0 : index
    %236 = vector.load %arg6[%c600, %c0_86] : memref<888x128xf32, #tpu.memory_space<vmem>>, vector<32x32xf32>
    %cst_87 = arith.constant dense<0.000000e+00> : vector<48x32xf32>
    %237 = tpu.matmul %223, %236, %cst_87 {dimension_numbers = #tpu.dot_dimension_numbers<[1], [0], [0], [1], [0, 0, 1, 1], [], []>} : vector<48x32xf32>, vector<32x32xf32>, vector<48x32xf32> -> vector<48x32xf32>
    %c632 = arith.constant 632 : index
    %c0_88 = arith.constant 0 : index
    %238 = vector.load %arg6[%c632, %c0_88] : memref<888x128xf32, #tpu.memory_space<vmem>>, vector<32x32xf32>
    %cst_89 = arith.constant dense<0.000000e+00> : vector<48x32xf32>
    %239 = tpu.matmul %225, %238, %cst_89 {dimension_numbers = #tpu.dot_dimension_numbers<[1], [0], [0], [1], [0, 0, 1, 1], [], []>} : vector<48x32xf32>, vector<32x32xf32>, vector<48x32xf32> -> vector<48x32xf32>
    %240 = arith.addf %237, %239 : vector<48x32xf32>
    %c672 = arith.constant 672 : index
    %c0_90 = arith.constant 0 : index
    %241 = vector.load %arg6[%c672, %c0_90] : memref<888x128xf32, #tpu.memory_space<vmem>>, vector<4x32xf32>
    %cst_91 = arith.constant dense<0.000000e+00> : vector<48x32xf32>
    %242 = tpu.matmul %9, %241, %cst_91 {dimension_numbers = #tpu.dot_dimension_numbers<[1], [0], [0], [1], [0, 0, 1, 1], [], []>} : vector<48x4xf32>, vector<4x32xf32>, vector<48x32xf32> -> vector<48x32xf32>
    %243 = arith.addf %240, %242 : vector<48x32xf32>
    %c664 = arith.constant 664 : index
    %c0_92 = arith.constant 0 : index
    %244 = vector.load %arg6[%c664, %c0_92] : memref<888x128xf32, #tpu.memory_space<vmem>>, vector<1x32xf32>
    %245 = vector.broadcast %230 : vector<48x1xf32> to vector<48x32xf32>
    %246 = vector.broadcast %244 : vector<1x32xf32> to vector<48x32xf32>
    %247 = arith.mulf %245, %246 : vector<48x32xf32>
    %248 = arith.addf %243, %247 : vector<48x32xf32>
    %c680 = arith.constant 680 : index
    %c0_93 = arith.constant 0 : index
    %249 = vector.load %arg6[%c680, %c0_93] : memref<888x128xf32, #tpu.memory_space<vmem>>, vector<1x32xf32>
    %250 = vector.broadcast %249 : vector<1x32xf32> to vector<48x32xf32>
    %251 = arith.addf %248, %250 : vector<48x32xf32>
    %252 = arith.negf %251 : vector<48x32xf32>
    %253 = math.exp %252 : vector<48x32xf32>
    %cst_94 = arith.constant 1.000000e+00 : f32
    %254 = vector.broadcast %cst_94 : f32 to vector<48x32xf32>
    %255 = arith.addf %254, %253 : vector<48x32xf32>
    %256 = arith.divf %254, %255 : vector<48x32xf32>
    %257 = arith.mulf %251, %256 : vector<48x32xf32>
    %c688 = arith.constant 688 : index
    %c0_95 = arith.constant 0 : index
    %258 = vector.load %arg6[%c688, %c0_95] : memref<888x128xf32, #tpu.memory_space<vmem>>, vector<32x32xf32>
    %cst_96 = arith.constant dense<0.000000e+00> : vector<48x32xf32>
    %259 = tpu.matmul %257, %258, %cst_96 {dimension_numbers = #tpu.dot_dimension_numbers<[1], [0], [0], [1], [0, 0, 1, 1], [], []>} : vector<48x32xf32>, vector<32x32xf32>, vector<48x32xf32> -> vector<48x32xf32>
    %c720 = arith.constant 720 : index
    %c0_97 = arith.constant 0 : index
    %260 = vector.load %arg6[%c720, %c0_97] : memref<888x128xf32, #tpu.memory_space<vmem>>, vector<1x32xf32>
    %261 = vector.broadcast %260 : vector<1x32xf32> to vector<48x32xf32>
    %262 = arith.addf %259, %261 : vector<48x32xf32>
    %263 = arith.negf %262 : vector<48x32xf32>
    %264 = math.exp %263 : vector<48x32xf32>
    %cst_98 = arith.constant 1.000000e+00 : f32
    %265 = vector.broadcast %cst_98 : f32 to vector<48x32xf32>
    %266 = arith.addf %265, %264 : vector<48x32xf32>
    %267 = arith.divf %265, %266 : vector<48x32xf32>
    %268 = arith.mulf %262, %267 : vector<48x32xf32>
    %c728 = arith.constant 728 : index
    %c0_99 = arith.constant 0 : index
    %269 = vector.load %arg6[%c728, %c0_99] : memref<888x128xf32, #tpu.memory_space<vmem>>, vector<32x32xf32>
    %cst_100 = arith.constant dense<0.000000e+00> : vector<48x32xf32>
    %270 = tpu.matmul %268, %269, %cst_100 {dimension_numbers = #tpu.dot_dimension_numbers<[1], [0], [0], [1], [0, 0, 1, 1], [], []>} : vector<48x32xf32>, vector<32x32xf32>, vector<48x32xf32> -> vector<48x32xf32>
    %c760 = arith.constant 760 : index
    %c0_101 = arith.constant 0 : index
    %271 = vector.load %arg6[%c760, %c0_101] : memref<888x128xf32, #tpu.memory_space<vmem>>, vector<1x32xf32>
    %272 = vector.broadcast %271 : vector<1x32xf32> to vector<48x32xf32>
    %273 = arith.addf %270, %272 : vector<48x32xf32>
    %274 = arith.negf %273 : vector<48x32xf32>
    %275 = math.exp %274 : vector<48x32xf32>
    %cst_102 = arith.constant 1.000000e+00 : f32
    %276 = vector.broadcast %cst_102 : f32 to vector<48x32xf32>
    %277 = arith.addf %276, %275 : vector<48x32xf32>
    %278 = arith.divf %276, %277 : vector<48x32xf32>
    %279 = arith.mulf %273, %278 : vector<48x32xf32>
    %c768 = arith.constant 768 : index
    %c0_103 = arith.constant 0 : index
    %280 = vector.load %arg6[%c768, %c0_103] : memref<888x128xf32, #tpu.memory_space<vmem>>, vector<1x32xf32>
    %281 = vector.broadcast %280 : vector<1x32xf32> to vector<48x32xf32>
    %282 = arith.mulf %279, %281 : vector<48x32xf32>
    %cst_104 = arith.constant dense<0.000000e+00> : vector<48xf32>
    %283 = vector.multi_reduction <add>, %282, %cst_104 [1] : vector<48x32xf32> to vector<48xf32>
    %284 = vector.shape_cast %283 : vector<48xf32> to vector<48x1xf32>
    %285 = math.tanh %284 : vector<48x1xf32>
    %286 = vector.broadcast %285 : vector<48x1xf32> to vector<48x3xf32>
    %287 = arith.mulf %235, %286 : vector<48x3xf32>
    %288 = tpu.concatenate %268, %287 in 1 : vector<48x32xf32>, vector<48x3xf32> -> vector<48x35xf32>
    %cst_105 = arith.constant dense<0.000000e+00> : vector<16x35xf32>
    %289 = tpu.matmul %7, %288, %cst_105 {dimension_numbers = #tpu.dot_dimension_numbers<[0], [0], [1], [1], [0, 1, 1, 1], [], []>} : vector<48x16xf32>, vector<48x35xf32>, vector<16x35xf32> -> vector<16x35xf32>
    %290 = vector.extract_strided_slice %289 {offsets = [0, 0], sizes = [16, 32], strides = [1, 1]} : vector<16x35xf32> to vector<16x32xf32>
    %291 = vector.extract_strided_slice %289 {offsets = [0, 32], sizes = [16, 3], strides = [1, 1]} : vector<16x35xf32> to vector<16x3xf32>
    %292 = vector.broadcast %11 : vector<16x1xf32> to vector<16x3xf32>
    %293 = arith.mulf %291, %292 : vector<16x3xf32>
    %294 = arith.addf %194, %293 : vector<16x3xf32>
    %c776 = arith.constant 776 : index
    %c0_106 = arith.constant 0 : index
    %295 = vector.load %arg6[%c776, %c0_106] : memref<888x128xf32, #tpu.memory_space<vmem>>, vector<32x32xf32>
    %cst_107 = arith.constant dense<0.000000e+00> : vector<16x32xf32>
    %296 = tpu.matmul %220, %295, %cst_107 {dimension_numbers = #tpu.dot_dimension_numbers<[1], [0], [0], [1], [0, 0, 1, 1], [], []>} : vector<16x32xf32>, vector<32x32xf32>, vector<16x32xf32> -> vector<16x32xf32>
    %c808 = arith.constant 808 : index
    %c0_108 = arith.constant 0 : index
    %297 = vector.load %arg6[%c808, %c0_108] : memref<888x128xf32, #tpu.memory_space<vmem>>, vector<32x32xf32>
    %cst_109 = arith.constant dense<0.000000e+00> : vector<16x32xf32>
    %298 = tpu.matmul %290, %297, %cst_109 {dimension_numbers = #tpu.dot_dimension_numbers<[1], [0], [0], [1], [0, 0, 1, 1], [], []>} : vector<16x32xf32>, vector<32x32xf32>, vector<16x32xf32> -> vector<16x32xf32>
    %299 = arith.addf %296, %298 : vector<16x32xf32>
    %c840 = arith.constant 840 : index
    %c0_110 = arith.constant 0 : index
    %300 = vector.load %arg6[%c840, %c0_110] : memref<888x128xf32, #tpu.memory_space<vmem>>, vector<1x32xf32>
    %301 = vector.broadcast %300 : vector<1x32xf32> to vector<16x32xf32>
    %302 = arith.addf %299, %301 : vector<16x32xf32>
    %303 = arith.negf %302 : vector<16x32xf32>
    %304 = math.exp %303 : vector<16x32xf32>
    %cst_111 = arith.constant 1.000000e+00 : f32
    %305 = vector.broadcast %cst_111 : f32 to vector<16x32xf32>
    %306 = arith.addf %305, %304 : vector<16x32xf32>
    %307 = arith.divf %305, %306 : vector<16x32xf32>
    %308 = arith.mulf %302, %307 : vector<16x32xf32>
    %c848 = arith.constant 848 : index
    %c0_112 = arith.constant 0 : index
    %309 = vector.load %arg6[%c848, %c0_112] : memref<888x128xf32, #tpu.memory_space<vmem>>, vector<32x32xf32>
    %cst_113 = arith.constant dense<0.000000e+00> : vector<16x32xf32>
    %310 = tpu.matmul %308, %309, %cst_113 {dimension_numbers = #tpu.dot_dimension_numbers<[1], [0], [0], [1], [0, 0, 1, 1], [], []>} : vector<16x32xf32>, vector<32x32xf32>, vector<16x32xf32> -> vector<16x32xf32>
    %c880 = arith.constant 880 : index
    %c0_114 = arith.constant 0 : index
    %311 = vector.load %arg6[%c880, %c0_114] : memref<888x128xf32, #tpu.memory_space<vmem>>, vector<1x32xf32>
    %312 = vector.broadcast %311 : vector<1x32xf32> to vector<16x32xf32>
    %313 = arith.addf %310, %312 : vector<16x32xf32>
    %314 = arith.addf %313, %220 : vector<16x32xf32>
    %c0_115 = arith.constant 0 : index
    %c0_116 = arith.constant 0 : index
    %c0_117 = arith.constant 0 : index
    %315 = vector.load %arg7[%c0_115, %c0_116, %c0_117] : memref<1x16x32xf32, #tpu.memory_space<vmem>>, vector<1x16x32xf32>
    %316 = vector.shape_cast %315 : vector<1x16x32xf32> to vector<16x32xf32>
    %317 = vector.shape_cast %314 : vector<16x32xf32> to vector<1x16x32xf32>
    tpu.vector_store %arg7[%c0_115, %c0_116, %c0_117], %317 {strides = array<i32>} : memref<1x16x32xf32, #tpu.memory_space<vmem>>, vector<1x16x32xf32>,
    %c0_118 = arith.constant 0 : index
    %c0_119 = arith.constant 0 : index
    %c0_120 = arith.constant 0 : index
    %318 = vector.load %arg8[%c0_118, %c0_119, %c0_120] : memref<1x16x3xf32, #tpu.memory_space<vmem>>, vector<1x16x3xf32>
    %319 = vector.shape_cast %318 : vector<1x16x3xf32> to vector<16x3xf32>
    %320 = vector.shape_cast %294 : vector<16x3xf32> to vector<1x16x3xf32>
    tpu.vector_store %arg8[%c0_118, %c0_119, %c0_120], %320 {strides = array<i32>} : memref<1x16x3xf32, #tpu.memory_space<vmem>>, vector<1x16x3xf32>,
    return
  }
  func.func @transform_0(%arg0: i32) -> (i32, i32, i32) {
    %c0_i32 = arith.constant 0 : i32
    %c0_i32_0 = arith.constant 0 : i32
    %c0_i32_1 = arith.constant 0 : i32
    return %arg0, %c0_i32, %c0_i32_0 : i32, i32, i32
  }
  func.func @transform_1(%arg0: i32) -> (i32, i32, i32) {
    %c0_i32 = arith.constant 0 : i32
    %c0_i32_0 = arith.constant 0 : i32
    %c0_i32_1 = arith.constant 0 : i32
    return %arg0, %c0_i32, %c0_i32_0 : i32, i32, i32
  }
  func.func @transform_2(%arg0: i32) -> (i32, i32, i32) {
    %c0_i32 = arith.constant 0 : i32
    %c0_i32_0 = arith.constant 0 : i32
    %c0_i32_1 = arith.constant 0 : i32
    return %arg0, %c0_i32, %c0_i32_0 : i32, i32, i32
  }
  func.func @transform_3(%arg0: i32) -> (i32, i32, i32) {
    %c0_i32 = arith.constant 0 : i32
    %c0_i32_0 = arith.constant 0 : i32
    %c0_i32_1 = arith.constant 0 : i32
    return %arg0, %c0_i32, %c0_i32_0 : i32, i32, i32
  }
  func.func @transform_4(%arg0: i32) -> (i32, i32, i32) {
    %c0_i32 = arith.constant 0 : i32
    %c0_i32_0 = arith.constant 0 : i32
    %c0_i32_1 = arith.constant 0 : i32
    return %arg0, %c0_i32, %c0_i32_0 : i32, i32, i32
  }
  func.func @transform_5(%arg0: i32) -> (i32, i32) {
    %c0_i32 = arith.constant 0 : i32
    %c0_i32_0 = arith.constant 0 : i32
    %c0_i32_1 = arith.constant 0 : i32
    return %c0_i32, %c0_i32_0 : i32, i32
  }
  func.func @transform_6(%arg0: i32) -> (i32, i32, i32) {
    %c0_i32 = arith.constant 0 : i32
    %c0_i32_0 = arith.constant 0 : i32
    %c0_i32_1 = arith.constant 0 : i32
    return %arg0, %c0_i32, %c0_i32_0 : i32, i32, i32
  }
  func.func @transform_7(%arg0: i32) -> (i32, i32, i32) {
    %c0_i32 = arith.constant 0 : i32
    %c0_i32_0 = arith.constant 0 : i32
    %c0_i32_1 = arith.constant 0 : i32
    return %arg0, %c0_i32, %c0_i32_0 : i32, i32, i32
  }
}

</mosaic_0001>

<llo_original>
// kernel: forward.1
$region0: #{forward.1}
  #allocation0 [shape = 'u32[]', space=smem, size = 0x4, offset = 0x4, fixed_abs, tag = 'smem constant byte address 0x4 - core index']
  #allocation1 [shape = 'u32[144,128]{1,0:T(1,128)}', space=vmem, size = 0x12000, scoped, tag = 'internal scratch']
  %s0 = inlined_call_operand.vmem [shape: f32[2,16,16], index: 0, kind: input, shape index: {}]
  %s1 = inlined_call_operand.vmem [shape: f32[2,16,3], index: 1, kind: input, shape index: {}]
  %s2 = inlined_call_operand.vmem [shape: f32[2,48,4], index: 2, kind: input, shape index: {}]
  %s3 = inlined_call_operand.vmem [shape: s32[2,96,1], index: 3, kind: input, shape index: {}]
  %s4 = inlined_call_operand.vmem [shape: f32[2,16,1], index: 4, kind: input, shape index: {}]
  %s5 = inlined_call_operand.vmem [shape: f32[888,128], index: 5, kind: input, shape index: {}]
  %s6 = inlined_call_operand.hbm [shape: f32[2,16,32], index: 6, kind: output, shape index: {0}]
  %s7 = inlined_call_operand.vmem [shape: f32[2,16,3], index: 7, kind: output, shape index: {1}]
  %8 = xla_tuple %s6, %s7
  %s9 = sld [smem:[#allocation0]]
  $region65: #{forward.1} parent=0
    _
  %s11 = ssub.s32 1, %s9
  %s12 = scalar_select 0, %s11, %s9
  $region1: #{forward.1} parent=0
    #allocation2 [shape = 'u8[16384]{0}', space=vmem, size = 0x4000, scoped, tag = 'output window, operand 0']
    #allocation3 [shape = 's32[2]{0}', space=sflag, size = 0x8, scoped, tag = 'scoped memory for forward.1']
    %13 = vsyncpa [#allocation3], 0
    %s14 = scalar_lea.sflag [#allocation3], 1
    %15 = vsyncpa %s14, 0
    loop: start=0, step=1, limit=4
    $region2: #{forward.1} parent=1 // loop_pre_header
      _
    $region3: #{forward.1} parent=1 // loop_header
      %s17 = sphi 0, %s21
      %p18 = scmp.ge.s32.totalorder %s17, 4
      %s27 = sphi 0, %s29
      %s30 = sphi 0, %s27
      %s31 = sphi 0, %s30
      %s47 = sphi 0, %s31
      %s53 = sphi 0, %s55
      %s56 = sphi 0, %s53
      %s57 = sphi 0, %s56
      %s73 = sphi 0, %s57
      %s79 = sphi 0, %s81
      %s82 = sphi 0, %s79
      %s83 = sphi 0, %s82
      %s99 = sphi 0, %s83
      %s105 = sphi 0, %s107
      %s108 = sphi 0, %s105
      %s109 = sphi 0, %s108
      %s125 = sphi 0, %s109
      %s131 = sphi 0, %s133
      %s134 = sphi 0, %s131
      %s135 = sphi 0, %s134
      %s151 = sphi 0, %s135
      %s155 = sphi 0, %s155
      %s157 = sphi 0, %s155
      %s158 = sphi 0, %s157
      %s172 = sphi 0, %s158
      %s178 = sphi 0, %s180
      %s181 = sphi 0, %s178
      %s182 = sphi 0, %s181
      %s198 = sphi 0, %s182
      %s204 = sphi 0, %s206
      %s207 = sphi 0, %s204
      %s208 = sphi 0, %s207
      %s224 = sphi 0, %s208
    $region4: #{forward.1} parent=1 // loop_header_branch
      %20 = sbr.rel (%p18) target = $region8
    $region5: #{forward.1} parent=1 // loop_body
      %s22 = ssub.s32 %s17, 1
      %s23 = ssub.s32 %s17, 2
      %s24 = sadd.s32 %s17, 1
      %s25 = ssub.s32 %s17, %s24
      %p26 = scmp.eq.s32.totalorder %s25, 0
      %s28 = sadd.s32 %s27, 1
      %s29 = scalar_select %p26, %s27, %s28
      %p32 = pneg %p26
      %p33 = scmp.eq.s32.totalorder %s17, 1
      %p34 = por %p32, %p33
      %p35 = scmp.ne.s32.totalorder %s27, %s30
      %p36 = scmp.eq.s32.totalorder %s17, 0
      %p37 = por %p35, %p36
      %p38 = scmp.ne.s32.totalorder %s27, %s30
      %p39 = scmp.eq.s32.totalorder %s22, 1
      %p40 = por %p38, %p39
      %p41 = scmp.ne.s32.totalorder %s30, %s31
      %p42 = scmp.eq.s32.totalorder %s22, 0
      %p43 = por %p41, %p42
      %p44 = scmp.ne.s32.totalorder %s30, %s31
      %p45 = scmp.eq.s32.totalorder %s23, 1
      %p46 = por %p44, %p45
      %p48 = scmp.ne.s32.totalorder %s31, %s47
      %p49 = scmp.eq.s32.totalorder %s23, 0
      %p50 = por %p48, %p49
      %s51 = ssub.s32 %s17, %s24
      %p52 = scmp.eq.s32.totalorder %s51, 0
      %s54 = sadd.s32 %s53, 1
      %s55 = scalar_select %p52, %s53, %s54
      %p58 = pneg %p52
      %p59 = scmp.eq.s32.totalorder %s17, 1
      %p60 = por %p58, %p59
      %p61 = scmp.ne.s32.totalorder %s53, %s56
      %p62 = scmp.eq.s32.totalorder %s17, 0
      %p63 = por %p61, %p62
      %p64 = scmp.ne.s32.totalorder %s53, %s56
      %p65 = scmp.eq.s32.totalorder %s22, 1
      %p66 = por %p64, %p65
      %p67 = scmp.ne.s32.totalorder %s56, %s57
      %p68 = scmp.eq.s32.totalorder %s22, 0
      %p69 = por %p67, %p68
      %p70 = scmp.ne.s32.totalorder %s56, %s57
      %p71 = scmp.eq.s32.totalorder %s23, 1
      %p72 = por %p70, %p71
      %p74 = scmp.ne.s32.totalorder %s57, %s73
      %p75 = scmp.eq.s32.totalorder %s23, 0
      %p76 = por %p74, %p75
      %s77 = ssub.s32 %s17, %s24
      %p78 = scmp.eq.s32.totalorder %s77, 0
      %s80 = sadd.s32 %s79, 1
      %s81 = scalar_select %p78, %s79, %s80
      %p84 = pneg %p78
      %p85 = scmp.eq.s32.totalorder %s17, 1
      %p86 = por %p84, %p85
      %p87 = scmp.ne.s32.totalorder %s79, %s82
      %p88 = scmp.eq.s32.totalorder %s17, 0
      %p89 = por %p87, %p88
      %p90 = scmp.ne.s32.totalorder %s79, %s82
      %p91 = scmp.eq.s32.totalorder %s22, 1
      %p92 = por %p90, %p91
      %p93 = scmp.ne.s32.totalorder %s82, %s83
      %p94 = scmp.eq.s32.totalorder %s22, 0
      %p95 = por %p93, %p94
      %p96 = scmp.ne.s32.totalorder %s82, %s83
      %p97 = scmp.eq.s32.totalorder %s23, 1
      %p98 = por %p96, %p97
      %p100 = scmp.ne.s32.totalorder %s83, %s99
      %p101 = scmp.eq.s32.totalorder %s23, 0
      %p102 = por %p100, %p101
      %s103 = ssub.s32 %s17, %s24
      %p104 = scmp.eq.s32.totalorder %s103, 0
      %s106 = sadd.s32 %s105, 1
      %s107 = scalar_select %p104, %s105, %s106
      %p110 = pneg %p104
      %p111 = scmp.eq.s32.totalorder %s17, 1
      %p112 = por %p110, %p111
      %p113 = scmp.ne.s32.totalorder %s105, %s108
      %p114 = scmp.eq.s32.totalorder %s17, 0
      %p115 = por %p113, %p114
      %p116 = scmp.ne.s32.totalorder %s105, %s108
      %p117 = scmp.eq.s32.totalorder %s22, 1
      %p118 = por %p116, %p117
      %p119 = scmp.ne.s32.totalorder %s108, %s109
      %p120 = scmp.eq.s32.totalorder %s22, 0
      %p121 = por %p119, %p120
      %p122 = scmp.ne.s32.totalorder %s108, %s109
      %p123 = scmp.eq.s32.totalorder %s23, 1
      %p124 = por %p122, %p123
      %p126 = scmp.ne.s32.totalorder %s109, %s125
      %p127 = scmp.eq.s32.totalorder %s23, 0
      %p128 = por %p126, %p127
      %s129 = ssub.s32 %s17, %s24
      %p130 = scmp.eq.s32.totalorder %s129, 0
      %s132 = sadd.s32 %s131, 1
      %s133 = scalar_select %p130, %s131, %s132
      %p136 = pneg %p130
      %p137 = scmp.eq.s32.totalorder %s17, 1
      %p138 = por %p136, %p137
      %p139 = scmp.ne.s32.totalorder %s131, %s134
      %p140 = scmp.eq.s32.totalorder %s17, 0
      %p141 = por %p139, %p140
      %p142 = scmp.ne.s32.totalorder %s131, %s134
      %p143 = scmp.eq.s32.totalorder %s22, 1
      %p144 = por %p142, %p143
      %p145 = scmp.ne.s32.totalorder %s134, %s135
      %p146 = scmp.eq.s32.totalorder %s22, 0
      %p147 = por %p145, %p146
      %p148 = scmp.ne.s32.totalorder %s134, %s135
      %p149 = scmp.eq.s32.totalorder %s23, 1
      %p150 = por %p148, %p149
      %p152 = scmp.ne.s32.totalorder %s135, %s151
      %p153 = scmp.eq.s32.totalorder %s23, 0
      %p154 = por %p152, %p153
      %s156 = sadd.s32 %s155, 1
      %p159 = scmp.eq.s32.totalorder %s17, 1
      %p160 = scmp.ne.s32.totalorder %s155, %s157
      %p161 = scmp.eq.s32.totalorder %s17, 0
      %p162 = por %p160, %p161
      %p163 = scmp.ne.s32.totalorder %s155, %s157
      %p164 = scmp.eq.s32.totalorder %s22, 1
      %p165 = por %p163, %p164
      %p166 = scmp.ne.s32.totalorder %s157, %s158
      %p167 = scmp.eq.s32.totalorder %s22, 0
      %p168 = por %p166, %p167
      %p169 = scmp.ne.s32.totalorder %s157, %s158
      %p170 = scmp.eq.s32.totalorder %s23, 1
      %p171 = por %p169, %p170
      %p173 = scmp.ne.s32.totalorder %s158, %s172
      %p174 = scmp.eq.s32.totalorder %s23, 0
      %p175 = por %p173, %p174
      %s176 = ssub.s32 %s17, %s24
      %p177 = scmp.eq.s32.totalorder %s176, 0
      %s179 = sadd.s32 %s178, 1
      %s180 = scalar_select %p177, %s178, %s179
      %p183 = pneg %p177
      %p184 = scmp.eq.s32.totalorder %s17, 1
      %p185 = por %p183, %p184
      %p186 = scmp.ne.s32.totalorder %s178, %s181
      %p187 = scmp.eq.s32.totalorder %s17, 0
      %p188 = por %p186, %p187
      %p189 = scmp.ne.s32.totalorder %s178, %s181
      %p190 = scmp.eq.s32.totalorder %s22, 1
      %p191 = por %p189, %p190
      %p192 = scmp.ne.s32.totalorder %s181, %s182
      %p193 = scmp.eq.s32.totalorder %s22, 0
      %p194 = por %p192, %p193
      %p195 = scmp.ne.s32.totalorder %s181, %s182
      %p196 = scmp.eq.s32.totalorder %s23, 1
      %p197 = por %p195, %p196
      %p199 = scmp.ne.s32.totalorder %s182, %s198
      %p200 = scmp.eq.s32.totalorder %s23, 0
      %p201 = por %p199, %p200
      %s202 = ssub.s32 %s17, %s24
      %p203 = scmp.eq.s32.totalorder %s202, 0
      %s205 = sadd.s32 %s204, 1
      %s206 = scalar_select %p203, %s204, %s205
      %p209 = pneg %p203
      %p210 = scmp.eq.s32.totalorder %s17, 1
      %p211 = por %p209, %p210
      %p212 = scmp.ne.s32.totalorder %s204, %s207
      %p213 = scmp.eq.s32.totalorder %s17, 0
      %p214 = por %p212, %p213
      %p215 = scmp.ne.s32.totalorder %s204, %s207
      %p216 = scmp.eq.s32.totalorder %s22, 1
      %p217 = por %p215, %p216
      %p218 = scmp.ne.s32.totalorder %s207, %s208
      %p219 = scmp.eq.s32.totalorder %s22, 0
      %p220 = por %p218, %p219
      %p221 = scmp.ne.s32.totalorder %s207, %s208
      %p222 = scmp.eq.s32.totalorder %s23, 1
      %p223 = por %p221, %p222
      %p225 = scmp.ne.s32.totalorder %s208, %s224
      %p226 = scmp.eq.s32.totalorder %s23, 0
      %p227 = por %p225, %p226
      %p228 = scmp.le.s32.totalorder 1, %s17
      %p229 = scmp.lt.s32.totalorder %s17, 3
      %p230 = pnand %p228, %p229
      %p231 = pneg %p230
      // Predicated region
      $region9: #{forward.1} parent=5 // pred_check
        _
      $region10: #{forward.1} parent=5 // pred_check_branch
        %233 = sbr.rel (%p230) target = $region12
      $region11: #{forward.1} parent=5 // pred_region
        %s234 = ssub.s32 %s17, 1
        // Predicated region
        $region13: #{forward.1} parent=11 // pred_check
          %p235 = pneg %p168
        $region14: #{forward.1} parent=11 // pred_check_branch
          %237 = sbr.rel (%p235) target = $region16
        $region15: #{forward.1} parent=11 // pred_region
          _
        $region16: #{forward.1} parent=11 // pred_fallthru
          _
      $region12: #{forward.1} parent=5 // pred_fallthru
        _
      %p238 = scmp.lt.s32.totalorder %s17, 2
      // Predicated region
      $region17: #{forward.1} parent=5 // pred_check
        %p239 = pneg %p238
      $region18: #{forward.1} parent=5 // pred_check_branch
        %241 = sbr.rel (%p239) target = $region20
      $region19: #{forward.1} parent=5 // pred_region
        // Predicated region
        $region21: #{forward.1} parent=19 // pred_check
          %p242 = pneg %p37
        $region22: #{forward.1} parent=19 // pred_check_branch
          %244 = sbr.rel (%p242) target = $region24
        $region23: #{forward.1} parent=19 // pred_region
          %p245 = scmp.lt.s32.totalorder %s17, 1
          %s246 = scalar_select %p245, %s17, 1
          %s247 = smul.addr %s246, 2
          %s248 = smul.addr %s247, 8
          %s249 = scalar_lea.vmem %s0, %s248
        $region24: #{forward.1} parent=19 // pred_fallthru
          _
        // Predicated region
        $region25: #{forward.1} parent=19 // pred_check
          %p250 = pneg %p63
        $region26: #{forward.1} parent=19 // pred_check_branch
          %252 = sbr.rel (%p250) target = $region28
        $region27: #{forward.1} parent=19 // pred_region
          %p253 = scmp.lt.s32.totalorder %s17, 1
          %s254 = scalar_select %p253, %s17, 1
          %s255 = smul.addr %s254, 2
          %s256 = smul.addr %s255, 8
          %s257 = scalar_lea.vmem %s1, %s256
        $region28: #{forward.1} parent=19 // pred_fallthru
          _
        // Predicated region
        $region29: #{forward.1} parent=19 // pred_check
          %p258 = pneg %p89
        $region30: #{forward.1} parent=19 // pred_check_branch
          %260 = sbr.rel (%p258) target = $region32
        $region31: #{forward.1} parent=19 // pred_region
          %p261 = scmp.lt.s32.totalorder %s17, 1
          %s262 = scalar_select %p261, %s17, 1
          %s263 = smul.addr %s262, 6
          %s264 = smul.addr %s263, 8
          %s265 = scalar_lea.vmem %s2, %s264
        $region32: #{forward.1} parent=19 // pred_fallthru
          _
        // Predicated region
        $region33: #{forward.1} parent=19 // pred_check
          %p266 = pneg %p115
        $region34: #{forward.1} parent=19 // pred_check_branch
          %268 = sbr.rel (%p266) target = $region36
        $region35: #{forward.1} parent=19 // pred_region
          %p269 = scmp.lt.s32.totalorder %s17, 1
          %s270 = scalar_select %p269, %s17, 1
          %s271 = smul.addr %s270, 12
          %s272 = smul.addr %s271, 8
          %s273 = scalar_lea.vmem %s3, %s272
        $region36: #{forward.1} parent=19 // pred_fallthru
          _
        // Predicated region
        $region37: #{forward.1} parent=19 // pred_check
          %p274 = pneg %p141
        $region38: #{forward.1} parent=19 // pred_check_branch
          %276 = sbr.rel (%p274) target = $region40
        $region39: #{forward.1} parent=19 // pred_region
          %p277 = scmp.lt.s32.totalorder %s17, 1
          %s278 = scalar_select %p277, %s17, 1
          %s279 = smul.addr %s278, 2
          %s280 = smul.addr %s279, 8
          %s281 = scalar_lea.vmem %s4, %s280
        $region40: #{forward.1} parent=19 // pred_fallthru
          _
      $region20: #{forward.1} parent=5 // pred_fallthru
        _
      %p282 = scmp.le.s32.totalorder 1, %s17
      %p283 = scmp.lt.s32.totalorder %s17, 3
      %p284 = pnand %p282, %p283
      %p285 = pneg %p284
      // Predicated region
      $region41: #{forward.1} parent=5 // pred_check
        _
      $region42: #{forward.1} parent=5 // pred_check_branch
        %287 = sbr.rel (%p284) target = $region44
      $region43: #{forward.1} parent=5 // pred_region
        %s288 = ssub.s32 %s17, 1
        %p289 = scmp.lt.s32.totalorder %s22, 1
        %s290 = scalar_select %p289, %s22, 1
        %s291 = smul.addr %s290, 2
        %s292 = smul.addr %s291, 8
        %s293 = scalar_lea.vmem %s0, %s292
        %p294 = pneg %p43
        %p295 = pneg %p40
        %p296 = scmp.lt.s32.totalorder %s22, 1
        %s297 = scalar_select %p296, %s22, 1
        %s298 = smul.addr %s297, 2
        %s299 = smul.addr %s298, 8
        %s300 = scalar_lea.vmem %s1, %s299
        %p301 = pneg %p69
        %p302 = pneg %p66
        %p303 = scmp.lt.s32.totalorder %s22, 1
        %s304 = scalar_select %p303, %s22, 1
        %s305 = smul.addr %s304, 6
        %s306 = smul.addr %s305, 8
        %s307 = scalar_lea.vmem %s2, %s306
        %p308 = pneg %p95
        %p309 = pneg %p92
        %p310 = scmp.lt.s32.totalorder %s22, 1
        %s311 = scalar_select %p310, %s22, 1
        %s312 = smul.addr %s311, 12
        %s313 = smul.addr %s312, 8
        %s314 = scalar_lea.vmem %s3, %s313
        %p315 = pneg %p121
        %p316 = pneg %p118
        %p317 = scmp.lt.s32.totalorder %s22, 1
        %s318 = scalar_select %p317, %s22, 1
        %s319 = smul.addr %s318, 2
        %s320 = smul.addr %s319, 8
        %s321 = scalar_lea.vmem %s4, %s320
        %p322 = pneg %p147
        %p323 = pneg %p144
        %p324 = pneg %p168
        %p325 = pneg %p165
        %p326 = pneg %p194
        %p327 = pneg %p191
        %s328 = sand.u32 %s181, 1
        %s329 = scalar_lea.sflag [#allocation3], %s328
        %s330 = sand.u32 %s181, 1
        %s331 = smul.addr %s330, 16
        %s332 = scalar_lea.vmem [#allocation2], %s331
        %p333 = pneg %p220
        %p334 = pneg %p217
        %p335 = scmp.lt.s32.totalorder %s22, 1
        %s336 = scalar_select %p335, %s22, 1
        %s337 = smul.addr %s336, 2
        %s338 = smul.addr %s337, 8
        %s339 = scalar_lea.vmem %s7, %s338
        %p340 = scmp.lt.s32.totalorder %s22, 1
        %s341 = scalar_select %p340, %s22, 1
        %s342 = smul.addr %s341, 2
        %s343 = smul.addr %s342, 8
        %s344 = scalar_lea.vmem %s0, %s343
        %p345 = scmp.lt.s32.totalorder %s22, 1
        %s346 = scalar_select %p345, %s22, 1
        %s347 = smul.addr %s346, 2
        %s348 = smul.addr %s347, 8
        %s349 = scalar_lea.vmem %s1, %s348
        %p350 = scmp.lt.s32.totalorder %s22, 1
        %s351 = scalar_select %p350, %s22, 1
        %s352 = smul.addr %s351, 6
        %s353 = smul.addr %s352, 8
        %s354 = scalar_lea.vmem %s2, %s353
        %p355 = scmp.lt.s32.totalorder %s22, 1
        %s356 = scalar_select %p355, %s22, 1
        %s357 = smul.addr %s356, 12
        %s358 = smul.addr %s357, 8
        %s359 = scalar_lea.vmem %s3, %s358
        %p360 = scmp.lt.s32.totalorder %s22, 1
        %s361 = scalar_select %p360, %s22, 1
        %s362 = smul.addr %s361, 2
        %s363 = smul.addr %s362, 8
        %s364 = scalar_lea.vmem %s4, %s363
        %p365 = scmp.lt.s32.totalorder %s22, 1
        %s366 = scalar_select %p365, %s22, 1
        %s367 = smul.addr %s366, 2
        %s368 = smul.addr %s367, 8
        %s369 = scalar_lea.vmem %s7, %s368
        %v370 = vld [vmem:[%s359] sm:$0xff]
        %v371 = vld [vmem:[%s359 + $0x8] sm:$0xff]
        %v372 = vld [vmem:[%s359 + $0x10] sm:$0xff]
        %v373 = vld [vmem:[%s359 + $0x18] sm:$0xff]
        %v374 = vld [vmem:[%s359 + $0x20] sm:$0xff]
        %v375 = vld [vmem:[%s359 + $0x28] sm:$0xff]
        %v376 = vld [vmem:[%s359 + $0x30] sm:$0xff]
        %v377 = vld [vmem:[%s359 + $0x38] sm:$0xff]
        %v378 = vld [vmem:[%s359 + $0x40] sm:$0xff]
        %v379 = vld [vmem:[%s359 + $0x48] sm:$0xff]
        %v380 = vld [vmem:[%s359 + $0x50] sm:$0xff]
        %v381 = vld [vmem:[%s359 + $0x58] sm:$0xff]
        %v382 = vlaneseq
        %v383 = vand.u32 %v382, 127
        %384 = vset.pattern.permute.xlu0 0
        %385 = vperm.xlu0 %384, %v370
        %v386 = vpop.permute.xlu0 %385
        %387 = vset.pattern.permute.xlu0 0
        %388 = vperm.xlu0 %387, %v371
        %v389 = vpop.permute.xlu0 %388
        %390 = vset.pattern.permute.xlu0 0
        %391 = vperm.xlu0 %390, %v372
        %v392 = vpop.permute.xlu0 %391
        %393 = vset.pattern.permute.xlu0 0
        %394 = vperm.xlu0 %393, %v373
        %v395 = vpop.permute.xlu0 %394
        %396 = vset.pattern.permute.xlu0 0
        %397 = vperm.xlu0 %396, %v374
        %v398 = vpop.permute.xlu0 %397
        %399 = vset.pattern.permute.xlu0 0
        %400 = vperm.xlu0 %399, %v375
        %v401 = vpop.permute.xlu0 %400
        %402 = vset.pattern.permute.xlu0 0
        %403 = vperm.xlu0 %402, %v376
        %v404 = vpop.permute.xlu0 %403
        %405 = vset.pattern.permute.xlu0 0
        %406 = vperm.xlu0 %405, %v377
        %v407 = vpop.permute.xlu0 %406
        %408 = vset.pattern.permute.xlu0 0
        %409 = vperm.xlu0 %408, %v378
        %v410 = vpop.permute.xlu0 %409
        %411 = vset.pattern.permute.xlu0 0
        %412 = vperm.xlu0 %411, %v379
        %v413 = vpop.permute.xlu0 %412
        %414 = vset.pattern.permute.xlu0 0
        %415 = vperm.xlu0 %414, %v380
        %v416 = vpop.permute.xlu0 %415
        %417 = vset.pattern.permute.xlu0 0
        %418 = vperm.xlu0 %417, %v381
        %v419 = vpop.permute.xlu0 %418
        %vm420 = vcmp.eq.s32.totalorder %v386, %v383
        %vm421 = vcmp.eq.s32.totalorder %v389, %v383
        %vm422 = vcmp.eq.s32.totalorder %v392, %v383
        %vm423 = vcmp.eq.s32.totalorder %v395, %v383
        %vm424 = vcmp.eq.s32.totalorder %v398, %v383
        %vm425 = vcmp.eq.s32.totalorder %v401, %v383
        %vm426 = vcmp.eq.s32.totalorder %v404, %v383
        %vm427 = vcmp.eq.s32.totalorder %v407, %v383
        %vm428 = vcmp.eq.s32.totalorder %v410, %v383
        %vm429 = vcmp.eq.s32.totalorder %v413, %v383
        %vm430 = vcmp.eq.s32.totalorder %v416, %v383
        %vm431 = vcmp.eq.s32.totalorder %v419, %v383
        %v432 = vsel %vm420, 1, 0
        %v433 = vsel %vm421, 1, 0
        %v434 = vsel %vm422, 1, 0
        %v435 = vsel %vm423, 1, 0
        %v436 = vsel %vm424, 1, 0
        %v437 = vsel %vm425, 1, 0
        %v438 = vsel %vm426, 1, 0
        %v439 = vsel %vm427, 1, 0
        %v440 = vsel %vm428, 1, 0
        %v441 = vsel %vm429, 1, 0
        %v442 = vsel %vm430, 1, 0
        %v443 = vsel %vm431, 1, 0
        %v444 = vcvt.s32.f32 %v432
        %v445 = vcvt.s32.f32 %v433
        %v446 = vcvt.s32.f32 %v434
        %v447 = vcvt.s32.f32 %v435
        %v448 = vcvt.s32.f32 %v436
        %v449 = vcvt.s32.f32 %v437
        %v450 = vcvt.s32.f32 %v438
        %v451 = vcvt.s32.f32 %v439
        %v452 = vcvt.s32.f32 %v440
        %v453 = vcvt.s32.f32 %v441
        %v454 = vcvt.s32.f32 %v442
        %v455 = vcvt.s32.f32 %v443
        %v456 = vld [vmem:[%s354] sm:$0xff]
        %v457 = vld [vmem:[%s354 + $0x8] sm:$0xff]
        %v458 = vld [vmem:[%s354 + $0x10] sm:$0xff]
        %v459 = vld [vmem:[%s354 + $0x18] sm:$0xff]
        %v460 = vld [vmem:[%s354 + $0x20] sm:$0xff]
        %v461 = vld [vmem:[%s354 + $0x28] sm:$0xff]
        %v462 = vld [vmem:[%s364] sm:$0xff]
        %v463 = vld [vmem:[%s364 + $0x8] sm:$0xff]
        %v464 = vld [vmem:[%s344] sm:$0xff]
        %v465 = vld [vmem:[%s344 + $0x8] sm:$0xff]
        %v466 = vld [vmem:[%s5] sm:$0xff]
        %v467 = vld [vmem:[%s5 + $0x8] sm:$0xff]
        %v468 = vld [vmem:[%s5 + $0x10] sm:$0x1]
        %v469 = vlaneseq
        %v470 = vshrl.u32 %v469, 7
        %v471 = vsub.s32 0, %v470
        %v472 = vrot.slane %v468, %v471
        %vm473 = vcmask 130048
        %v475 = vsel %vm473, %v464, 0
        %v478 = vsel %vm473, %v465, 0
        %480 = vmatprep.subr.mxu0 0.0
        %481 = vmatpush1.msra.mxu0 %v466
        %482 = vmatprep.subr.mxu0 0.0
        %483 = vmatpush1.msra.mxu0 %v467
        %484 = vmatprep.subr.mxu0 0.0
        %485 = vmatpush1.msra.mxu0 0.0
        %486 = vmatprep.subr.mxu0 0.0
        %487 = vmatpush1.msra.mxu0 0.0
        %488 = vmatprep.subr.mxu0 0.0
        %489 = vmatpush1.msra.mxu0 0.0
        %490 = vmatprep.subr.mxu0 0.0
        %491 = vmatpush1.msra.mxu0 0.0
        %492 = vmatprep.subr.mxu0 0.0
        %493 = vmatpush1.msra.mxu0 0.0
        %494 = vmatprep.subr.mxu0 0.0
        %495 = vmatpush1.msra.mxu0 0.0
        %496 = vmatprep.subr.mxu0 0.0
        %497 = vmatpush1.msra.mxu0 0.0
        %498 = vmatprep.subr.mxu0 0.0
        %499 = vmatpush1.msra.mxu0 0.0
        %500 = vmatprep.subr.mxu0 0.0
        %501 = vmatpush1.msra.mxu0 0.0
        %502 = vmatprep.subr.mxu0 0.0
        %503 = vmatpush1.msra.mxu0 0.0
        %504 = vmatprep.subr.mxu0 0.0
        %505 = vmatpush1.msra.mxu0 0.0
        %506 = vmatprep.subr.mxu0 0.0
        %507 = vmatpush1.msra.mxu0 0.0
        %508 = vmatprep.subr.mxu0 0.0
        %509 = vmatpush1.msra.mxu0 0.0
        %510 = vmatprep.subr.mxu0 0.0
        %511 = vmatpush1.msra.mxu0 0.0
        %512 = vmatprep.subr.mxu0 0.0
        %513 = vmatpush1.msra.mxu0 0.0
        %514 = vmatprep.subr.mxu0 0.0
        %515 = vmatpush1.msra.mxu0 0.0
        %516 = vmatprep.subr.mxu0 0.0
        %517 = vmatpush1.msra.mxu0 0.0
        %518 = vmatprep.subr.mxu0 0.0
        %519 = vmatpush1.msra.mxu0 0.0
        %520 = vmatprep.subr.mxu0 0.0
        %521 = vmatpush1.msra.mxu0 0.0
        %522 = vmatprep.subr.mxu0 0.0
        %523 = vmatpush1.msra.mxu0 0.0
        %524 = vmatprep.subr.mxu0 0.0
        %525 = vmatpush1.msra.mxu0 0.0
        %526 = vmatprep.subr.mxu0 0.0
        %527 = vmatpush1.msra.mxu0 0.0
        %528 = vmatprep.subr.mxu0 0.0
        %529 = vmatpush1.msra.mxu0 0.0
        %530 = vmatprep.subr.mxu0 0.0
        %531 = vmatpush1.msra.mxu0 0.0
        %532 = vmatprep.subr.mxu0 0.0
        %533 = vmatpush1.msra.mxu0 0.0
        %534 = vmatprep.subr.mxu0 0.0
        %535 = vmatpush1.msra.mxu0 0.0
        %536 = vmatprep.subr.mxu0 0.0
        %537 = vmatpush1.msra.mxu0 0.0
        %538 = vmatprep.subr.mxu0 0.0
        %539 = vmatpush1.msra.mxu0 0.0
        %540 = vmatprep.subr.mxu0 0.0
        %541 = vmatpush1.msra.mxu0 0.0
        %542 = vmatprep.subr.mxu0 0.0
        %543 = vmatpush1.msra.mxu0 0.0
        %544 = vmatprep.mubr.f32.mxu0 0.0
        %545 = vmatmul.mubr.f32.gmra.mrb[0].mxu0 %v475
        %v546 = vpop.f32.mrb[0].mxu0
        %v547 = vadd.f32 %v472, %v546
        %v548 = vpop.f32.mrb[0].mxu0
        %549 = vmatprep.mubr.f32.mxu0 0.0
        %550 = vmatmul.mubr.f32.gmra.mrb[0].mxu0 %v478
        %v551 = vpop.f32.mrb[0].mxu0
        %v552 = vadd.f32 %v472, %v551
        %v553 = vpop.f32.mrb[0].mxu0
        %554 = vdwg.mxu0
        %v555 = vld [vmem:[%s349] sm:$0xff]
        %v556 = vld [vmem:[%s349 + $0x8] sm:$0xff]
        %559 = vrot.lane.b32.xlu0 %v555, 32
        %v560 = vpop.permute.xlu0 %559
        %561 = vrot.lane.b32.xlu0 %v556, 32
        %v562 = vpop.permute.xlu0 %561
        %vm565 = vcmask 261120
        %v566 = vsel %vm565, %v547, %v560
        %v567 = vsel %vm565, %v552, %v562
        %v569 = vsel %vm473, %v444, 0
        %v572 = vsel %vm473, %v445, 0
        %v575 = vsel %vm473, %v446, 0
        %v578 = vsel %vm473, %v447, 0
        %v581 = vsel %vm473, %v448, 0
        %v584 = vsel %vm473, %v449, 0
        %v587 = vsel %vm473, %v450, 0
        %v590 = vsel %vm473, %v451, 0
        %v593 = vsel %vm473, %v452, 0
        %v596 = vsel %vm473, %v453, 0
        %v599 = vsel %vm473, %v454, 0
        %v602 = vsel %vm473, %v455, 0
        %604 = vmatprep.subr.mxu0 0.0
        %605 = vmatpush1.msra.mxu0 %v566
        %606 = vmatprep.subr.mxu0 0.0
        %607 = vmatpush1.msra.mxu0 %v567
        %608 = vmatprep.subr.mxu0 0.0
        %609 = vmatpush1.msra.mxu0 0.0
        %610 = vmatprep.subr.mxu0 0.0
        %611 = vmatpush1.msra.mxu0 0.0
        %612 = vmatprep.subr.mxu0 0.0
        %613 = vmatpush1.msra.mxu0 0.0
        %614 = vmatprep.subr.mxu0 0.0
        %615 = vmatpush1.msra.mxu0 0.0
        %616 = vmatprep.subr.mxu0 0.0
        %617 = vmatpush1.msra.mxu0 0.0
        %618 = vmatprep.subr.mxu0 0.0
        %619 = vmatpush1.msra.mxu0 0.0
        %620 = vmatprep.subr.mxu0 0.0
        %621 = vmatpush1.msra.mxu0 0.0
        %622 = vmatprep.subr.mxu0 0.0
        %623 = vmatpush1.msra.mxu0 0.0
        %624 = vmatprep.subr.mxu0 0.0
        %625 = vmatpush1.msra.mxu0 0.0
        %626 = vmatprep.subr.mxu0 0.0
        %627 = vmatpush1.msra.mxu0 0.0
        %628 = vmatprep.subr.mxu0 0.0
        %629 = vmatpush1.msra.mxu0 0.0
        %630 = vmatprep.subr.mxu0 0.0
        %631 = vmatpush1.msra.mxu0 0.0
        %632 = vmatprep.subr.mxu0 0.0
        %633 = vmatpush1.msra.mxu0 0.0
        %634 = vmatprep.subr.mxu0 0.0
        %635 = vmatpush1.msra.mxu0 0.0
        %636 = vmatprep.subr.mxu0 0.0
        %637 = vmatpush1.msra.mxu0 0.0
        %638 = vmatprep.subr.mxu0 0.0
        %639 = vmatpush1.msra.mxu0 0.0
        %640 = vmatprep.subr.mxu0 0.0
        %641 = vmatpush1.msra.mxu0 0.0
        %642 = vmatprep.subr.mxu0 0.0
        %643 = vmatpush1.msra.mxu0 0.0
        %644 = vmatprep.subr.mxu0 0.0
        %645 = vmatpush1.msra.mxu0 0.0
        %646 = vmatprep.subr.mxu0 0.0
        %647 = vmatpush1.msra.mxu0 0.0
        %648 = vmatprep.subr.mxu0 0.0
        %649 = vmatpush1.msra.mxu0 0.0
        %650 = vmatprep.subr.mxu0 0.0
        %651 = vmatpush1.msra.mxu0 0.0
        %652 = vmatprep.subr.mxu0 0.0
        %653 = vmatpush1.msra.mxu0 0.0
        %654 = vmatprep.subr.mxu0 0.0
        %655 = vmatpush1.msra.mxu0 0.0
        %656 = vmatprep.subr.mxu0 0.0
        %657 = vmatpush1.msra.mxu0 0.0
        %658 = vmatprep.subr.mxu0 0.0
        %659 = vmatpush1.msra.mxu0 0.0
        %660 = vmatprep.subr.mxu0 0.0
        %661 = vmatpush1.msra.mxu0 0.0
        %662 = vmatprep.subr.mxu0 0.0
        %663 = vmatpush1.msra.mxu0 0.0
        %664 = vmatprep.subr.mxu0 0.0
        %665 = vmatpush1.msra.mxu0 0.0
        %666 = vmatprep.subr.mxu0 0.0
        %667 = vmatpush1.msra.mxu0 0.0
        %668 = vmatprep.mubr.f32.mxu0 0.0
        %669 = vmatmul.mubr.f32.gmra.mrb[0].mxu0 %v569
        %v670 = vpop.f32.mrb[0].mxu0
        %v671 = vadd.f32 0.0, %v670
        %v672 = vpop.f32.mrb[0].mxu0
        %673 = vmatprep.mubr.f32.mxu0 0.0
        %674 = vmatmul.mubr.f32.gmra.mrb[0].mxu0 %v572
        %v675 = vpop.f32.mrb[0].mxu0
        %v676 = vadd.f32 0.0, %v675
        %v677 = vpop.f32.mrb[0].mxu0
        %678 = vmatprep.mubr.f32.mxu0 0.0
        %679 = vmatmul.mubr.f32.gmra.mrb[0].mxu0 %v575
        %v680 = vpop.f32.mrb[0].mxu0
        %v681 = vadd.f32 0.0, %v680
        %v682 = vpop.f32.mrb[0].mxu0
        %683 = vmatprep.mubr.f32.mxu0 0.0
        %684 = vmatmul.mubr.f32.gmra.mrb[0].mxu0 %v578
        %v685 = vpop.f32.mrb[0].mxu0
        %v686 = vadd.f32 0.0, %v685
        %v687 = vpop.f32.mrb[0].mxu0
        %688 = vmatprep.mubr.f32.mxu0 0.0
        %689 = vmatmul.mubr.f32.gmra.mrb[0].mxu0 %v581
        %v690 = vpop.f32.mrb[0].mxu0
        %v691 = vadd.f32 0.0, %v690
        %v692 = vpop.f32.mrb[0].mxu0
        %693 = vmatprep.mubr.f32.mxu0 0.0
        %694 = vmatmul.mubr.f32.gmra.mrb[0].mxu0 %v584
        %v695 = vpop.f32.mrb[0].mxu0
        %v696 = vadd.f32 0.0, %v695
        %v697 = vpop.f32.mrb[0].mxu0
        %698 = vmatprep.mubr.f32.mxu0 0.0
        %699 = vmatmul.mubr.f32.gmra.mrb[0].mxu0 %v587
        %v700 = vpop.f32.mrb[0].mxu0
        %v701 = vadd.f32 0.0, %v700
        %v702 = vpop.f32.mrb[0].mxu0
        %703 = vmatprep.mubr.f32.mxu0 0.0
        %704 = vmatmul.mubr.f32.gmra.mrb[0].mxu0 %v590
        %v705 = vpop.f32.mrb[0].mxu0
        %v706 = vadd.f32 0.0, %v705
        %v707 = vpop.f32.mrb[0].mxu0
        %708 = vmatprep.mubr.f32.mxu0 0.0
        %709 = vmatmul.mubr.f32.gmra.mrb[0].mxu0 %v593
        %v710 = vpop.f32.mrb[0].mxu0
        %v711 = vadd.f32 0.0, %v710
        %v712 = vpop.f32.mrb[0].mxu0
        %713 = vmatprep.mubr.f32.mxu0 0.0
        %714 = vmatmul.mubr.f32.gmra.mrb[0].mxu0 %v596
        %v715 = vpop.f32.mrb[0].mxu0
        %v716 = vadd.f32 0.0, %v715
        %v717 = vpop.f32.mrb[0].mxu0
        %718 = vmatprep.mubr.f32.mxu0 0.0
        %719 = vmatmul.mubr.f32.gmra.mrb[0].mxu0 %v599
        %v720 = vpop.f32.mrb[0].mxu0
        %v721 = vadd.f32 0.0, %v720
        %v722 = vpop.f32.mrb[0].mxu0
        %723 = vmatprep.mubr.f32.mxu0 0.0
        %724 = vmatmul.mubr.f32.gmra.mrb[0].mxu0 %v602
        %v725 = vpop.f32.mrb[0].mxu0
        %v726 = vadd.f32 0.0, %v725
        %v727 = vpop.f32.mrb[0].mxu0
        %728 = vdwg.mxu0
        %v729 = vsub.f32 %v671, %v701
        %v730 = vsub.f32 %v676, %v706
        %v731 = vsub.f32 %v681, %v711
        %v732 = vsub.f32 %v686, %v716
        %v733 = vsub.f32 %v691, %v721
        %v734 = vsub.f32 %v696, %v726
        %v735 = vmul.f32 %v729, %v729
        %v736 = vmul.f32 %v730, %v730
        %v737 = vmul.f32 %v731, %v731
        %v738 = vmul.f32 %v732, %v732
        %v739 = vmul.f32 %v733, %v733
        %v740 = vmul.f32 %v734, %v734
        %747 = vrot.lane.b32.xlu0 %v735, 96
        %v748 = vpop.permute.xlu0 %747
        %749 = vrot.lane.b32.xlu0 %v736, 96
        %v750 = vpop.permute.xlu0 %749
        %751 = vrot.lane.b32.xlu0 %v737, 96
        %v752 = vpop.permute.xlu0 %751
        %753 = vrot.lane.b32.xlu0 %v738, 96
        %v754 = vpop.permute.xlu0 %753
        %755 = vrot.lane.b32.xlu0 %v739, 96
        %v756 = vpop.permute.xlu0 %755
        %757 = vrot.lane.b32.xlu0 %v740, 96
        %v758 = vpop.permute.xlu0 %757
        %vm765 = vcmask 23552
        %v766 = vsel %vm765, %v748, 0.0
        %767 = vadd.xlane.f32.xlu0 %v766
        %v768 = vpop.xlane.xlu0 %767
        %v769 = vsel %vm765, %v750, 0.0
        %770 = vadd.xlane.f32.xlu0 %v769
        %v771 = vpop.xlane.xlu0 %770
        %v772 = vsel %vm765, %v752, 0.0
        %773 = vadd.xlane.f32.xlu0 %v772
        %v774 = vpop.xlane.xlu0 %773
        %v775 = vsel %vm765, %v754, 0.0
        %776 = vadd.xlane.f32.xlu0 %v775
        %v777 = vpop.xlane.xlu0 %776
        %v778 = vsel %vm765, %v756, 0.0
        %779 = vadd.xlane.f32.xlu0 %v778
        %v780 = vpop.xlane.xlu0 %779
        %v781 = vsel %vm765, %v758, 0.0
        %782 = vadd.xlane.f32.xlu0 %v781
        %v783 = vpop.xlane.xlu0 %782
        %v784 = vrsqrt.pop %v768
        %v785 = vmul.f32 %v768, %v784
        %vm786 = vcmp.eq.f32.partialorder %v768, inf
        %v787 = vsel %vm786, %v768, %v785
        %vm788 = vcmp.eq.f32.partialorder %v768, 0.0
        %v789 = vand.u32 %v768, 2147483648
        %v790 = vsel %vm788, %v789, %v787
        %v791 = vrsqrt.pop %v771
        %v792 = vmul.f32 %v771, %v791
        %vm793 = vcmp.eq.f32.partialorder %v771, inf
        %v794 = vsel %vm793, %v771, %v792
        %vm795 = vcmp.eq.f32.partialorder %v771, 0.0
        %v796 = vand.u32 %v771, 2147483648
        %v797 = vsel %vm795, %v796, %v794
        %v798 = vrsqrt.pop %v774
        %v799 = vmul.f32 %v774, %v798
        %vm800 = vcmp.eq.f32.partialorder %v774, inf
        %v801 = vsel %vm800, %v774, %v799
        %vm802 = vcmp.eq.f32.partialorder %v774, 0.0
        %v803 = vand.u32 %v774, 2147483648
        %v804 = vsel %vm802, %v803, %v801
        %v805 = vrsqrt.pop %v777
        %v806 = vmul.f32 %v777, %v805
        %vm807 = vcmp.eq.f32.partialorder %v777, inf
        %v808 = vsel %vm807, %v777, %v806
        %vm809 = vcmp.eq.f32.partialorder %v777, 0.0
        %v810 = vand.u32 %v777, 2147483648
        %v811 = vsel %vm809, %v810, %v808
        %v812 = vrsqrt.pop %v780
        %v813 = vmul.f32 %v780, %v812
        %vm814 = vcmp.eq.f32.partialorder %v780, inf
        %v815 = vsel %vm814, %v780, %v813
        %vm816 = vcmp.eq.f32.partialorder %v780, 0.0
        %v817 = vand.u32 %v780, 2147483648
        %v818 = vsel %vm816, %v817, %v815
        %v819 = vrsqrt.pop %v783
        %v820 = vmul.f32 %v783, %v819
        %vm821 = vcmp.eq.f32.partialorder %v783, inf
        %v822 = vsel %vm821, %v783, %v820
        %vm823 = vcmp.eq.f32.partialorder %v783, 0.0
        %v824 = vand.u32 %v783, 2147483648
        %v825 = vsel %vm823, %v824, %v822
        %v826 = vadd.f32 %v790, 1e-08
        %v827 = vadd.f32 %v797, 1e-08
        %v828 = vadd.f32 %v804, 1e-08
        %v829 = vadd.f32 %v811, 1e-08
        %v830 = vadd.f32 %v818, 1e-08
        %v831 = vadd.f32 %v825, 1e-08
        %v832 = vrcp.pop %v826
        %v833 = vmul.f32 %v729, %v832
        %v834 = vrcp.pop %v827
        %v835 = vmul.f32 %v730, %v834
        %v836 = vrcp.pop %v828
        %v837 = vmul.f32 %v731, %v836
        %v838 = vrcp.pop %v829
        %v839 = vmul.f32 %v732, %v838
        %v840 = vrcp.pop %v830
        %v841 = vmul.f32 %v733, %v840
        %v842 = vrcp.pop %v831
        %v843 = vmul.f32 %v734, %v842
        %v844 = vld [vmem:[%s5 + $0x18] sm:$0xff]
        %v845 = vld [vmem:[%s5 + $0x20] sm:$0xff]
        %v846 = vld [vmem:[%s5 + $0x28] sm:$0xff]
        %v847 = vld [vmem:[%s5 + $0x30] sm:$0xff]
        %v848 = vld [vmem:[%s5 + $0x38] sm:$0xff]
        %v849 = vld [vmem:[%s5 + $0x40] sm:$0xff]
        %v850 = vld [vmem:[%s5 + $0x48] sm:$0xff]
        %v851 = vld [vmem:[%s5 + $0x50] sm:$0xff]
        %v853 = vsel %vm565, %v701, 0
        %v856 = vsel %vm565, %v706, 0
        %v859 = vsel %vm565, %v711, 0
        %v862 = vsel %vm565, %v716, 0
        %v865 = vsel %vm565, %v721, 0
        %v868 = vsel %vm565, %v726, 0
        %870 = vmatprep.subr.mxu0 0.0
        %871 = vmatpush1.msra.mxu0 %v848
        %872 = vmatprep.subr.mxu0 0.0
        %873 = vmatpush1.msra.mxu0 %v849
        %874 = vmatprep.subr.mxu0 0.0
        %875 = vmatpush1.msra.mxu0 %v850
        %876 = vmatprep.subr.mxu0 0.0
        %877 = vmatpush1.msra.mxu0 %v851
        %878 = vmatprep.subr.mxu0 0.0
        %879 = vmatpush1.msra.mxu0 0.0
        %880 = vmatprep.subr.mxu0 0.0
        %881 = vmatpush1.msra.mxu0 0.0
        %882 = vmatprep.subr.mxu0 0.0
        %883 = vmatpush1.msra.mxu0 0.0
        %884 = vmatprep.subr.mxu0 0.0
        %885 = vmatpush1.msra.mxu0 0.0
        %886 = vmatprep.subr.mxu0 0.0
        %887 = vmatpush1.msra.mxu0 0.0
        %888 = vmatprep.subr.mxu0 0.0
        %889 = vmatpush1.msra.mxu0 0.0
        %890 = vmatprep.subr.mxu0 0.0
        %891 = vmatpush1.msra.mxu0 0.0
        %892 = vmatprep.subr.mxu0 0.0
        %893 = vmatpush1.msra.mxu0 0.0
        %894 = vmatprep.subr.mxu0 0.0
        %895 = vmatpush1.msra.mxu0 0.0
        %896 = vmatprep.subr.mxu0 0.0
        %897 = vmatpush1.msra.mxu0 0.0
        %898 = vmatprep.subr.mxu0 0.0
        %899 = vmatpush1.msra.mxu0 0.0
        %900 = vmatprep.subr.mxu0 0.0
        %901 = vmatpush1.msra.mxu0 0.0
        %902 = vmatprep.subr.mxu0 0.0
        %903 = vmatpush1.msra.mxu0 0.0
        %904 = vmatprep.subr.mxu0 0.0
        %905 = vmatpush1.msra.mxu0 0.0
        %906 = vmatprep.subr.mxu0 0.0
        %907 = vmatpush1.msra.mxu0 0.0
        %908 = vmatprep.subr.mxu0 0.0
        %909 = vmatpush1.msra.mxu0 0.0
        %910 = vmatprep.subr.mxu0 0.0
        %911 = vmatpush1.msra.mxu0 0.0
        %912 = vmatprep.subr.mxu0 0.0
        %913 = vmatpush1.msra.mxu0 0.0
        %914 = vmatprep.subr.mxu0 0.0
        %915 = vmatpush1.msra.mxu0 0.0
        %916 = vmatprep.subr.mxu0 0.0
        %917 = vmatpush1.msra.mxu0 0.0
        %918 = vmatprep.subr.mxu0 0.0
        %919 = vmatpush1.msra.mxu0 0.0
        %920 = vmatprep.subr.mxu0 0.0
        %921 = vmatpush1.msra.mxu0 0.0
        %922 = vmatprep.subr.mxu0 0.0
        %923 = vmatpush1.msra.mxu0 0.0
        %924 = vmatprep.subr.mxu0 0.0
        %925 = vmatpush1.msra.mxu0 0.0
        %926 = vmatprep.subr.mxu0 0.0
        %927 = vmatpush1.msra.mxu0 0.0
        %928 = vmatprep.subr.mxu0 0.0
        %929 = vmatpush1.msra.mxu0 0.0
        %930 = vmatprep.subr.mxu0 0.0
        %931 = vmatpush1.msra.mxu0 0.0
        %932 = vmatprep.subr.mxu0 0.0
        %933 = vmatpush1.msra.mxu0 0.0
        %934 = vmatprep.mubr.f32.mxu0 0.0
        %935 = vmatmul.mubr.f32.gmra.mrb[0].mxu0 %v853
        %v936 = vpop.f32.mrb[0].mxu0
        %v937 = vadd.f32 0.0, %v936
        %v938 = vpop.f32.mrb[0].mxu0
        %939 = vmatprep.mubr.f32.mxu0 0.0
        %940 = vmatmul.mubr.f32.gmra.mrb[0].mxu0 %v856
        %v941 = vpop.f32.mrb[0].mxu0
        %v942 = vadd.f32 0.0, %v941
        %v943 = vpop.f32.mrb[0].mxu0
        %944 = vmatprep.mubr.f32.mxu0 0.0
        %945 = vmatmul.mubr.f32.gmra.mrb[0].mxu0 %v859
        %v946 = vpop.f32.mrb[0].mxu0
        %v947 = vadd.f32 0.0, %v946
        %v948 = vpop.f32.mrb[0].mxu0
        %949 = vmatprep.mubr.f32.mxu0 0.0
        %950 = vmatmul.mubr.f32.gmra.mrb[0].mxu0 %v862
        %v951 = vpop.f32.mrb[0].mxu0
        %v952 = vadd.f32 0.0, %v951
        %v953 = vpop.f32.mrb[0].mxu0
        %954 = vmatprep.mubr.f32.mxu0 0.0
        %955 = vmatmul.mubr.f32.gmra.mrb[0].mxu0 %v865
        %v956 = vpop.f32.mrb[0].mxu0
        %v957 = vadd.f32 0.0, %v956
        %v958 = vpop.f32.mrb[0].mxu0
        %959 = vmatprep.mubr.f32.mxu0 0.0
        %960 = vmatmul.mubr.f32.gmra.mrb[0].mxu0 %v868
        %v961 = vpop.f32.mrb[0].mxu0
        %v962 = vadd.f32 0.0, %v961
        %v963 = vpop.f32.mrb[0].mxu0
        %964 = vdwg.mxu0
        %v966 = vsel %vm565, %v671, 0
        %v969 = vsel %vm565, %v676, 0
        %v972 = vsel %vm565, %v681, 0
        %v975 = vsel %vm565, %v686, 0
        %v978 = vsel %vm565, %v691, 0
        %v981 = vsel %vm565, %v696, 0
        %983 = vmatprep.subr.mxu0 0.0
        %984 = vmatpush1.msra.mxu0 %v844
        %985 = vmatprep.subr.mxu0 0.0
        %986 = vmatpush1.msra.mxu0 %v845
        %987 = vmatprep.subr.mxu0 0.0
        %988 = vmatpush1.msra.mxu0 %v846
        %989 = vmatprep.subr.mxu0 0.0
        %990 = vmatpush1.msra.mxu0 %v847
        %991 = vmatprep.subr.mxu0 0.0
        %992 = vmatpush1.msra.mxu0 0.0
        %993 = vmatprep.subr.mxu0 0.0
        %994 = vmatpush1.msra.mxu0 0.0
        %995 = vmatprep.subr.mxu0 0.0
        %996 = vmatpush1.msra.mxu0 0.0
        %997 = vmatprep.subr.mxu0 0.0
        %998 = vmatpush1.msra.mxu0 0.0
        %999 = vmatprep.subr.mxu0 0.0
        %1000 = vmatpush1.msra.mxu0 0.0
        %1001 = vmatprep.subr.mxu0 0.0
        %1002 = vmatpush1.msra.mxu0 0.0
        %1003 = vmatprep.subr.mxu0 0.0
        %1004 = vmatpush1.msra.mxu0 0.0
        %1005 = vmatprep.subr.mxu0 0.0
        %1006 = vmatpush1.msra.mxu0 0.0
        %1007 = vmatprep.subr.mxu0 0.0
        %1008 = vmatpush1.msra.mxu0 0.0
        %1009 = vmatprep.subr.mxu0 0.0
        %1010 = vmatpush1.msra.mxu0 0.0
        %1011 = vmatprep.subr.mxu0 0.0
        %1012 = vmatpush1.msra.mxu0 0.0
        %1013 = vmatprep.subr.mxu0 0.0
        %1014 = vmatpush1.msra.mxu0 0.0
        %1015 = vmatprep.subr.mxu0 0.0
        %1016 = vmatpush1.msra.mxu0 0.0
        %1017 = vmatprep.subr.mxu0 0.0
        %1018 = vmatpush1.msra.mxu0 0.0
        %1019 = vmatprep.subr.mxu0 0.0
        %1020 = vmatpush1.msra.mxu0 0.0
        %1021 = vmatprep.subr.mxu0 0.0
        %1022 = vmatpush1.msra.mxu0 0.0
        %1023 = vmatprep.subr.mxu0 0.0
        %1024 = vmatpush1.msra.mxu0 0.0
        %1025 = vmatprep.subr.mxu0 0.0
        %1026 = vmatpush1.msra.mxu0 0.0
        %1027 = vmatprep.subr.mxu0 0.0
        %1028 = vmatpush1.msra.mxu0 0.0
        %1029 = vmatprep.subr.mxu0 0.0
        %1030 = vmatpush1.msra.mxu0 0.0
        %1031 = vmatprep.subr.mxu0 0.0
        %1032 = vmatpush1.msra.mxu0 0.0
        %1033 = vmatprep.subr.mxu0 0.0
        %1034 = vmatpush1.msra.mxu0 0.0
        %1035 = vmatprep.subr.mxu0 0.0
        %1036 = vmatpush1.msra.mxu0 0.0
        %1037 = vmatprep.subr.mxu0 0.0
        %1038 = vmatpush1.msra.mxu0 0.0
        %1039 = vmatprep.subr.mxu0 0.0
        %1040 = vmatpush1.msra.mxu0 0.0
        %1041 = vmatprep.subr.mxu0 0.0
        %1042 = vmatpush1.msra.mxu0 0.0
        %1043 = vmatprep.subr.mxu0 0.0
        %1044 = vmatpush1.msra.mxu0 0.0
        %1045 = vmatprep.subr.mxu0 0.0
        %1046 = vmatpush1.msra.mxu0 0.0
        %1047 = vmatprep.mubr.f32.mxu0 0.0
        %1048 = vmatmul.mubr.f32.gmra.mrb[0].mxu0 %v966
        %v1049 = vpop.f32.mrb[0].mxu0
        %v1050 = vadd.f32 %v937, %v1049
        %v1051 = vpop.f32.mrb[0].mxu0
        %1052 = vmatprep.mubr.f32.mxu0 0.0
        %1053 = vmatmul.mubr.f32.gmra.mrb[0].mxu0 %v969
        %v1054 = vpop.f32.mrb[0].mxu0
        %v1055 = vadd.f32 %v942, %v1054
        %v1056 = vpop.f32.mrb[0].mxu0
        %1057 = vmatprep.mubr.f32.mxu0 0.0
        %1058 = vmatmul.mubr.f32.gmra.mrb[0].mxu0 %v972
        %v1059 = vpop.f32.mrb[0].mxu0
        %v1060 = vadd.f32 %v947, %v1059
        %v1061 = vpop.f32.mrb[0].mxu0
        %1062 = vmatprep.mubr.f32.mxu0 0.0
        %1063 = vmatmul.mubr.f32.gmra.mrb[0].mxu0 %v975
        %v1064 = vpop.f32.mrb[0].mxu0
        %v1065 = vadd.f32 %v952, %v1064
        %v1066 = vpop.f32.mrb[0].mxu0
        %1067 = vmatprep.mubr.f32.mxu0 0.0
        %1068 = vmatmul.mubr.f32.gmra.mrb[0].mxu0 %v978
        %v1069 = vpop.f32.mrb[0].mxu0
        %v1070 = vadd.f32 %v957, %v1069
        %v1071 = vpop.f32.mrb[0].mxu0
        %1072 = vmatprep.mubr.f32.mxu0 0.0
        %1073 = vmatmul.mubr.f32.gmra.mrb[0].mxu0 %v981
        %v1074 = vpop.f32.mrb[0].mxu0
        %v1075 = vadd.f32 %v962, %v1074
        %v1076 = vpop.f32.mrb[0].mxu0
        %1077 = vdwg.mxu0
        %v1078 = vld [vmem:[%s5 + $0x60] sm:$0xf]
        %vm1079 = vcmask 31744
        %v1081 = vsel %vm1079, %v456, 0
        %v1084 = vsel %vm1079, %v457, 0
        %v1087 = vsel %vm1079, %v458, 0
        %v1090 = vsel %vm1079, %v459, 0
        %v1093 = vsel %vm1079, %v460, 0
        %v1096 = vsel %vm1079, %v461, 0
        %vm1098 = vcmask 1043456
        %v1100 = vsel %vm1098, %v1078, 0
        %1102 = vmatprep.subr.mxu0 0.0
        %1103 = vmatpush1.msra.mxu0 %v1100
        %1104 = vmatprep.subr.mxu0 0.0
        %1105 = vmatpush1.msra.mxu0 0.0
        %1106 = vmatprep.subr.mxu0 0.0
        %1107 = vmatpush1.msra.mxu0 0.0
        %1108 = vmatprep.subr.mxu0 0.0
        %1109 = vmatpush1.msra.mxu0 0.0
        %1110 = vmatprep.subr.mxu0 0.0
        %1111 = vmatpush1.msra.mxu0 0.0
        %1112 = vmatprep.subr.mxu0 0.0
        %1113 = vmatpush1.msra.mxu0 0.0
        %1114 = vmatprep.subr.mxu0 0.0
        %1115 = vmatpush1.msra.mxu0 0.0
        %1116 = vmatprep.subr.mxu0 0.0
        %1117 = vmatpush1.msra.mxu0 0.0
        %1118 = vmatprep.subr.mxu0 0.0
        %1119 = vmatpush1.msra.mxu0 0.0
        %1120 = vmatprep.subr.mxu0 0.0
        %1121 = vmatpush1.msra.mxu0 0.0
        %1122 = vmatprep.subr.mxu0 0.0
        %1123 = vmatpush1.msra.mxu0 0.0
        %1124 = vmatprep.subr.mxu0 0.0
        %1125 = vmatpush1.msra.mxu0 0.0
        %1126 = vmatprep.subr.mxu0 0.0
        %1127 = vmatpush1.msra.mxu0 0.0
        %1128 = vmatprep.subr.mxu0 0.0
        %1129 = vmatpush1.msra.mxu0 0.0
        %1130 = vmatprep.subr.mxu0 0.0
        %1131 = vmatpush1.msra.mxu0 0.0
        %1132 = vmatprep.subr.mxu0 0.0
        %1133 = vmatpush1.msra.mxu0 0.0
        %1134 = vmatprep.subr.mxu0 0.0
        %1135 = vmatpush1.msra.mxu0 0.0
        %1136 = vmatprep.subr.mxu0 0.0
        %1137 = vmatpush1.msra.mxu0 0.0
        %1138 = vmatprep.subr.mxu0 0.0
        %1139 = vmatpush1.msra.mxu0 0.0
        %1140 = vmatprep.subr.mxu0 0.0
        %1141 = vmatpush1.msra.mxu0 0.0
        %1142 = vmatprep.subr.mxu0 0.0
        %1143 = vmatpush1.msra.mxu0 0.0
        %1144 = vmatprep.subr.mxu0 0.0
        %1145 = vmatpush1.msra.mxu0 0.0
        %1146 = vmatprep.subr.mxu0 0.0
        %1147 = vmatpush1.msra.mxu0 0.0
        %1148 = vmatprep.subr.mxu0 0.0
        %1149 = vmatpush1.msra.mxu0 0.0
        %1150 = vmatprep.subr.mxu0 0.0
        %1151 = vmatpush1.msra.mxu0 0.0
        %1152 = vmatprep.subr.mxu0 0.0
        %1153 = vmatpush1.msra.mxu0 0.0
        %1154 = vmatprep.subr.mxu0 0.0
        %1155 = vmatpush1.msra.mxu0 0.0
        %1156 = vmatprep.subr.mxu0 0.0
        %1157 = vmatpush1.msra.mxu0 0.0
        %1158 = vmatprep.subr.mxu0 0.0
        %1159 = vmatpush1.msra.mxu0 0.0
        %1160 = vmatprep.subr.mxu0 0.0
        %1161 = vmatpush1.msra.mxu0 0.0
        %1162 = vmatprep.subr.mxu0 0.0
        %1163 = vmatpush1.msra.mxu0 0.0
        %1164 = vmatprep.subr.mxu0 0.0
        %1165 = vmatpush1.msra.mxu0 0.0
        %1166 = vmatprep.mubr.f32.mxu0 0.0
        %1167 = vmatmul.mubr.f32.gmra.mrb[0].mxu0 %v1081
        %v1168 = vpop.f32.mrb[0].mxu0
        %v1169 = vadd.f32 0.0, %v1168
        %v1170 = vpop.f32.mrb[0].mxu0
        %1171 = vmatprep.mubr.f32.mxu0 0.0
        %1172 = vmatmul.mubr.f32.gmra.mrb[0].mxu0 %v1084
        %v1173 = vpop.f32.mrb[0].mxu0
        %v1174 = vadd.f32 0.0, %v1173
        %v1175 = vpop.f32.mrb[0].mxu0
        %1176 = vmatprep.mubr.f32.mxu0 0.0
        %1177 = vmatmul.mubr.f32.gmra.mrb[0].mxu0 %v1087
        %v1178 = vpop.f32.mrb[0].mxu0
        %v1179 = vadd.f32 0.0, %v1178
        %v1180 = vpop.f32.mrb[0].mxu0
        %1181 = vmatprep.mubr.f32.mxu0 0.0
        %1182 = vmatmul.mubr.f32.gmra.mrb[0].mxu0 %v1090
        %v1183 = vpop.f32.mrb[0].mxu0
        %v1184 = vadd.f32 0.0, %v1183
        %v1185 = vpop.f32.mrb[0].mxu0
        %1186 = vmatprep.mubr.f32.mxu0 0.0
        %1187 = vmatmul.mubr.f32.gmra.mrb[0].mxu0 %v1093
        %v1188 = vpop.f32.mrb[0].mxu0
        %v1189 = vadd.f32 0.0, %v1188
        %v1190 = vpop.f32.mrb[0].mxu0
        %1191 = vmatprep.mubr.f32.mxu0 0.0
        %1192 = vmatmul.mubr.f32.gmra.mrb[0].mxu0 %v1096
        %v1193 = vpop.f32.mrb[0].mxu0
        %v1194 = vadd.f32 0.0, %v1193
        %v1195 = vpop.f32.mrb[0].mxu0
        %1196 = vdwg.mxu0
        %v1197 = vadd.f32 %v1050, %v1169
        %v1198 = vadd.f32 %v1055, %v1174
        %v1199 = vadd.f32 %v1060, %v1179
        %v1200 = vadd.f32 %v1065, %v1184
        %v1201 = vadd.f32 %v1070, %v1189
        %v1202 = vadd.f32 %v1075, %v1194
        %v1203 = vld [vmem:[%s5 + $0x58] sm:$0x1]
        %v1204 = vlaneseq
        %v1205 = vshrl.u32 %v1204, 7
        %v1206 = vsub.s32 0, %v1205
        %v1207 = vrot.slane %v1203, %v1206
        %v1208 = vmul.f32 %v768, %v1207
        %v1209 = vmul.f32 %v771, %v1207
        %v1210 = vmul.f32 %v774, %v1207
        %v1211 = vmul.f32 %v777, %v1207
        %v1212 = vmul.f32 %v780, %v1207
        %v1213 = vmul.f32 %v783, %v1207
        %v1214 = vadd.f32 %v1197, %v1208
        %v1215 = vadd.f32 %v1198, %v1209
        %v1216 = vadd.f32 %v1199, %v1210
        %v1217 = vadd.f32 %v1200, %v1211
        %v1218 = vadd.f32 %v1201, %v1212
        %v1219 = vadd.f32 %v1202, %v1213
        %v1220 = vld [vmem:[%s5 + $0x68] sm:$0x1]
        %v1221 = vlaneseq
        %v1222 = vshrl.u32 %v1221, 7
        %v1223 = vsub.s32 0, %v1222
        %v1224 = vrot.slane %v1220, %v1223
        %v1225 = vadd.f32 %v1214, %v1224
        %v1226 = vadd.f32 %v1215, %v1224
        %v1227 = vadd.f32 %v1216, %v1224
        %v1228 = vadd.f32 %v1217, %v1224
        %v1229 = vadd.f32 %v1218, %v1224
        %v1230 = vadd.f32 %v1219, %v1224
        %v1231 = vxor.u32 %v1225, 2147483648
        %v1232 = vxor.u32 %v1226, 2147483648
        %v1233 = vxor.u32 %v1227, 2147483648
        %v1234 = vxor.u32 %v1228, 2147483648
        %v1235 = vxor.u32 %v1229, 2147483648
        %v1236 = vxor.u32 %v1230, 2147483648
        %v1237 = vmul.f32 %v1231, 1.442695
        %v1238 = vpow.pop %v1237
        %v1239 = vmul.f32 %v1232, 1.442695
        %v1240 = vpow.pop %v1239
        %v1241 = vmul.f32 %v1233, 1.442695
        %v1242 = vpow.pop %v1241
        %v1243 = vmul.f32 %v1234, 1.442695
        %v1244 = vpow.pop %v1243
        %v1245 = vmul.f32 %v1235, 1.442695
        %v1246 = vpow.pop %v1245
        %v1247 = vmul.f32 %v1236, 1.442695
        %v1248 = vpow.pop %v1247
        %v1249 = vadd.f32 %v1238, 1.0
        %v1250 = vadd.f32 %v1240, 1.0
        %v1251 = vadd.f32 %v1242, 1.0
        %v1252 = vadd.f32 %v1244, 1.0
        %v1253 = vadd.f32 %v1246, 1.0
        %v1254 = vadd.f32 %v1248, 1.0
        %v1255 = vrcp.pop %v1249
        %v1256 = vmul.f32 1.0, %v1255
        %v1257 = vrcp.pop %v1250
        %v1258 = vmul.f32 1.0, %v1257
        %v1259 = vrcp.pop %v1251
        %v1260 = vmul.f32 1.0, %v1259
        %v1261 = vrcp.pop %v1252
        %v1262 = vmul.f32 1.0, %v1261
        %v1263 = vrcp.pop %v1253
        %v1264 = vmul.f32 1.0, %v1263
        %v1265 = vrcp.pop %v1254
        %v1266 = vmul.f32 1.0, %v1265
        %v1267 = vmul.f32 %v1225, %v1256
        %v1268 = vmul.f32 %v1226, %v1258
        %v1269 = vmul.f32 %v1227, %v1260
        %v1270 = vmul.f32 %v1228, %v1262
        %v1271 = vmul.f32 %v1229, %v1264
        %v1272 = vmul.f32 %v1230, %v1266
        %v1273 = vld [vmem:[%s5 + $0x70] sm:$0xff]
        %v1274 = vld [vmem:[%s5 + $0x78] sm:$0xff]
        %v1275 = vld [vmem:[%s5 + $0x80] sm:$0xff]
        %v1276 = vld [vmem:[%s5 + $0x88] sm:$0xff]
        %v1277 = vld [vmem:[%s5 + $0x90] sm:$0x1]
        %v1278 = vlaneseq
        %v1279 = vshrl.u32 %v1278, 7
        %v1280 = vsub.s32 0, %v1279
        %v1281 = vrot.slane %v1277, %v1280
        %v1283 = vsel %vm565, %v1267, 0
        %v1286 = vsel %vm565, %v1268, 0
        %v1289 = vsel %vm565, %v1269, 0
        %v1292 = vsel %vm565, %v1270, 0
        %v1295 = vsel %vm565, %v1271, 0
        %v1298 = vsel %vm565, %v1272, 0
        %1300 = vmatprep.subr.mxu0 0.0
        %1301 = vmatpush1.msra.mxu0 %v1273
        %1302 = vmatprep.subr.mxu0 0.0
        %1303 = vmatpush1.msra.mxu0 %v1274
        %1304 = vmatprep.subr.mxu0 0.0
        %1305 = vmatpush1.msra.mxu0 %v1275
        %1306 = vmatprep.subr.mxu0 0.0
        %1307 = vmatpush1.msra.mxu0 %v1276
        %1308 = vmatprep.subr.mxu0 0.0
        %1309 = vmatpush1.msra.mxu0 0.0
        %1310 = vmatprep.subr.mxu0 0.0
        %1311 = vmatpush1.msra.mxu0 0.0
        %1312 = vmatprep.subr.mxu0 0.0
        %1313 = vmatpush1.msra.mxu0 0.0
        %1314 = vmatprep.subr.mxu0 0.0
        %1315 = vmatpush1.msra.mxu0 0.0
        %1316 = vmatprep.subr.mxu0 0.0
        %1317 = vmatpush1.msra.mxu0 0.0
        %1318 = vmatprep.subr.mxu0 0.0
        %1319 = vmatpush1.msra.mxu0 0.0
        %1320 = vmatprep.subr.mxu0 0.0
        %1321 = vmatpush1.msra.mxu0 0.0
        %1322 = vmatprep.subr.mxu0 0.0
        %1323 = vmatpush1.msra.mxu0 0.0
        %1324 = vmatprep.subr.mxu0 0.0
        %1325 = vmatpush1.msra.mxu0 0.0
        %1326 = vmatprep.subr.mxu0 0.0
        %1327 = vmatpush1.msra.mxu0 0.0
        %1328 = vmatprep.subr.mxu0 0.0
        %1329 = vmatpush1.msra.mxu0 0.0
        %1330 = vmatprep.subr.mxu0 0.0
        %1331 = vmatpush1.msra.mxu0 0.0
        %1332 = vmatprep.subr.mxu0 0.0
        %1333 = vmatpush1.msra.mxu0 0.0
        %1334 = vmatprep.subr.mxu0 0.0
        %1335 = vmatpush1.msra.mxu0 0.0
        %1336 = vmatprep.subr.mxu0 0.0
        %1337 = vmatpush1.msra.mxu0 0.0
        %1338 = vmatprep.subr.mxu0 0.0
        %1339 = vmatpush1.msra.mxu0 0.0
        %1340 = vmatprep.subr.mxu0 0.0
        %1341 = vmatpush1.msra.mxu0 0.0
        %1342 = vmatprep.subr.mxu0 0.0
        %1343 = vmatpush1.msra.mxu0 0.0
        %1344 = vmatprep.subr.mxu0 0.0
        %1345 = vmatpush1.msra.mxu0 0.0
        %1346 = vmatprep.subr.mxu0 0.0
        %1347 = vmatpush1.msra.mxu0 0.0
        %1348 = vmatprep.subr.mxu0 0.0
        %1349 = vmatpush1.msra.mxu0 0.0
        %1350 = vmatprep.subr.mxu0 0.0
        %1351 = vmatpush1.msra.mxu0 0.0
        %1352 = vmatprep.subr.mxu0 0.0
        %1353 = vmatpush1.msra.mxu0 0.0
        %1354 = vmatprep.subr.mxu0 0.0
        %1355 = vmatpush1.msra.mxu0 0.0
        %1356 = vmatprep.subr.mxu0 0.0
        %1357 = vmatpush1.msra.mxu0 0.0
        %1358 = vmatprep.subr.mxu0 0.0
        %1359 = vmatpush1.msra.mxu0 0.0
        %1360 = vmatprep.subr.mxu0 0.0
        %1361 = vmatpush1.msra.mxu0 0.0
        %1362 = vmatprep.subr.mxu0 0.0
        %1363 = vmatpush1.msra.mxu0 0.0
        %1364 = vmatprep.mubr.f32.mxu0 0.0
        %1365 = vmatmul.mubr.f32.gmra.mrb[0].mxu0 %v1283
        %v1366 = vpop.f32.mrb[0].mxu0
        %v1367 = vadd.f32 %v1281, %v1366
        %v1368 = vpop.f32.mrb[0].mxu0
        %1369 = vmatprep.mubr.f32.mxu0 0.0
        %1370 = vmatmul.mubr.f32.gmra.mrb[0].mxu0 %v1286
        %v1371 = vpop.f32.mrb[0].mxu0
        %v1372 = vadd.f32 %v1281, %v1371
        %v1373 = vpop.f32.mrb[0].mxu0
        %1374 = vmatprep.mubr.f32.mxu0 0.0
        %1375 = vmatmul.mubr.f32.gmra.mrb[0].mxu0 %v1289
        %v1376 = vpop.f32.mrb[0].mxu0
        %v1377 = vadd.f32 %v1281, %v1376
        %v1378 = vpop.f32.mrb[0].mxu0
        %1379 = vmatprep.mubr.f32.mxu0 0.0
        %1380 = vmatmul.mubr.f32.gmra.mrb[0].mxu0 %v1292
        %v1381 = vpop.f32.mrb[0].mxu0
        %v1382 = vadd.f32 %v1281, %v1381
        %v1383 = vpop.f32.mrb[0].mxu0
        %1384 = vmatprep.mubr.f32.mxu0 0.0
        %1385 = vmatmul.mubr.f32.gmra.mrb[0].mxu0 %v1295
        %v1386 = vpop.f32.mrb[0].mxu0
        %v1387 = vadd.f32 %v1281, %v1386
        %v1388 = vpop.f32.mrb[0].mxu0
        %1389 = vmatprep.mubr.f32.mxu0 0.0
        %1390 = vmatmul.mubr.f32.gmra.mrb[0].mxu0 %v1298
        %v1391 = vpop.f32.mrb[0].mxu0
        %v1392 = vadd.f32 %v1281, %v1391
        %v1393 = vpop.f32.mrb[0].mxu0
        %1394 = vdwg.mxu0
        %v1395 = vxor.u32 %v1367, 2147483648
        %v1396 = vxor.u32 %v1372, 2147483648
        %v1397 = vxor.u32 %v1377, 2147483648
        %v1398 = vxor.u32 %v1382, 2147483648
        %v1399 = vxor.u32 %v1387, 2147483648
        %v1400 = vxor.u32 %v1392, 2147483648
        %v1401 = vmul.f32 %v1395, 1.442695
        %v1402 = vpow.pop %v1401
        %v1403 = vmul.f32 %v1396, 1.442695
        %v1404 = vpow.pop %v1403
        %v1405 = vmul.f32 %v1397, 1.442695
        %v1406 = vpow.pop %v1405
        %v1407 = vmul.f32 %v1398, 1.442695
        %v1408 = vpow.pop %v1407
        %v1409 = vmul.f32 %v1399, 1.442695
        %v1410 = vpow.pop %v1409
        %v1411 = vmul.f32 %v1400, 1.442695
        %v1412 = vpow.pop %v1411
        %v1413 = vadd.f32 %v1402, 1.0
        %v1414 = vadd.f32 %v1404, 1.0
        %v1415 = vadd.f32 %v1406, 1.0
        %v1416 = vadd.f32 %v1408, 1.0
        %v1417 = vadd.f32 %v1410, 1.0
        %v1418 = vadd.f32 %v1412, 1.0
        %v1419 = vrcp.pop %v1413
        %v1420 = vmul.f32 1.0, %v1419
        %v1421 = vrcp.pop %v1414
        %v1422 = vmul.f32 1.0, %v1421
        %v1423 = vrcp.pop %v1415
        %v1424 = vmul.f32 1.0, %v1423
        %v1425 = vrcp.pop %v1416
        %v1426 = vmul.f32 1.0, %v1425
        %v1427 = vrcp.pop %v1417
        %v1428 = vmul.f32 1.0, %v1427
        %v1429 = vrcp.pop %v1418
        %v1430 = vmul.f32 1.0, %v1429
        %v1431 = vmul.f32 %v1367, %v1420
        %v1432 = vmul.f32 %v1372, %v1422
        %v1433 = vmul.f32 %v1377, %v1424
        %v1434 = vmul.f32 %v1382, %v1426
        %v1435 = vmul.f32 %v1387, %v1428
        %v1436 = vmul.f32 %v1392, %v1430
        %v1437 = vld [vmem:[%s5 + $0x98] sm:$0xff]
        %v1438 = vld [vmem:[%s5 + $0xa0] sm:$0xff]
        %v1439 = vld [vmem:[%s5 + $0xa8] sm:$0xff]
        %v1440 = vld [vmem:[%s5 + $0xb0] sm:$0xff]
        %v1441 = vld [vmem:[%s5 + $0xb8] sm:$0x1]
        %v1442 = vlaneseq
        %v1443 = vshrl.u32 %v1442, 7
        %v1444 = vsub.s32 0, %v1443
        %v1445 = vrot.slane %v1441, %v1444
        %v1447 = vsel %vm565, %v1431, 0
        %v1450 = vsel %vm565, %v1432, 0
        %v1453 = vsel %vm565, %v1433, 0
        %v1456 = vsel %vm565, %v1434, 0
        %v1459 = vsel %vm565, %v1435, 0
        %v1462 = vsel %vm565, %v1436, 0
        %1464 = vmatprep.subr.mxu0 0.0
        %1465 = vmatpush1.msra.mxu0 %v1437
        %1466 = vmatprep.subr.mxu0 0.0
        %1467 = vmatpush1.msra.mxu0 %v1438
        %1468 = vmatprep.subr.mxu0 0.0
        %1469 = vmatpush1.msra.mxu0 %v1439
        %1470 = vmatprep.subr.mxu0 0.0
        %1471 = vmatpush1.msra.mxu0 %v1440
        %1472 = vmatprep.subr.mxu0 0.0
        %1473 = vmatpush1.msra.mxu0 0.0
        %1474 = vmatprep.subr.mxu0 0.0
        %1475 = vmatpush1.msra.mxu0 0.0
        %1476 = vmatprep.subr.mxu0 0.0
        %1477 = vmatpush1.msra.mxu0 0.0
        %1478 = vmatprep.subr.mxu0 0.0
        %1479 = vmatpush1.msra.mxu0 0.0
        %1480 = vmatprep.subr.mxu0 0.0
        %1481 = vmatpush1.msra.mxu0 0.0
        %1482 = vmatprep.subr.mxu0 0.0
        %1483 = vmatpush1.msra.mxu0 0.0
        %1484 = vmatprep.subr.mxu0 0.0
        %1485 = vmatpush1.msra.mxu0 0.0
        %1486 = vmatprep.subr.mxu0 0.0
        %1487 = vmatpush1.msra.mxu0 0.0
        %1488 = vmatprep.subr.mxu0 0.0
        %1489 = vmatpush1.msra.mxu0 0.0
        %1490 = vmatprep.subr.mxu0 0.0
        %1491 = vmatpush1.msra.mxu0 0.0
        %1492 = vmatprep.subr.mxu0 0.0
        %1493 = vmatpush1.msra.mxu0 0.0
        %1494 = vmatprep.subr.mxu0 0.0
        %1495 = vmatpush1.msra.mxu0 0.0
        %1496 = vmatprep.subr.mxu0 0.0
        %1497 = vmatpush1.msra.mxu0 0.0
        %1498 = vmatprep.subr.mxu0 0.0
        %1499 = vmatpush1.msra.mxu0 0.0
        %1500 = vmatprep.subr.mxu0 0.0
        %1501 = vmatpush1.msra.mxu0 0.0
        %1502 = vmatprep.subr.mxu0 0.0
        %1503 = vmatpush1.msra.mxu0 0.0
        %1504 = vmatprep.subr.mxu0 0.0
        %1505 = vmatpush1.msra.mxu0 0.0
        %1506 = vmatprep.subr.mxu0 0.0
        %1507 = vmatpush1.msra.mxu0 0.0
        %1508 = vmatprep.subr.mxu0 0.0
        %1509 = vmatpush1.msra.mxu0 0.0
        %1510 = vmatprep.subr.mxu0 0.0
        %1511 = vmatpush1.msra.mxu0 0.0
        %1512 = vmatprep.subr.mxu0 0.0
        %1513 = vmatpush1.msra.mxu0 0.0
        %1514 = vmatprep.subr.mxu0 0.0
        %1515 = vmatpush1.msra.mxu0 0.0
        %1516 = vmatprep.subr.mxu0 0.0
        %1517 = vmatpush1.msra.mxu0 0.0
        %1518 = vmatprep.subr.mxu0 0.0
        %1519 = vmatpush1.msra.mxu0 0.0
        %1520 = vmatprep.subr.mxu0 0.0
        %1521 = vmatpush1.msra.mxu0 0.0
        %1522 = vmatprep.subr.mxu0 0.0
        %1523 = vmatpush1.msra.mxu0 0.0
        %1524 = vmatprep.subr.mxu0 0.0
        %1525 = vmatpush1.msra.mxu0 0.0
        %1526 = vmatprep.subr.mxu0 0.0
        %1527 = vmatpush1.msra.mxu0 0.0
        %1528 = vmatprep.mubr.f32.mxu0 0.0
        %1529 = vmatmul.mubr.f32.gmra.mrb[0].mxu0 %v1447
        %v1530 = vpop.f32.mrb[0].mxu0
        %v1531 = vadd.f32 %v1445, %v1530
        %v1532 = vpop.f32.mrb[0].mxu0
        %1533 = vmatprep.mubr.f32.mxu0 0.0
        %1534 = vmatmul.mubr.f32.gmra.mrb[0].mxu0 %v1450
        %v1535 = vpop.f32.mrb[0].mxu0
        %v1536 = vadd.f32 %v1445, %v1535
        %v1537 = vpop.f32.mrb[0].mxu0
        %1538 = vmatprep.mubr.f32.mxu0 0.0
        %1539 = vmatmul.mubr.f32.gmra.mrb[0].mxu0 %v1453
        %v1540 = vpop.f32.mrb[0].mxu0
        %v1541 = vadd.f32 %v1445, %v1540
        %v1542 = vpop.f32.mrb[0].mxu0
        %1543 = vmatprep.mubr.f32.mxu0 0.0
        %1544 = vmatmul.mubr.f32.gmra.mrb[0].mxu0 %v1456
        %v1545 = vpop.f32.mrb[0].mxu0
        %v1546 = vadd.f32 %v1445, %v1545
        %v1547 = vpop.f32.mrb[0].mxu0
        %1548 = vmatprep.mubr.f32.mxu0 0.0
        %1549 = vmatmul.mubr.f32.gmra.mrb[0].mxu0 %v1459
        %v1550 = vpop.f32.mrb[0].mxu0
        %v1551 = vadd.f32 %v1445, %v1550
        %v1552 = vpop.f32.mrb[0].mxu0
        %1553 = vmatprep.mubr.f32.mxu0 0.0
        %1554 = vmatmul.mubr.f32.gmra.mrb[0].mxu0 %v1462
        %v1555 = vpop.f32.mrb[0].mxu0
        %v1556 = vadd.f32 %v1445, %v1555
        %v1557 = vpop.f32.mrb[0].mxu0
        %1558 = vdwg.mxu0
        %v1559 = vxor.u32 %v1531, 2147483648
        %v1560 = vxor.u32 %v1536, 2147483648
        %v1561 = vxor.u32 %v1541, 2147483648
        %v1562 = vxor.u32 %v1546, 2147483648
        %v1563 = vxor.u32 %v1551, 2147483648
        %v1564 = vxor.u32 %v1556, 2147483648
        %v1565 = vmul.f32 %v1559, 1.442695
        %v1566 = vpow.pop %v1565
        %v1567 = vmul.f32 %v1560, 1.442695
        %v1568 = vpow.pop %v1567
        %v1569 = vmul.f32 %v1561, 1.442695
        %v1570 = vpow.pop %v1569
        %v1571 = vmul.f32 %v1562, 1.442695
        %v1572 = vpow.pop %v1571
        %v1573 = vmul.f32 %v1563, 1.442695
        %v1574 = vpow.pop %v1573
        %v1575 = vmul.f32 %v1564, 1.442695
        %v1576 = vpow.pop %v1575
        %v1577 = vadd.f32 %v1566, 1.0
        %v1578 = vadd.f32 %v1568, 1.0
        %v1579 = vadd.f32 %v1570, 1.0
        %v1580 = vadd.f32 %v1572, 1.0
        %v1581 = vadd.f32 %v1574, 1.0
        %v1582 = vadd.f32 %v1576, 1.0
        %v1583 = vrcp.pop %v1577
        %v1584 = vmul.f32 1.0, %v1583
        %v1585 = vrcp.pop %v1578
        %v1586 = vmul.f32 1.0, %v1585
        %v1587 = vrcp.pop %v1579
        %v1588 = vmul.f32 1.0, %v1587
        %v1589 = vrcp.pop %v1580
        %v1590 = vmul.f32 1.0, %v1589
        %v1591 = vrcp.pop %v1581
        %v1592 = vmul.f32 1.0, %v1591
        %v1593 = vrcp.pop %v1582
        %v1594 = vmul.f32 1.0, %v1593
        %v1595 = vmul.f32 %v1531, %v1584
        %v1596 = vmul.f32 %v1536, %v1586
        %v1597 = vmul.f32 %v1541, %v1588
        %v1598 = vmul.f32 %v1546, %v1590
        %v1599 = vmul.f32 %v1551, %v1592
        %v1600 = vmul.f32 %v1556, %v1594
        %v1601 = vld [vmem:[%s5 + $0xc0] sm:$0x1]
        %v1602 = vlaneseq
        %v1603 = vshrl.u32 %v1602, 7
        %v1604 = vsub.s32 0, %v1603
        %v1605 = vrot.slane %v1601, %v1604
        %v1606 = vmul.f32 %v1595, %v1605
        %v1607 = vmul.f32 %v1596, %v1605
        %v1608 = vmul.f32 %v1597, %v1605
        %v1609 = vmul.f32 %v1598, %v1605
        %v1610 = vmul.f32 %v1599, %v1605
        %v1611 = vmul.f32 %v1600, %v1605
        %v1612 = vsel %vm565, %v1606, 0.0
        %1613 = vadd.xlane.f32.xlu0 %v1612
        %v1614 = vpop.xlane.xlu0 %1613
        %v1615 = vsel %vm565, %v1607, 0.0
        %1616 = vadd.xlane.f32.xlu0 %v1615
        %v1617 = vpop.xlane.xlu0 %1616
        %v1618 = vsel %vm565, %v1608, 0.0
        %1619 = vadd.xlane.f32.xlu0 %v1618
        %v1620 = vpop.xlane.xlu0 %1619
        %v1621 = vsel %vm565, %v1609, 0.0
        %1622 = vadd.xlane.f32.xlu0 %v1621
        %v1623 = vpop.xlane.xlu0 %1622
        %v1624 = vsel %vm565, %v1610, 0.0
        %1625 = vadd.xlane.f32.xlu0 %v1624
        %v1626 = vpop.xlane.xlu0 %1625
        %v1627 = vsel %vm565, %v1611, 0.0
        %1628 = vadd.xlane.f32.xlu0 %v1627
        %v1629 = vpop.xlane.xlu0 %1628
        %v1630 = vtanh.pop %v1614
        %v1631 = vtanh.pop %v1617
        %v1632 = vtanh.pop %v1620
        %v1633 = vtanh.pop %v1623
        %v1634 = vtanh.pop %v1626
        %v1635 = vtanh.pop %v1629
        %v1636 = vmul.f32 %v833, %v1630
        %v1637 = vmul.f32 %v835, %v1631
        %v1638 = vmul.f32 %v837, %v1632
        %v1639 = vmul.f32 %v839, %v1633
        %v1640 = vmul.f32 %v841, %v1634
        %v1641 = vmul.f32 %v843, %v1635
        %v1642 = vsel %vm565, %v1431, %v1636
        %v1643 = vsel %vm565, %v1432, %v1637
        %v1644 = vsel %vm565, %v1433, %v1638
        %v1645 = vsel %vm565, %v1434, %v1639
        %v1646 = vsel %vm565, %v1435, %v1640
        %v1647 = vsel %vm565, %v1436, %v1641
        %1648 = vxpose.xlu0.b32.start [1/16] %v444, 128
        %1649 = vxpose.xlu0.b32.cont [2/16] %v445, 128
        %1650 = vxpose.xlu0.b32.cont [3/16] %v446, 128
        %1651 = vxpose.xlu0.b32.cont [4/16] %v447, 128
        %1652 = vxpose.xlu0.b32.cont [5/16] %v448, 128
        %1653 = vxpose.xlu0.b32.cont [6/16] %v449, 128
        %1654 = vxpose.xlu0.b32.cont [7/16] 0.0, 128
        %1655 = vxpose.xlu0.b32.cont [8/16] 0.0, 128
        %1656 = vxpose.xlu0.b32.cont [9/16] 0.0, 128
        %1657 = vxpose.xlu0.b32.cont [10/16] 0.0, 128
        %1658 = vxpose.xlu0.b32.cont [11/16] 0.0, 128
        %1659 = vxpose.xlu0.b32.cont [12/16] 0.0, 128
        %1660 = vxpose.xlu0.b32.cont [13/16] 0.0, 128
        %1661 = vxpose.xlu0.b32.cont [14/16] 0.0, 128
        %1662 = vxpose.xlu0.b32.cont [15/16] 0.0, 128
        %1663 = vxpose.xlu0.b32.end [16/16] 0.0, 128
        %v1664 = vpop.trf.xlu0
        %v1665 = vpop.trf.xlu0
        %v1666 = vpop.trf.xlu0
        %v1667 = vpop.trf.xlu0
        %v1668 = vpop.trf.xlu0
        %v1669 = vpop.trf.xlu0
        %v1670 = vpop.trf.xlu0
        %v1671 = vpop.trf.xlu0
        %v1672 = vpop.trf.xlu0
        %v1673 = vpop.trf.xlu0
        %v1674 = vpop.trf.xlu0
        %v1675 = vpop.trf.xlu0
        %v1676 = vpop.trf.xlu0
        %v1677 = vpop.trf.xlu0
        %v1678 = vpop.trf.xlu0
        %v1679 = vpop.trf.xlu0
        %vm1680 = vcmask 392192
        %v1682 = vsel %vm1680, %v1664, 0
        %v1685 = vsel %vm1680, %v1665, 0
        %1687 = vmatprep.subr.mxu0 0.0
        %1688 = vmatpush1.msra.mxu0 %v1642
        %1689 = vmatprep.subr.mxu0 0.0
        %1690 = vmatpush1.msra.mxu0 %v1643
        %1691 = vmatprep.subr.mxu0 0.0
        %1692 = vmatpush1.msra.mxu0 %v1644
        %1693 = vmatprep.subr.mxu0 0.0
        %1694 = vmatpush1.msra.mxu0 %v1645
        %1695 = vmatprep.subr.mxu0 0.0
        %1696 = vmatpush1.msra.mxu0 %v1646
        %1697 = vmatprep.subr.mxu0 0.0
        %1698 = vmatpush1.msra.mxu0 %v1647
        %1699 = vmatprep.subr.mxu0 0.0
        %1700 = vmatpush1.msra.mxu0 0.0
        %1701 = vmatprep.subr.mxu0 0.0
        %1702 = vmatpush1.msra.mxu0 0.0
        %1703 = vmatprep.subr.mxu0 0.0
        %1704 = vmatpush1.msra.mxu0 0.0
        %1705 = vmatprep.subr.mxu0 0.0
        %1706 = vmatpush1.msra.mxu0 0.0
        %1707 = vmatprep.subr.mxu0 0.0
        %1708 = vmatpush1.msra.mxu0 0.0
        %1709 = vmatprep.subr.mxu0 0.0
        %1710 = vmatpush1.msra.mxu0 0.0
        %1711 = vmatprep.subr.mxu0 0.0
        %1712 = vmatpush1.msra.mxu0 0.0
        %1713 = vmatprep.subr.mxu0 0.0
        %1714 = vmatpush1.msra.mxu0 0.0
        %1715 = vmatprep.subr.mxu0 0.0
        %1716 = vmatpush1.msra.mxu0 0.0
        %1717 = vmatprep.subr.mxu0 0.0
        %1718 = vmatpush1.msra.mxu0 0.0
        %1719 = vmatprep.subr.mxu0 0.0
        %1720 = vmatpush1.msra.mxu0 0.0
        %1721 = vmatprep.subr.mxu0 0.0
        %1722 = vmatpush1.msra.mxu0 0.0
        %1723 = vmatprep.subr.mxu0 0.0
        %1724 = vmatpush1.msra.mxu0 0.0
        %1725 = vmatprep.subr.mxu0 0.0
        %1726 = vmatpush1.msra.mxu0 0.0
        %1727 = vmatprep.subr.mxu0 0.0
        %1728 = vmatpush1.msra.mxu0 0.0
        %1729 = vmatprep.subr.mxu0 0.0
        %1730 = vmatpush1.msra.mxu0 0.0
        %1731 = vmatprep.subr.mxu0 0.0
        %1732 = vmatpush1.msra.mxu0 0.0
        %1733 = vmatprep.subr.mxu0 0.0
        %1734 = vmatpush1.msra.mxu0 0.0
        %1735 = vmatprep.subr.mxu0 0.0
        %1736 = vmatpush1.msra.mxu0 0.0
        %1737 = vmatprep.subr.mxu0 0.0
        %1738 = vmatpush1.msra.mxu0 0.0
        %1739 = vmatprep.subr.mxu0 0.0
        %1740 = vmatpush1.msra.mxu0 0.0
        %1741 = vmatprep.subr.mxu0 0.0
        %1742 = vmatpush1.msra.mxu0 0.0
        %1743 = vmatprep.subr.mxu0 0.0
        %1744 = vmatpush1.msra.mxu0 0.0
        %1745 = vmatprep.subr.mxu0 0.0
        %1746 = vmatpush1.msra.mxu0 0.0
        %1747 = vmatprep.subr.mxu0 0.0
        %1748 = vmatpush1.msra.mxu0 0.0
        %1749 = vmatprep.subr.mxu0 0.0
        %1750 = vmatpush1.msra.mxu0 0.0
        %1751 = vmatprep.mubr.f32.mxu0 0.0
        %1752 = vmatmul.mubr.f32.gmra.mrb[0].mxu0 %v1682
        %v1753 = vpop.f32.mrb[0].mxu0
        %v1754 = vadd.f32 0.0, %v1753
        %v1755 = vpop.f32.mrb[0].mxu0
        %1756 = vmatprep.mubr.f32.mxu0 0.0
        %1757 = vmatmul.mubr.f32.gmra.mrb[0].mxu0 %v1685
        %v1758 = vpop.f32.mrb[0].mxu0
        %v1759 = vadd.f32 0.0, %v1758
        %v1760 = vpop.f32.mrb[0].mxu0
        %1761 = vdwg.mxu0
        %1763 = vset.pattern.permute.xlu0 0
        %1764 = vperm.xlu0 %1763, %v462
        %v1765 = vpop.permute.xlu0 %1764
        %1768 = vset.pattern.permute.xlu0 0
        %1769 = vperm.xlu0 %1768, %v463
        %v1770 = vpop.permute.xlu0 %1769
        %v1772 = vmul.f32 %v1754, %v1765
        %v1773 = vmul.f32 %v1759, %v1770
        %1776 = vrot.lane.b32.xlu0 %v1772, 96
        %v1777 = vpop.permute.xlu0 %1776
        %1778 = vrot.lane.b32.xlu0 %v1773, 96
        %v1779 = vpop.permute.xlu0 %1778
        %v1782 = vadd.f32 %v555, %v1777
        %v1783 = vadd.f32 %v556, %v1779
        %v1784 = vld [vmem:[%s5 + $0xc8] sm:$0xff]
        %v1785 = vld [vmem:[%s5 + $0xd0] sm:$0xff]
        %v1786 = vld [vmem:[%s5 + $0xd8] sm:$0xff]
        %v1787 = vld [vmem:[%s5 + $0xe0] sm:$0xff]
        %v1788 = vld [vmem:[%s5 + $0xe8] sm:$0xff]
        %v1789 = vld [vmem:[%s5 + $0xf0] sm:$0xff]
        %v1790 = vld [vmem:[%s5 + $0xf8] sm:$0xff]
        %v1791 = vld [vmem:[%s5 + $0x100] sm:$0xff]
        %v1793 = vsel %vm565, %v1754, 0
        %v1796 = vsel %vm565, %v1759, 0
        %1798 = vmatprep.subr.mxu0 0.0
        %1799 = vmatpush1.msra.mxu0 %v1788
        %1800 = vmatprep.subr.mxu0 0.0
        %1801 = vmatpush1.msra.mxu0 %v1789
        %1802 = vmatprep.subr.mxu0 0.0
        %1803 = vmatpush1.msra.mxu0 %v1790
        %1804 = vmatprep.subr.mxu0 0.0
        %1805 = vmatpush1.msra.mxu0 %v1791
        %1806 = vmatprep.subr.mxu0 0.0
        %1807 = vmatpush1.msra.mxu0 0.0
        %1808 = vmatprep.subr.mxu0 0.0
        %1809 = vmatpush1.msra.mxu0 0.0
        %1810 = vmatprep.subr.mxu0 0.0
        %1811 = vmatpush1.msra.mxu0 0.0
        %1812 = vmatprep.subr.mxu0 0.0
        %1813 = vmatpush1.msra.mxu0 0.0
        %1814 = vmatprep.subr.mxu0 0.0
        %1815 = vmatpush1.msra.mxu0 0.0
        %1816 = vmatprep.subr.mxu0 0.0
        %1817 = vmatpush1.msra.mxu0 0.0
        %1818 = vmatprep.subr.mxu0 0.0
        %1819 = vmatpush1.msra.mxu0 0.0
        %1820 = vmatprep.subr.mxu0 0.0
        %1821 = vmatpush1.msra.mxu0 0.0
        %1822 = vmatprep.subr.mxu0 0.0
        %1823 = vmatpush1.msra.mxu0 0.0
        %1824 = vmatprep.subr.mxu0 0.0
        %1825 = vmatpush1.msra.mxu0 0.0
        %1826 = vmatprep.subr.mxu0 0.0
        %1827 = vmatpush1.msra.mxu0 0.0
        %1828 = vmatprep.subr.mxu0 0.0
        %1829 = vmatpush1.msra.mxu0 0.0
        %1830 = vmatprep.subr.mxu0 0.0
        %1831 = vmatpush1.msra.mxu0 0.0
        %1832 = vmatprep.subr.mxu0 0.0
        %1833 = vmatpush1.msra.mxu0 0.0
        %1834 = vmatprep.subr.mxu0 0.0
        %1835 = vmatpush1.msra.mxu0 0.0
        %1836 = vmatprep.subr.mxu0 0.0
        %1837 = vmatpush1.msra.mxu0 0.0
        %1838 = vmatprep.subr.mxu0 0.0
        %1839 = vmatpush1.msra.mxu0 0.0
        %1840 = vmatprep.subr.mxu0 0.0
        %1841 = vmatpush1.msra.mxu0 0.0
        %1842 = vmatprep.subr.mxu0 0.0
        %1843 = vmatpush1.msra.mxu0 0.0
        %1844 = vmatprep.subr.mxu0 0.0
        %1845 = vmatpush1.msra.mxu0 0.0
        %1846 = vmatprep.subr.mxu0 0.0
        %1847 = vmatpush1.msra.mxu0 0.0
        %1848 = vmatprep.subr.mxu0 0.0
        %1849 = vmatpush1.msra.mxu0 0.0
        %1850 = vmatprep.subr.mxu0 0.0
        %1851 = vmatpush1.msra.mxu0 0.0
        %1852 = vmatprep.subr.mxu0 0.0
        %1853 = vmatpush1.msra.mxu0 0.0
        %1854 = vmatprep.subr.mxu0 0.0
        %1855 = vmatpush1.msra.mxu0 0.0
        %1856 = vmatprep.subr.mxu0 0.0
        %1857 = vmatpush1.msra.mxu0 0.0
        %1858 = vmatprep.subr.mxu0 0.0
        %1859 = vmatpush1.msra.mxu0 0.0
        %1860 = vmatprep.subr.mxu0 0.0
        %1861 = vmatpush1.msra.mxu0 0.0
        %1862 = vmatprep.mubr.f32.mxu0 0.0
        %1863 = vmatmul.mubr.f32.gmra.mrb[0].mxu0 %v1793
        %v1864 = vpop.f32.mrb[0].mxu0
        %v1865 = vadd.f32 0.0, %v1864
        %v1866 = vpop.f32.mrb[0].mxu0
        %1867 = vmatprep.mubr.f32.mxu0 0.0
        %1868 = vmatmul.mubr.f32.gmra.mrb[0].mxu0 %v1796
        %v1869 = vpop.f32.mrb[0].mxu0
        %v1870 = vadd.f32 0.0, %v1869
        %v1871 = vpop.f32.mrb[0].mxu0
        %1872 = vdwg.mxu0
        %v1874 = vsel %vm565, %v547, 0
        %v1877 = vsel %vm565, %v552, 0
        %1879 = vmatprep.subr.mxu0 0.0
        %1880 = vmatpush1.msra.mxu0 %v1784
        %1881 = vmatprep.subr.mxu0 0.0
        %1882 = vmatpush1.msra.mxu0 %v1785
        %1883 = vmatprep.subr.mxu0 0.0
        %1884 = vmatpush1.msra.mxu0 %v1786
        %1885 = vmatprep.subr.mxu0 0.0
        %1886 = vmatpush1.msra.mxu0 %v1787
        %1887 = vmatprep.subr.mxu0 0.0
        %1888 = vmatpush1.msra.mxu0 0.0
        %1889 = vmatprep.subr.mxu0 0.0
        %1890 = vmatpush1.msra.mxu0 0.0
        %1891 = vmatprep.subr.mxu0 0.0
        %1892 = vmatpush1.msra.mxu0 0.0
        %1893 = vmatprep.subr.mxu0 0.0
        %1894 = vmatpush1.msra.mxu0 0.0
        %1895 = vmatprep.subr.mxu0 0.0
        %1896 = vmatpush1.msra.mxu0 0.0
        %1897 = vmatprep.subr.mxu0 0.0
        %1898 = vmatpush1.msra.mxu0 0.0
        %1899 = vmatprep.subr.mxu0 0.0
        %1900 = vmatpush1.msra.mxu0 0.0
        %1901 = vmatprep.subr.mxu0 0.0
        %1902 = vmatpush1.msra.mxu0 0.0
        %1903 = vmatprep.subr.mxu0 0.0
        %1904 = vmatpush1.msra.mxu0 0.0
        %1905 = vmatprep.subr.mxu0 0.0
        %1906 = vmatpush1.msra.mxu0 0.0
        %1907 = vmatprep.subr.mxu0 0.0
        %1908 = vmatpush1.msra.mxu0 0.0
        %1909 = vmatprep.subr.mxu0 0.0
        %1910 = vmatpush1.msra.mxu0 0.0
        %1911 = vmatprep.subr.mxu0 0.0
        %1912 = vmatpush1.msra.mxu0 0.0
        %1913 = vmatprep.subr.mxu0 0.0
        %1914 = vmatpush1.msra.mxu0 0.0
        %1915 = vmatprep.subr.mxu0 0.0
        %1916 = vmatpush1.msra.mxu0 0.0
        %1917 = vmatprep.subr.mxu0 0.0
        %1918 = vmatpush1.msra.mxu0 0.0
        %1919 = vmatprep.subr.mxu0 0.0
        %1920 = vmatpush1.msra.mxu0 0.0
        %1921 = vmatprep.subr.mxu0 0.0
        %1922 = vmatpush1.msra.mxu0 0.0
        %1923 = vmatprep.subr.mxu0 0.0
        %1924 = vmatpush1.msra.mxu0 0.0
        %1925 = vmatprep.subr.mxu0 0.0
        %1926 = vmatpush1.msra.mxu0 0.0
        %1927 = vmatprep.subr.mxu0 0.0
        %1928 = vmatpush1.msra.mxu0 0.0
        %1929 = vmatprep.subr.mxu0 0.0
        %1930 = vmatpush1.msra.mxu0 0.0
        %1931 = vmatprep.subr.mxu0 0.0
        %1932 = vmatpush1.msra.mxu0 0.0
        %1933 = vmatprep.subr.mxu0 0.0
        %1934 = vmatpush1.msra.mxu0 0.0
        %1935 = vmatprep.subr.mxu0 0.0
        %1936 = vmatpush1.msra.mxu0 0.0
        %1937 = vmatprep.subr.mxu0 0.0
        %1938 = vmatpush1.msra.mxu0 0.0
        %1939 = vmatprep.subr.mxu0 0.0
        %1940 = vmatpush1.msra.mxu0 0.0
        %1941 = vmatprep.subr.mxu0 0.0
        %1942 = vmatpush1.msra.mxu0 0.0
        %1943 = vmatprep.mubr.f32.mxu0 0.0
        %1944 = vmatmul.mubr.f32.gmra.mrb[0].mxu0 %v1874
        %v1945 = vpop.f32.mrb[0].mxu0
        %v1946 = vadd.f32 %v1865, %v1945
        %v1947 = vpop.f32.mrb[0].mxu0
        %1948 = vmatprep.mubr.f32.mxu0 0.0
        %1949 = vmatmul.mubr.f32.gmra.mrb[0].mxu0 %v1877
        %v1950 = vpop.f32.mrb[0].mxu0
        %v1951 = vadd.f32 %v1870, %v1950
        %v1952 = vpop.f32.mrb[0].mxu0
        %1953 = vdwg.mxu0
        %v1954 = vld [vmem:[%s5 + $0x108] sm:$0x1]
        %v1955 = vlaneseq
        %v1956 = vshrl.u32 %v1955, 7
        %v1957 = vsub.s32 0, %v1956
        %v1958 = vrot.slane %v1954, %v1957
        %v1959 = vadd.f32 %v1946, %v1958
        %v1960 = vadd.f32 %v1951, %v1958
        %v1961 = vxor.u32 %v1959, 2147483648
        %v1962 = vxor.u32 %v1960, 2147483648
        %v1963 = vmul.f32 %v1961, 1.442695
        %v1964 = vpow.pop %v1963
        %v1965 = vmul.f32 %v1962, 1.442695
        %v1966 = vpow.pop %v1965
        %v1967 = vadd.f32 %v1964, 1.0
        %v1968 = vadd.f32 %v1966, 1.0
        %v1969 = vrcp.pop %v1967
        %v1970 = vmul.f32 1.0, %v1969
        %v1971 = vrcp.pop %v1968
        %v1972 = vmul.f32 1.0, %v1971
        %v1973 = vmul.f32 %v1959, %v1970
        %v1974 = vmul.f32 %v1960, %v1972
        %v1975 = vld [vmem:[%s5 + $0x110] sm:$0xff]
        %v1976 = vld [vmem:[%s5 + $0x118] sm:$0xff]
        %v1977 = vld [vmem:[%s5 + $0x120] sm:$0xff]
        %v1978 = vld [vmem:[%s5 + $0x128] sm:$0xff]
        %v1979 = vld [vmem:[%s5 + $0x130] sm:$0x1]
        %v1980 = vlaneseq
        %v1981 = vshrl.u32 %v1980, 7
        %v1982 = vsub.s32 0, %v1981
        %v1983 = vrot.slane %v1979, %v1982
        %v1985 = vsel %vm565, %v1973, 0
        %v1988 = vsel %vm565, %v1974, 0
        %1990 = vmatprep.subr.mxu0 0.0
        %1991 = vmatpush1.msra.mxu0 %v1975
        %1992 = vmatprep.subr.mxu0 0.0
        %1993 = vmatpush1.msra.mxu0 %v1976
        %1994 = vmatprep.subr.mxu0 0.0
        %1995 = vmatpush1.msra.mxu0 %v1977
        %1996 = vmatprep.subr.mxu0 0.0
        %1997 = vmatpush1.msra.mxu0 %v1978
        %1998 = vmatprep.subr.mxu0 0.0
        %1999 = vmatpush1.msra.mxu0 0.0
        %2000 = vmatprep.subr.mxu0 0.0
        %2001 = vmatpush1.msra.mxu0 0.0
        %2002 = vmatprep.subr.mxu0 0.0
        %2003 = vmatpush1.msra.mxu0 0.0
        %2004 = vmatprep.subr.mxu0 0.0
        %2005 = vmatpush1.msra.mxu0 0.0
        %2006 = vmatprep.subr.mxu0 0.0
        %2007 = vmatpush1.msra.mxu0 0.0
        %2008 = vmatprep.subr.mxu0 0.0
        %2009 = vmatpush1.msra.mxu0 0.0
        %2010 = vmatprep.subr.mxu0 0.0
        %2011 = vmatpush1.msra.mxu0 0.0
        %2012 = vmatprep.subr.mxu0 0.0
        %2013 = vmatpush1.msra.mxu0 0.0
        %2014 = vmatprep.subr.mxu0 0.0
        %2015 = vmatpush1.msra.mxu0 0.0
        %2016 = vmatprep.subr.mxu0 0.0
        %2017 = vmatpush1.msra.mxu0 0.0
        %2018 = vmatprep.subr.mxu0 0.0
        %2019 = vmatpush1.msra.mxu0 0.0
        %2020 = vmatprep.subr.mxu0 0.0
        %2021 = vmatpush1.msra.mxu0 0.0
        %2022 = vmatprep.subr.mxu0 0.0
        %2023 = vmatpush1.msra.mxu0 0.0
        %2024 = vmatprep.subr.mxu0 0.0
        %2025 = vmatpush1.msra.mxu0 0.0
        %2026 = vmatprep.subr.mxu0 0.0
        %2027 = vmatpush1.msra.mxu0 0.0
        %2028 = vmatprep.subr.mxu0 0.0
        %2029 = vmatpush1.msra.mxu0 0.0
        %2030 = vmatprep.subr.mxu0 0.0
        %2031 = vmatpush1.msra.mxu0 0.0
        %2032 = vmatprep.subr.mxu0 0.0
        %2033 = vmatpush1.msra.mxu0 0.0
        %2034 = vmatprep.subr.mxu0 0.0
        %2035 = vmatpush1.msra.mxu0 0.0
        %2036 = vmatprep.subr.mxu0 0.0
        %2037 = vmatpush1.msra.mxu0 0.0
        %2038 = vmatprep.subr.mxu0 0.0
        %2039 = vmatpush1.msra.mxu0 0.0
        %2040 = vmatprep.subr.mxu0 0.0
        %2041 = vmatpush1.msra.mxu0 0.0
        %2042 = vmatprep.subr.mxu0 0.0
        %2043 = vmatpush1.msra.mxu0 0.0
        %2044 = vmatprep.subr.mxu0 0.0
        %2045 = vmatpush1.msra.mxu0 0.0
        %2046 = vmatprep.subr.mxu0 0.0
        %2047 = vmatpush1.msra.mxu0 0.0
        %2048 = vmatprep.subr.mxu0 0.0
        %2049 = vmatpush1.msra.mxu0 0.0
        %2050 = vmatprep.subr.mxu0 0.0
        %2051 = vmatpush1.msra.mxu0 0.0
        %2052 = vmatprep.subr.mxu0 0.0
        %2053 = vmatpush1.msra.mxu0 0.0
        %2054 = vmatprep.mubr.f32.mxu0 0.0
        %2055 = vmatmul.mubr.f32.gmra.mrb[0].mxu0 %v1985
        %v2056 = vpop.f32.mrb[0].mxu0
        %v2057 = vadd.f32 %v1983, %v2056
        %v2058 = vpop.f32.mrb[0].mxu0
        %2059 = vmatprep.mubr.f32.mxu0 0.0
        %2060 = vmatmul.mubr.f32.gmra.mrb[0].mxu0 %v1988
        %v2061 = vpop.f32.mrb[0].mxu0
        %v2062 = vadd.f32 %v1983, %v2061
        %v2063 = vpop.f32.mrb[0].mxu0
        %2064 = vdwg.mxu0
        %v2065 = vadd.f32 %v2057, %v547
        %v2066 = vadd.f32 %v2062, %v552
        %v2067 = vxor.u32 %v2065, 2147483648
        %v2068 = vxor.u32 %v2066, 2147483648
        %v2069 = vmul.f32 %v2067, 1.442695
        %v2070 = vpow.pop %v2069
        %v2071 = vmul.f32 %v2068, 1.442695
        %v2072 = vpow.pop %v2071
        %v2073 = vadd.f32 %v2070, 1.0
        %v2074 = vadd.f32 %v2072, 1.0
        %v2075 = vrcp.pop %v2073
        %v2076 = vmul.f32 1.0, %v2075
        %v2077 = vrcp.pop %v2074
        %v2078 = vmul.f32 1.0, %v2077
        %v2079 = vmul.f32 %v2065, %v2076
        %v2080 = vmul.f32 %v2066, %v2078
        %2083 = vrot.lane.b32.xlu0 %v1782, 32
        %v2084 = vpop.permute.xlu0 %2083
        %2085 = vrot.lane.b32.xlu0 %v1783, 32
        %v2086 = vpop.permute.xlu0 %2085
        %v2089 = vsel %vm565, %v2079, %v2084
        %v2090 = vsel %vm565, %v2080, %v2086
        %2091 = vmatprep.subr.mxu0 0.0
        %2092 = vmatpush1.msra.mxu0 %v2089
        %2093 = vmatprep.subr.mxu0 0.0
        %2094 = vmatpush1.msra.mxu0 %v2090
        %2095 = vmatprep.subr.mxu0 0.0
        %2096 = vmatpush1.msra.mxu0 0.0
        %2097 = vmatprep.subr.mxu0 0.0
        %2098 = vmatpush1.msra.mxu0 0.0
        %2099 = vmatprep.subr.mxu0 0.0
        %2100 = vmatpush1.msra.mxu0 0.0
        %2101 = vmatprep.subr.mxu0 0.0
        %2102 = vmatpush1.msra.mxu0 0.0
        %2103 = vmatprep.subr.mxu0 0.0
        %2104 = vmatpush1.msra.mxu0 0.0
        %2105 = vmatprep.subr.mxu0 0.0
        %2106 = vmatpush1.msra.mxu0 0.0
        %2107 = vmatprep.subr.mxu0 0.0
        %2108 = vmatpush1.msra.mxu0 0.0
        %2109 = vmatprep.subr.mxu0 0.0
        %2110 = vmatpush1.msra.mxu0 0.0
        %2111 = vmatprep.subr.mxu0 0.0
        %2112 = vmatpush1.msra.mxu0 0.0
        %2113 = vmatprep.subr.mxu0 0.0
        %2114 = vmatpush1.msra.mxu0 0.0
        %2115 = vmatprep.subr.mxu0 0.0
        %2116 = vmatpush1.msra.mxu0 0.0
        %2117 = vmatprep.subr.mxu0 0.0
        %2118 = vmatpush1.msra.mxu0 0.0
        %2119 = vmatprep.subr.mxu0 0.0
        %2120 = vmatpush1.msra.mxu0 0.0
        %2121 = vmatprep.subr.mxu0 0.0
        %2122 = vmatpush1.msra.mxu0 0.0
        %2123 = vmatprep.subr.mxu0 0.0
        %2124 = vmatpush1.msra.mxu0 0.0
        %2125 = vmatprep.subr.mxu0 0.0
        %2126 = vmatpush1.msra.mxu0 0.0
        %2127 = vmatprep.subr.mxu0 0.0
        %2128 = vmatpush1.msra.mxu0 0.0
        %2129 = vmatprep.subr.mxu0 0.0
        %2130 = vmatpush1.msra.mxu0 0.0
        %2131 = vmatprep.subr.mxu0 0.0
        %2132 = vmatpush1.msra.mxu0 0.0
        %2133 = vmatprep.subr.mxu0 0.0
        %2134 = vmatpush1.msra.mxu0 0.0
        %2135 = vmatprep.subr.mxu0 0.0
        %2136 = vmatpush1.msra.mxu0 0.0
        %2137 = vmatprep.subr.mxu0 0.0
        %2138 = vmatpush1.msra.mxu0 0.0
        %2139 = vmatprep.subr.mxu0 0.0
        %2140 = vmatpush1.msra.mxu0 0.0
        %2141 = vmatprep.subr.mxu0 0.0
        %2142 = vmatpush1.msra.mxu0 0.0
        %2143 = vmatprep.subr.mxu0 0.0
        %2144 = vmatpush1.msra.mxu0 0.0
        %2145 = vmatprep.subr.mxu0 0.0
        %2146 = vmatpush1.msra.mxu0 0.0
        %2147 = vmatprep.subr.mxu0 0.0
        %2148 = vmatpush1.msra.mxu0 0.0
        %2149 = vmatprep.subr.mxu0 0.0
        %2150 = vmatpush1.msra.mxu0 0.0
        %2151 = vmatprep.subr.mxu0 0.0
        %2152 = vmatpush1.msra.mxu0 0.0
        %2153 = vmatprep.subr.mxu0 0.0
        %2154 = vmatpush1.msra.mxu0 0.0
        %2155 = vmatprep.mubr.f32.mxu0 0.0
        %2156 = vmatmul.mubr.f32.gmra.mrb[0].mxu0 %v569
        %v2157 = vpop.f32.mrb[0].mxu0
        %v2158 = vadd.f32 0.0, %v2157
        %v2159 = vpop.f32.mrb[0].mxu0
        %2160 = vmatprep.mubr.f32.mxu0 0.0
        %2161 = vmatmul.mubr.f32.gmra.mrb[0].mxu0 %v572
        %v2162 = vpop.f32.mrb[0].mxu0
        %v2163 = vadd.f32 0.0, %v2162
        %v2164 = vpop.f32.mrb[0].mxu0
        %2165 = vmatprep.mubr.f32.mxu0 0.0
        %2166 = vmatmul.mubr.f32.gmra.mrb[0].mxu0 %v575
        %v2167 = vpop.f32.mrb[0].mxu0
        %v2168 = vadd.f32 0.0, %v2167
        %v2169 = vpop.f32.mrb[0].mxu0
        %2170 = vmatprep.mubr.f32.mxu0 0.0
        %2171 = vmatmul.mubr.f32.gmra.mrb[0].mxu0 %v578
        %v2172 = vpop.f32.mrb[0].mxu0
        %v2173 = vadd.f32 0.0, %v2172
        %v2174 = vpop.f32.mrb[0].mxu0
        %2175 = vmatprep.mubr.f32.mxu0 0.0
        %2176 = vmatmul.mubr.f32.gmra.mrb[0].mxu0 %v581
        %v2177 = vpop.f32.mrb[0].mxu0
        %v2178 = vadd.f32 0.0, %v2177
        %v2179 = vpop.f32.mrb[0].mxu0
        %2180 = vmatprep.mubr.f32.mxu0 0.0
        %2181 = vmatmul.mubr.f32.gmra.mrb[0].mxu0 %v584
        %v2182 = vpop.f32.mrb[0].mxu0
        %v2183 = vadd.f32 0.0, %v2182
        %v2184 = vpop.f32.mrb[0].mxu0
        %2185 = vmatprep.mubr.f32.mxu0 0.0
        %2186 = vmatmul.mubr.f32.gmra.mrb[0].mxu0 %v587
        %v2187 = vpop.f32.mrb[0].mxu0
        %v2188 = vadd.f32 0.0, %v2187
        %v2189 = vpop.f32.mrb[0].mxu0
        %2190 = vmatprep.mubr.f32.mxu0 0.0
        %2191 = vmatmul.mubr.f32.gmra.mrb[0].mxu0 %v590
        %v2192 = vpop.f32.mrb[0].mxu0
        %v2193 = vadd.f32 0.0, %v2192
        %v2194 = vpop.f32.mrb[0].mxu0
        %2195 = vmatprep.mubr.f32.mxu0 0.0
        %2196 = vmatmul.mubr.f32.gmra.mrb[0].mxu0 %v593
        %v2197 = vpop.f32.mrb[0].mxu0
        %v2198 = vadd.f32 0.0, %v2197
        %v2199 = vpop.f32.mrb[0].mxu0
        %2200 = vmatprep.mubr.f32.mxu0 0.0
        %2201 = vmatmul.mubr.f32.gmra.mrb[0].mxu0 %v596
        %v2202 = vpop.f32.mrb[0].mxu0
        %v2203 = vadd.f32 0.0, %v2202
        %v2204 = vpop.f32.mrb[0].mxu0
        %2205 = vmatprep.mubr.f32.mxu0 0.0
        %2206 = vmatmul.mubr.f32.gmra.mrb[0].mxu0 %v599
        %v2207 = vpop.f32.mrb[0].mxu0
        %v2208 = vadd.f32 0.0, %v2207
        %v2209 = vpop.f32.mrb[0].mxu0
        %2210 = vmatprep.mubr.f32.mxu0 0.0
        %2211 = vmatmul.mubr.f32.gmra.mrb[0].mxu0 %v602
        %v2212 = vpop.f32.mrb[0].mxu0
        %v2213 = vadd.f32 0.0, %v2212
        %v2214 = vpop.f32.mrb[0].mxu0
        %2215 = vdwg.mxu0
        %v2216 = vsub.f32 %v2158, %v2188
        %v2217 = vsub.f32 %v2163, %v2193
        %v2218 = vsub.f32 %v2168, %v2198
        %v2219 = vsub.f32 %v2173, %v2203
        %v2220 = vsub.f32 %v2178, %v2208
        %v2221 = vsub.f32 %v2183, %v2213
        %v2222 = vmul.f32 %v2216, %v2216
        %v2223 = vmul.f32 %v2217, %v2217
        %v2224 = vmul.f32 %v2218, %v2218
        %v2225 = vmul.f32 %v2219, %v2219
        %v2226 = vmul.f32 %v2220, %v2220
        %v2227 = vmul.f32 %v2221, %v2221
        %2234 = vrot.lane.b32.xlu0 %v2222, 96
        %v2235 = vpop.permute.xlu0 %2234
        %2236 = vrot.lane.b32.xlu0 %v2223, 96
        %v2237 = vpop.permute.xlu0 %2236
        %2238 = vrot.lane.b32.xlu0 %v2224, 96
        %v2239 = vpop.permute.xlu0 %2238
        %2240 = vrot.lane.b32.xlu0 %v2225, 96
        %v2241 = vpop.permute.xlu0 %2240
        %2242 = vrot.lane.b32.xlu0 %v2226, 96
        %v2243 = vpop.permute.xlu0 %2242
        %2244 = vrot.lane.b32.xlu0 %v2227, 96
        %v2245 = vpop.permute.xlu0 %2244
        %v2252 = vsel %vm765, %v2235, 0.0
        %2253 = vadd.xlane.f32.xlu0 %v2252
        %v2254 = vpop.xlane.xlu0 %2253
        %v2255 = vsel %vm765, %v2237, 0.0
        %2256 = vadd.xlane.f32.xlu0 %v2255
        %v2257 = vpop.xlane.xlu0 %2256
        %v2258 = vsel %vm765, %v2239, 0.0
        %2259 = vadd.xlane.f32.xlu0 %v2258
        %v2260 = vpop.xlane.xlu0 %2259
        %v2261 = vsel %vm765, %v2241, 0.0
        %2262 = vadd.xlane.f32.xlu0 %v2261
        %v2263 = vpop.xlane.xlu0 %2262
        %v2264 = vsel %vm765, %v2243, 0.0
        %2265 = vadd.xlane.f32.xlu0 %v2264
        %v2266 = vpop.xlane.xlu0 %2265
        %v2267 = vsel %vm765, %v2245, 0.0
        %2268 = vadd.xlane.f32.xlu0 %v2267
        %v2269 = vpop.xlane.xlu0 %2268
        %v2270 = vrsqrt.pop %v2254
        %v2271 = vmul.f32 %v2254, %v2270
        %vm2272 = vcmp.eq.f32.partialorder %v2254, inf
        %v2273 = vsel %vm2272, %v2254, %v2271
        %vm2274 = vcmp.eq.f32.partialorder %v2254, 0.0
        %v2275 = vand.u32 %v2254, 2147483648
        %v2276 = vsel %vm2274, %v2275, %v2273
        %v2277 = vrsqrt.pop %v2257
        %v2278 = vmul.f32 %v2257, %v2277
        %vm2279 = vcmp.eq.f32.partialorder %v2257, inf
        %v2280 = vsel %vm2279, %v2257, %v2278
        %vm2281 = vcmp.eq.f32.partialorder %v2257, 0.0
        %v2282 = vand.u32 %v2257, 2147483648
        %v2283 = vsel %vm2281, %v2282, %v2280
        %v2284 = vrsqrt.pop %v2260
        %v2285 = vmul.f32 %v2260, %v2284
        %vm2286 = vcmp.eq.f32.partialorder %v2260, inf
        %v2287 = vsel %vm2286, %v2260, %v2285
        %vm2288 = vcmp.eq.f32.partialorder %v2260, 0.0
        %v2289 = vand.u32 %v2260, 2147483648
        %v2290 = vsel %vm2288, %v2289, %v2287
        %v2291 = vrsqrt.pop %v2263
        %v2292 = vmul.f32 %v2263, %v2291
        %vm2293 = vcmp.eq.f32.partialorder %v2263, inf
        %v2294 = vsel %vm2293, %v2263, %v2292
        %vm2295 = vcmp.eq.f32.partialorder %v2263, 0.0
        %v2296 = vand.u32 %v2263, 2147483648
        %v2297 = vsel %vm2295, %v2296, %v2294
        %v2298 = vrsqrt.pop %v2266
        %v2299 = vmul.f32 %v2266, %v2298
        %vm2300 = vcmp.eq.f32.partialorder %v2266, inf
        %v2301 = vsel %vm2300, %v2266, %v2299
        %vm2302 = vcmp.eq.f32.partialorder %v2266, 0.0
        %v2303 = vand.u32 %v2266, 2147483648
        %v2304 = vsel %vm2302, %v2303, %v2301
        %v2305 = vrsqrt.pop %v2269
        %v2306 = vmul.f32 %v2269, %v2305
        %vm2307 = vcmp.eq.f32.partialorder %v2269, inf
        %v2308 = vsel %vm2307, %v2269, %v2306
        %vm2309 = vcmp.eq.f32.partialorder %v2269, 0.0
        %v2310 = vand.u32 %v2269, 2147483648
        %v2311 = vsel %vm2309, %v2310, %v2308
        %v2312 = vadd.f32 %v2276, 1e-08
        %v2313 = vadd.f32 %v2283, 1e-08
        %v2314 = vadd.f32 %v2290, 1e-08
        %v2315 = vadd.f32 %v2297, 1e-08
        %v2316 = vadd.f32 %v2304, 1e-08
        %v2317 = vadd.f32 %v2311, 1e-08
        %v2318 = vrcp.pop %v2312
        %v2319 = vmul.f32 %v2216, %v2318
        %v2320 = vrcp.pop %v2313
        %v2321 = vmul.f32 %v2217, %v2320
        %v2322 = vrcp.pop %v2314
        %v2323 = vmul.f32 %v2218, %v2322
        %v2324 = vrcp.pop %v2315
        %v2325 = vmul.f32 %v2219, %v2324
        %v2326 = vrcp.pop %v2316
        %v2327 = vmul.f32 %v2220, %v2326
        %v2328 = vrcp.pop %v2317
        %v2329 = vmul.f32 %v2221, %v2328
        %v2330 = vld [vmem:[%s5 + $0x138] sm:$0xff]
        %v2331 = vld [vmem:[%s5 + $0x140] sm:$0xff]
        %v2332 = vld [vmem:[%s5 + $0x148] sm:$0xff]
        %v2333 = vld [vmem:[%s5 + $0x150] sm:$0xff]
        %v2334 = vld [vmem:[%s5 + $0x158] sm:$0xff]
        %v2335 = vld [vmem:[%s5 + $0x160] sm:$0xff]
        %v2336 = vld [vmem:[%s5 + $0x168] sm:$0xff]
        %v2337 = vld [vmem:[%s5 + $0x170] sm:$0xff]
        %v2339 = vsel %vm565, %v2188, 0
        %v2342 = vsel %vm565, %v2193, 0
        %v2345 = vsel %vm565, %v2198, 0
        %v2348 = vsel %vm565, %v2203, 0
        %v2351 = vsel %vm565, %v2208, 0
        %v2354 = vsel %vm565, %v2213, 0
        %2356 = vmatprep.subr.mxu0 0.0
        %2357 = vmatpush1.msra.mxu0 %v2334
        %2358 = vmatprep.subr.mxu0 0.0
        %2359 = vmatpush1.msra.mxu0 %v2335
        %2360 = vmatprep.subr.mxu0 0.0
        %2361 = vmatpush1.msra.mxu0 %v2336
        %2362 = vmatprep.subr.mxu0 0.0
        %2363 = vmatpush1.msra.mxu0 %v2337
        %2364 = vmatprep.subr.mxu0 0.0
        %2365 = vmatpush1.msra.mxu0 0.0
        %2366 = vmatprep.subr.mxu0 0.0
        %2367 = vmatpush1.msra.mxu0 0.0
        %2368 = vmatprep.subr.mxu0 0.0
        %2369 = vmatpush1.msra.mxu0 0.0
        %2370 = vmatprep.subr.mxu0 0.0
        %2371 = vmatpush1.msra.mxu0 0.0
        %2372 = vmatprep.subr.mxu0 0.0
        %2373 = vmatpush1.msra.mxu0 0.0
        %2374 = vmatprep.subr.mxu0 0.0
        %2375 = vmatpush1.msra.mxu0 0.0
        %2376 = vmatprep.subr.mxu0 0.0
        %2377 = vmatpush1.msra.mxu0 0.0
        %2378 = vmatprep.subr.mxu0 0.0
        %2379 = vmatpush1.msra.mxu0 0.0
        %2380 = vmatprep.subr.mxu0 0.0
        %2381 = vmatpush1.msra.mxu0 0.0
        %2382 = vmatprep.subr.mxu0 0.0
        %2383 = vmatpush1.msra.mxu0 0.0
        %2384 = vmatprep.subr.mxu0 0.0
        %2385 = vmatpush1.msra.mxu0 0.0
        %2386 = vmatprep.subr.mxu0 0.0
        %2387 = vmatpush1.msra.mxu0 0.0
        %2388 = vmatprep.subr.mxu0 0.0
        %2389 = vmatpush1.msra.mxu0 0.0
        %2390 = vmatprep.subr.mxu0 0.0
        %2391 = vmatpush1.msra.mxu0 0.0
        %2392 = vmatprep.subr.mxu0 0.0
        %2393 = vmatpush1.msra.mxu0 0.0
        %2394 = vmatprep.subr.mxu0 0.0
        %2395 = vmatpush1.msra.mxu0 0.0
        %2396 = vmatprep.subr.mxu0 0.0
        %2397 = vmatpush1.msra.mxu0 0.0
        %2398 = vmatprep.subr.mxu0 0.0
        %2399 = vmatpush1.msra.mxu0 0.0
        %2400 = vmatprep.subr.mxu0 0.0
        %2401 = vmatpush1.msra.mxu0 0.0
        %2402 = vmatprep.subr.mxu0 0.0
        %2403 = vmatpush1.msra.mxu0 0.0
        %2404 = vmatprep.subr.mxu0 0.0
        %2405 = vmatpush1.msra.mxu0 0.0
        %2406 = vmatprep.subr.mxu0 0.0
        %2407 = vmatpush1.msra.mxu0 0.0
        %2408 = vmatprep.subr.mxu0 0.0
        %2409 = vmatpush1.msra.mxu0 0.0
        %2410 = vmatprep.subr.mxu0 0.0
        %2411 = vmatpush1.msra.mxu0 0.0
        %2412 = vmatprep.subr.mxu0 0.0
        %2413 = vmatpush1.msra.mxu0 0.0
        %2414 = vmatprep.subr.mxu0 0.0
        %2415 = vmatpush1.msra.mxu0 0.0
        %2416 = vmatprep.subr.mxu0 0.0
        %2417 = vmatpush1.msra.mxu0 0.0
        %2418 = vmatprep.subr.mxu0 0.0
        %2419 = vmatpush1.msra.mxu0 0.0
        %2420 = vmatprep.mubr.f32.mxu0 0.0
        %2421 = vmatmul.mubr.f32.gmra.mrb[0].mxu0 %v2339
        %v2422 = vpop.f32.mrb[0].mxu0
        %v2423 = vadd.f32 0.0, %v2422
        %v2424 = vpop.f32.mrb[0].mxu0
        %2425 = vmatprep.mubr.f32.mxu0 0.0
        %2426 = vmatmul.mubr.f32.gmra.mrb[0].mxu0 %v2342
        %v2427 = vpop.f32.mrb[0].mxu0
        %v2428 = vadd.f32 0.0, %v2427
        %v2429 = vpop.f32.mrb[0].mxu0
        %2430 = vmatprep.mubr.f32.mxu0 0.0
        %2431 = vmatmul.mubr.f32.gmra.mrb[0].mxu0 %v2345
        %v2432 = vpop.f32.mrb[0].mxu0
        %v2433 = vadd.f32 0.0, %v2432
        %v2434 = vpop.f32.mrb[0].mxu0
        %2435 = vmatprep.mubr.f32.mxu0 0.0
        %2436 = vmatmul.mubr.f32.gmra.mrb[0].mxu0 %v2348
        %v2437 = vpop.f32.mrb[0].mxu0
        %v2438 = vadd.f32 0.0, %v2437
        %v2439 = vpop.f32.mrb[0].mxu0
        %2440 = vmatprep.mubr.f32.mxu0 0.0
        %2441 = vmatmul.mubr.f32.gmra.mrb[0].mxu0 %v2351
        %v2442 = vpop.f32.mrb[0].mxu0
        %v2443 = vadd.f32 0.0, %v2442
        %v2444 = vpop.f32.mrb[0].mxu0
        %2445 = vmatprep.mubr.f32.mxu0 0.0
        %2446 = vmatmul.mubr.f32.gmra.mrb[0].mxu0 %v2354
        %v2447 = vpop.f32.mrb[0].mxu0
        %v2448 = vadd.f32 0.0, %v2447
        %v2449 = vpop.f32.mrb[0].mxu0
        %2450 = vdwg.mxu0
        %v2452 = vsel %vm565, %v2158, 0
        %v2455 = vsel %vm565, %v2163, 0
        %v2458 = vsel %vm565, %v2168, 0
        %v2461 = vsel %vm565, %v2173, 0
        %v2464 = vsel %vm565, %v2178, 0
        %v2467 = vsel %vm565, %v2183, 0
        %2469 = vmatprep.subr.mxu0 0.0
        %2470 = vmatpush1.msra.mxu0 %v2330
        %2471 = vmatprep.subr.mxu0 0.0
        %2472 = vmatpush1.msra.mxu0 %v2331
        %2473 = vmatprep.subr.mxu0 0.0
        %2474 = vmatpush1.msra.mxu0 %v2332
        %2475 = vmatprep.subr.mxu0 0.0
        %2476 = vmatpush1.msra.mxu0 %v2333
        %2477 = vmatprep.subr.mxu0 0.0
        %2478 = vmatpush1.msra.mxu0 0.0
        %2479 = vmatprep.subr.mxu0 0.0
        %2480 = vmatpush1.msra.mxu0 0.0
        %2481 = vmatprep.subr.mxu0 0.0
        %2482 = vmatpush1.msra.mxu0 0.0
        %2483 = vmatprep.subr.mxu0 0.0
        %2484 = vmatpush1.msra.mxu0 0.0
        %2485 = vmatprep.subr.mxu0 0.0
        %2486 = vmatpush1.msra.mxu0 0.0
        %2487 = vmatprep.subr.mxu0 0.0
        %2488 = vmatpush1.msra.mxu0 0.0
        %2489 = vmatprep.subr.mxu0 0.0
        %2490 = vmatpush1.msra.mxu0 0.0
        %2491 = vmatprep.subr.mxu0 0.0
        %2492 = vmatpush1.msra.mxu0 0.0
        %2493 = vmatprep.subr.mxu0 0.0
        %2494 = vmatpush1.msra.mxu0 0.0
        %2495 = vmatprep.subr.mxu0 0.0
        %2496 = vmatpush1.msra.mxu0 0.0
        %2497 = vmatprep.subr.mxu0 0.0
        %2498 = vmatpush1.msra.mxu0 0.0
        %2499 = vmatprep.subr.mxu0 0.0
        %2500 = vmatpush1.msra.mxu0 0.0
        %2501 = vmatprep.subr.mxu0 0.0
        %2502 = vmatpush1.msra.mxu0 0.0
        %2503 = vmatprep.subr.mxu0 0.0
        %2504 = vmatpush1.msra.mxu0 0.0
        %2505 = vmatprep.subr.mxu0 0.0
        %2506 = vmatpush1.msra.mxu0 0.0
        %2507 = vmatprep.subr.mxu0 0.0
        %2508 = vmatpush1.msra.mxu0 0.0
        %2509 = vmatprep.subr.mxu0 0.0
        %2510 = vmatpush1.msra.mxu0 0.0
        %2511 = vmatprep.subr.mxu0 0.0
        %2512 = vmatpush1.msra.mxu0 0.0
        %2513 = vmatprep.subr.mxu0 0.0
        %2514 = vmatpush1.msra.mxu0 0.0
        %2515 = vmatprep.subr.mxu0 0.0
        %2516 = vmatpush1.msra.mxu0 0.0
        %2517 = vmatprep.subr.mxu0 0.0
        %2518 = vmatpush1.msra.mxu0 0.0
        %2519 = vmatprep.subr.mxu0 0.0
        %2520 = vmatpush1.msra.mxu0 0.0
        %2521 = vmatprep.subr.mxu0 0.0
        %2522 = vmatpush1.msra.mxu0 0.0
        %2523 = vmatprep.subr.mxu0 0.0
        %2524 = vmatpush1.msra.mxu0 0.0
        %2525 = vmatprep.subr.mxu0 0.0
        %2526 = vmatpush1.msra.mxu0 0.0
        %2527 = vmatprep.subr.mxu0 0.0
        %2528 = vmatpush1.msra.mxu0 0.0
        %2529 = vmatprep.subr.mxu0 0.0
        %2530 = vmatpush1.msra.mxu0 0.0
        %2531 = vmatprep.subr.mxu0 0.0
        %2532 = vmatpush1.msra.mxu0 0.0
        %2533 = vmatprep.mubr.f32.mxu0 0.0
        %2534 = vmatmul.mubr.f32.gmra.mrb[0].mxu0 %v2452
        %v2535 = vpop.f32.mrb[0].mxu0
        %v2536 = vadd.f32 %v2423, %v2535
        %v2537 = vpop.f32.mrb[0].mxu0
        %2538 = vmatprep.mubr.f32.mxu0 0.0
        %2539 = vmatmul.mubr.f32.gmra.mrb[0].mxu0 %v2455
        %v2540 = vpop.f32.mrb[0].mxu0
        %v2541 = vadd.f32 %v2428, %v2540
        %v2542 = vpop.f32.mrb[0].mxu0
        %2543 = vmatprep.mubr.f32.mxu0 0.0
        %2544 = vmatmul.mubr.f32.gmra.mrb[0].mxu0 %v2458
        %v2545 = vpop.f32.mrb[0].mxu0
        %v2546 = vadd.f32 %v2433, %v2545
        %v2547 = vpop.f32.mrb[0].mxu0
        %2548 = vmatprep.mubr.f32.mxu0 0.0
        %2549 = vmatmul.mubr.f32.gmra.mrb[0].mxu0 %v2461
        %v2550 = vpop.f32.mrb[0].mxu0
        %v2551 = vadd.f32 %v2438, %v2550
        %v2552 = vpop.f32.mrb[0].mxu0
        %2553 = vmatprep.mubr.f32.mxu0 0.0
        %2554 = vmatmul.mubr.f32.gmra.mrb[0].mxu0 %v2464
        %v2555 = vpop.f32.mrb[0].mxu0
        %v2556 = vadd.f32 %v2443, %v2555
        %v2557 = vpop.f32.mrb[0].mxu0
        %2558 = vmatprep.mubr.f32.mxu0 0.0
        %2559 = vmatmul.mubr.f32.gmra.mrb[0].mxu0 %v2467
        %v2560 = vpop.f32.mrb[0].mxu0
        %v2561 = vadd.f32 %v2448, %v2560
        %v2562 = vpop.f32.mrb[0].mxu0
        %2563 = vdwg.mxu0
        %v2564 = vld [vmem:[%s5 + $0x180] sm:$0xf]
        %v2566 = vsel %vm1098, %v2564, 0
        %2568 = vmatprep.subr.mxu0 0.0
        %2569 = vmatpush1.msra.mxu0 %v2566
        %2570 = vmatprep.subr.mxu0 0.0
        %2571 = vmatpush1.msra.mxu0 0.0
        %2572 = vmatprep.subr.mxu0 0.0
        %2573 = vmatpush1.msra.mxu0 0.0
        %2574 = vmatprep.subr.mxu0 0.0
        %2575 = vmatpush1.msra.mxu0 0.0
        %2576 = vmatprep.subr.mxu0 0.0
        %2577 = vmatpush1.msra.mxu0 0.0
        %2578 = vmatprep.subr.mxu0 0.0
        %2579 = vmatpush1.msra.mxu0 0.0
        %2580 = vmatprep.subr.mxu0 0.0
        %2581 = vmatpush1.msra.mxu0 0.0
        %2582 = vmatprep.subr.mxu0 0.0
        %2583 = vmatpush1.msra.mxu0 0.0
        %2584 = vmatprep.subr.mxu0 0.0
        %2585 = vmatpush1.msra.mxu0 0.0
        %2586 = vmatprep.subr.mxu0 0.0
        %2587 = vmatpush1.msra.mxu0 0.0
        %2588 = vmatprep.subr.mxu0 0.0
        %2589 = vmatpush1.msra.mxu0 0.0
        %2590 = vmatprep.subr.mxu0 0.0
        %2591 = vmatpush1.msra.mxu0 0.0
        %2592 = vmatprep.subr.mxu0 0.0
        %2593 = vmatpush1.msra.mxu0 0.0
        %2594 = vmatprep.subr.mxu0 0.0
        %2595 = vmatpush1.msra.mxu0 0.0
        %2596 = vmatprep.subr.mxu0 0.0
        %2597 = vmatpush1.msra.mxu0 0.0
        %2598 = vmatprep.subr.mxu0 0.0
        %2599 = vmatpush1.msra.mxu0 0.0
        %2600 = vmatprep.subr.mxu0 0.0
        %2601 = vmatpush1.msra.mxu0 0.0
        %2602 = vmatprep.subr.mxu0 0.0
        %2603 = vmatpush1.msra.mxu0 0.0
        %2604 = vmatprep.subr.mxu0 0.0
        %2605 = vmatpush1.msra.mxu0 0.0
        %2606 = vmatprep.subr.mxu0 0.0
        %2607 = vmatpush1.msra.mxu0 0.0
        %2608 = vmatprep.subr.mxu0 0.0
        %2609 = vmatpush1.msra.mxu0 0.0
        %2610 = vmatprep.subr.mxu0 0.0
        %2611 = vmatpush1.msra.mxu0 0.0
        %2612 = vmatprep.subr.mxu0 0.0
        %2613 = vmatpush1.msra.mxu0 0.0
        %2614 = vmatprep.subr.mxu0 0.0
        %2615 = vmatpush1.msra.mxu0 0.0
        %2616 = vmatprep.subr.mxu0 0.0
        %2617 = vmatpush1.msra.mxu0 0.0
        %2618 = vmatprep.subr.mxu0 0.0
        %2619 = vmatpush1.msra.mxu0 0.0
        %2620 = vmatprep.subr.mxu0 0.0
        %2621 = vmatpush1.msra.mxu0 0.0
        %2622 = vmatprep.subr.mxu0 0.0
        %2623 = vmatpush1.msra.mxu0 0.0
        %2624 = vmatprep.subr.mxu0 0.0
        %2625 = vmatpush1.msra.mxu0 0.0
        %2626 = vmatprep.subr.mxu0 0.0
        %2627 = vmatpush1.msra.mxu0 0.0
        %2628 = vmatprep.subr.mxu0 0.0
        %2629 = vmatpush1.msra.mxu0 0.0
        %2630 = vmatprep.subr.mxu0 0.0
        %2631 = vmatpush1.msra.mxu0 0.0
        %2632 = vmatprep.mubr.f32.mxu0 0.0
        %2633 = vmatmul.mubr.f32.gmra.mrb[0].mxu0 %v1081
        %v2634 = vpop.f32.mrb[0].mxu0
        %v2635 = vadd.f32 0.0, %v2634
        %v2636 = vpop.f32.mrb[0].mxu0
        %2637 = vmatprep.mubr.f32.mxu0 0.0
        %2638 = vmatmul.mubr.f32.gmra.mrb[0].mxu0 %v1084
        %v2639 = vpop.f32.mrb[0].mxu0
        %v2640 = vadd.f32 0.0, %v2639
        %v2641 = vpop.f32.mrb[0].mxu0
        %2642 = vmatprep.mubr.f32.mxu0 0.0
        %2643 = vmatmul.mubr.f32.gmra.mrb[0].mxu0 %v1087
        %v2644 = vpop.f32.mrb[0].mxu0
        %v2645 = vadd.f32 0.0, %v2644
        %v2646 = vpop.f32.mrb[0].mxu0
        %2647 = vmatprep.mubr.f32.mxu0 0.0
        %2648 = vmatmul.mubr.f32.gmra.mrb[0].mxu0 %v1090
        %v2649 = vpop.f32.mrb[0].mxu0
        %v2650 = vadd.f32 0.0, %v2649
        %v2651 = vpop.f32.mrb[0].mxu0
        %2652 = vmatprep.mubr.f32.mxu0 0.0
        %2653 = vmatmul.mubr.f32.gmra.mrb[0].mxu0 %v1093
        %v2654 = vpop.f32.mrb[0].mxu0
        %v2655 = vadd.f32 0.0, %v2654
        %v2656 = vpop.f32.mrb[0].mxu0
        %2657 = vmatprep.mubr.f32.mxu0 0.0
        %2658 = vmatmul.mubr.f32.gmra.mrb[0].mxu0 %v1096
        %v2659 = vpop.f32.mrb[0].mxu0
        %v2660 = vadd.f32 0.0, %v2659
        %v2661 = vpop.f32.mrb[0].mxu0
        %2662 = vdwg.mxu0
        %v2663 = vadd.f32 %v2536, %v2635
        %v2664 = vadd.f32 %v2541, %v2640
        %v2665 = vadd.f32 %v2546, %v2645
        %v2666 = vadd.f32 %v2551, %v2650
        %v2667 = vadd.f32 %v2556, %v2655
        %v2668 = vadd.f32 %v2561, %v2660
        %v2669 = vld [vmem:[%s5 + $0x178] sm:$0x1]
        %v2670 = vlaneseq
        %v2671 = vshrl.u32 %v2670, 7
        %v2672 = vsub.s32 0, %v2671
        %v2673 = vrot.slane %v2669, %v2672
        %v2674 = vmul.f32 %v2254, %v2673
        %v2675 = vmul.f32 %v2257, %v2673
        %v2676 = vmul.f32 %v2260, %v2673
        %v2677 = vmul.f32 %v2263, %v2673
        %v2678 = vmul.f32 %v2266, %v2673
        %v2679 = vmul.f32 %v2269, %v2673
        %v2680 = vadd.f32 %v2663, %v2674
        %v2681 = vadd.f32 %v2664, %v2675
        %v2682 = vadd.f32 %v2665, %v2676
        %v2683 = vadd.f32 %v2666, %v2677
        %v2684 = vadd.f32 %v2667, %v2678
        %v2685 = vadd.f32 %v2668, %v2679
        %v2686 = vld [vmem:[%s5 + $0x188] sm:$0x1]
        %v2687 = vlaneseq
        %v2688 = vshrl.u32 %v2687, 7
        %v2689 = vsub.s32 0, %v2688
        %v2690 = vrot.slane %v2686, %v2689
        %v2691 = vadd.f32 %v2680, %v2690
        %v2692 = vadd.f32 %v2681, %v2690
        %v2693 = vadd.f32 %v2682, %v2690
        %v2694 = vadd.f32 %v2683, %v2690
        %v2695 = vadd.f32 %v2684, %v2690
        %v2696 = vadd.f32 %v2685, %v2690
        %v2697 = vxor.u32 %v2691, 2147483648
        %v2698 = vxor.u32 %v2692, 2147483648
        %v2699 = vxor.u32 %v2693, 2147483648
        %v2700 = vxor.u32 %v2694, 2147483648
        %v2701 = vxor.u32 %v2695, 2147483648
        %v2702 = vxor.u32 %v2696, 2147483648
        %v2703 = vmul.f32 %v2697, 1.442695
        %v2704 = vpow.pop %v2703
        %v2705 = vmul.f32 %v2698, 1.442695
        %v2706 = vpow.pop %v2705
        %v2707 = vmul.f32 %v2699, 1.442695
        %v2708 = vpow.pop %v2707
        %v2709 = vmul.f32 %v2700, 1.442695
        %v2710 = vpow.pop %v2709
        %v2711 = vmul.f32 %v2701, 1.442695
        %v2712 = vpow.pop %v2711
        %v2713 = vmul.f32 %v2702, 1.442695
        %v2714 = vpow.pop %v2713
        %v2715 = vadd.f32 %v2704, 1.0
        %v2716 = vadd.f32 %v2706, 1.0
        %v2717 = vadd.f32 %v2708, 1.0
        %v2718 = vadd.f32 %v2710, 1.0
        %v2719 = vadd.f32 %v2712, 1.0
        %v2720 = vadd.f32 %v2714, 1.0
        %v2721 = vrcp.pop %v2715
        %v2722 = vmul.f32 1.0, %v2721
        %v2723 = vrcp.pop %v2716
        %v2724 = vmul.f32 1.0, %v2723
        %v2725 = vrcp.pop %v2717
        %v2726 = vmul.f32 1.0, %v2725
        %v2727 = vrcp.pop %v2718
        %v2728 = vmul.f32 1.0, %v2727
        %v2729 = vrcp.pop %v2719
        %v2730 = vmul.f32 1.0, %v2729
        %v2731 = vrcp.pop %v2720
        %v2732 = vmul.f32 1.0, %v2731
        %v2733 = vmul.f32 %v2691, %v2722
        %v2734 = vmul.f32 %v2692, %v2724
        %v2735 = vmul.f32 %v2693, %v2726
        %v2736 = vmul.f32 %v2694, %v2728
        %v2737 = vmul.f32 %v2695, %v2730
        %v2738 = vmul.f32 %v2696, %v2732
        %v2739 = vld [vmem:[%s5 + $0x190] sm:$0xff]
        %v2740 = vld [vmem:[%s5 + $0x198] sm:$0xff]
        %v2741 = vld [vmem:[%s5 + $0x1a0] sm:$0xff]
        %v2742 = vld [vmem:[%s5 + $0x1a8] sm:$0xff]
        %v2743 = vld [vmem:[%s5 + $0x1b0] sm:$0x1]
        %v2744 = vlaneseq
        %v2745 = vshrl.u32 %v2744, 7
        %v2746 = vsub.s32 0, %v2745
        %v2747 = vrot.slane %v2743, %v2746
        %v2749 = vsel %vm565, %v2733, 0
        %v2752 = vsel %vm565, %v2734, 0
        %v2755 = vsel %vm565, %v2735, 0
        %v2758 = vsel %vm565, %v2736, 0
        %v2761 = vsel %vm565, %v2737, 0
        %v2764 = vsel %vm565, %v2738, 0
        %2766 = vmatprep.subr.mxu0 0.0
        %2767 = vmatpush1.msra.mxu0 %v2739
        %2768 = vmatprep.subr.mxu0 0.0
        %2769 = vmatpush1.msra.mxu0 %v2740
        %2770 = vmatprep.subr.mxu0 0.0
        %2771 = vmatpush1.msra.mxu0 %v2741
        %2772 = vmatprep.subr.mxu0 0.0
        %2773 = vmatpush1.msra.mxu0 %v2742
        %2774 = vmatprep.subr.mxu0 0.0
        %2775 = vmatpush1.msra.mxu0 0.0
        %2776 = vmatprep.subr.mxu0 0.0
        %2777 = vmatpush1.msra.mxu0 0.0
        %2778 = vmatprep.subr.mxu0 0.0
        %2779 = vmatpush1.msra.mxu0 0.0
        %2780 = vmatprep.subr.mxu0 0.0
        %2781 = vmatpush1.msra.mxu0 0.0
        %2782 = vmatprep.subr.mxu0 0.0
        %2783 = vmatpush1.msra.mxu0 0.0
        %2784 = vmatprep.subr.mxu0 0.0
        %2785 = vmatpush1.msra.mxu0 0.0
        %2786 = vmatprep.subr.mxu0 0.0
        %2787 = vmatpush1.msra.mxu0 0.0
        %2788 = vmatprep.subr.mxu0 0.0
        %2789 = vmatpush1.msra.mxu0 0.0
        %2790 = vmatprep.subr.mxu0 0.0
        %2791 = vmatpush1.msra.mxu0 0.0
        %2792 = vmatprep.subr.mxu0 0.0
        %2793 = vmatpush1.msra.mxu0 0.0
        %2794 = vmatprep.subr.mxu0 0.0
        %2795 = vmatpush1.msra.mxu0 0.0
        %2796 = vmatprep.subr.mxu0 0.0
        %2797 = vmatpush1.msra.mxu0 0.0
        %2798 = vmatprep.subr.mxu0 0.0
        %2799 = vmatpush1.msra.mxu0 0.0
        %2800 = vmatprep.subr.mxu0 0.0
        %2801 = vmatpush1.msra.mxu0 0.0
        %2802 = vmatprep.subr.mxu0 0.0
        %2803 = vmatpush1.msra.mxu0 0.0
        %2804 = vmatprep.subr.mxu0 0.0
        %2805 = vmatpush1.msra.mxu0 0.0
        %2806 = vmatprep.subr.mxu0 0.0
        %2807 = vmatpush1.msra.mxu0 0.0
        %2808 = vmatprep.subr.mxu0 0.0
        %2809 = vmatpush1.msra.mxu0 0.0
        %2810 = vmatprep.subr.mxu0 0.0
        %2811 = vmatpush1.msra.mxu0 0.0
        %2812 = vmatprep.subr.mxu0 0.0
        %2813 = vmatpush1.msra.mxu0 0.0
        %2814 = vmatprep.subr.mxu0 0.0
        %2815 = vmatpush1.msra.mxu0 0.0
        %2816 = vmatprep.subr.mxu0 0.0
        %2817 = vmatpush1.msra.mxu0 0.0
        %2818 = vmatprep.subr.mxu0 0.0
        %2819 = vmatpush1.msra.mxu0 0.0
        %2820 = vmatprep.subr.mxu0 0.0
        %2821 = vmatpush1.msra.mxu0 0.0
        %2822 = vmatprep.subr.mxu0 0.0
        %2823 = vmatpush1.msra.mxu0 0.0
        %2824 = vmatprep.subr.mxu0 0.0
        %2825 = vmatpush1.msra.mxu0 0.0
        %2826 = vmatprep.subr.mxu0 0.0
        %2827 = vmatpush1.msra.mxu0 0.0
        %2828 = vmatprep.subr.mxu0 0.0
        %2829 = vmatpush1.msra.mxu0 0.0
        %2830 = vmatprep.mubr.f32.mxu0 0.0
        %2831 = vmatmul.mubr.f32.gmra.mrb[0].mxu0 %v2749
        %v2832 = vpop.f32.mrb[0].mxu0
        %v2833 = vadd.f32 %v2747, %v2832
        %v2834 = vpop.f32.mrb[0].mxu0
        %2835 = vmatprep.mubr.f32.mxu0 0.0
        %2836 = vmatmul.mubr.f32.gmra.mrb[0].mxu0 %v2752
        %v2837 = vpop.f32.mrb[0].mxu0
        %v2838 = vadd.f32 %v2747, %v2837
        %v2839 = vpop.f32.mrb[0].mxu0
        %2840 = vmatprep.mubr.f32.mxu0 0.0
        %2841 = vmatmul.mubr.f32.gmra.mrb[0].mxu0 %v2755
        %v2842 = vpop.f32.mrb[0].mxu0
        %v2843 = vadd.f32 %v2747, %v2842
        %v2844 = vpop.f32.mrb[0].mxu0
        %2845 = vmatprep.mubr.f32.mxu0 0.0
        %2846 = vmatmul.mubr.f32.gmra.mrb[0].mxu0 %v2758
        %v2847 = vpop.f32.mrb[0].mxu0
        %v2848 = vadd.f32 %v2747, %v2847
        %v2849 = vpop.f32.mrb[0].mxu0
        %2850 = vmatprep.mubr.f32.mxu0 0.0
        %2851 = vmatmul.mubr.f32.gmra.mrb[0].mxu0 %v2761
        %v2852 = vpop.f32.mrb[0].mxu0
        %v2853 = vadd.f32 %v2747, %v2852
        %v2854 = vpop.f32.mrb[0].mxu0
        %2855 = vmatprep.mubr.f32.mxu0 0.0
        %2856 = vmatmul.mubr.f32.gmra.mrb[0].mxu0 %v2764
        %v2857 = vpop.f32.mrb[0].mxu0
        %v2858 = vadd.f32 %v2747, %v2857
        %v2859 = vpop.f32.mrb[0].mxu0
        %2860 = vdwg.mxu0
        %v2861 = vxor.u32 %v2833, 2147483648
        %v2862 = vxor.u32 %v2838, 2147483648
        %v2863 = vxor.u32 %v2843, 2147483648
        %v2864 = vxor.u32 %v2848, 2147483648
        %v2865 = vxor.u32 %v2853, 2147483648
        %v2866 = vxor.u32 %v2858, 2147483648
        %v2867 = vmul.f32 %v2861, 1.442695
        %v2868 = vpow.pop %v2867
        %v2869 = vmul.f32 %v2862, 1.442695
        %v2870 = vpow.pop %v2869
        %v2871 = vmul.f32 %v2863, 1.442695
        %v2872 = vpow.pop %v2871
        %v2873 = vmul.f32 %v2864, 1.442695
        %v2874 = vpow.pop %v2873
        %v2875 = vmul.f32 %v2865, 1.442695
        %v2876 = vpow.pop %v2875
        %v2877 = vmul.f32 %v2866, 1.442695
        %v2878 = vpow.pop %v2877
        %v2879 = vadd.f32 %v2868, 1.0
        %v2880 = vadd.f32 %v2870, 1.0
        %v2881 = vadd.f32 %v2872, 1.0
        %v2882 = vadd.f32 %v2874, 1.0
        %v2883 = vadd.f32 %v2876, 1.0
        %v2884 = vadd.f32 %v2878, 1.0
        %v2885 = vrcp.pop %v2879
        %v2886 = vmul.f32 1.0, %v2885
        %v2887 = vrcp.pop %v2880
        %v2888 = vmul.f32 1.0, %v2887
        %v2889 = vrcp.pop %v2881
        %v2890 = vmul.f32 1.0, %v2889
        %v2891 = vrcp.pop %v2882
        %v2892 = vmul.f32 1.0, %v2891
        %v2893 = vrcp.pop %v2883
        %v2894 = vmul.f32 1.0, %v2893
        %v2895 = vrcp.pop %v2884
        %v2896 = vmul.f32 1.0, %v2895
        %v2897 = vmul.f32 %v2833, %v2886
        %v2898 = vmul.f32 %v2838, %v2888
        %v2899 = vmul.f32 %v2843, %v2890
        %v2900 = vmul.f32 %v2848, %v2892
        %v2901 = vmul.f32 %v2853, %v2894
        %v2902 = vmul.f32 %v2858, %v2896
        %v2903 = vld [vmem:[%s5 + $0x1b8] sm:$0xff]
        %v2904 = vld [vmem:[%s5 + $0x1c0] sm:$0xff]
        %v2905 = vld [vmem:[%s5 + $0x1c8] sm:$0xff]
        %v2906 = vld [vmem:[%s5 + $0x1d0] sm:$0xff]
        %v2907 = vld [vmem:[%s5 + $0x1d8] sm:$0x1]
        %v2908 = vlaneseq
        %v2909 = vshrl.u32 %v2908, 7
        %v2910 = vsub.s32 0, %v2909
        %v2911 = vrot.slane %v2907, %v2910
        %v2913 = vsel %vm565, %v2897, 0
        %v2916 = vsel %vm565, %v2898, 0
        %v2919 = vsel %vm565, %v2899, 0
        %v2922 = vsel %vm565, %v2900, 0
        %v2925 = vsel %vm565, %v2901, 0
        %v2928 = vsel %vm565, %v2902, 0
        %2930 = vmatprep.subr.mxu0 0.0
        %2931 = vmatpush1.msra.mxu0 %v2903
        %2932 = vmatprep.subr.mxu0 0.0
        %2933 = vmatpush1.msra.mxu0 %v2904
        %2934 = vmatprep.subr.mxu0 0.0
        %2935 = vmatpush1.msra.mxu0 %v2905
        %2936 = vmatprep.subr.mxu0 0.0
        %2937 = vmatpush1.msra.mxu0 %v2906
        %2938 = vmatprep.subr.mxu0 0.0
        %2939 = vmatpush1.msra.mxu0 0.0
        %2940 = vmatprep.subr.mxu0 0.0
        %2941 = vmatpush1.msra.mxu0 0.0
        %2942 = vmatprep.subr.mxu0 0.0
        %2943 = vmatpush1.msra.mxu0 0.0
        %2944 = vmatprep.subr.mxu0 0.0
        %2945 = vmatpush1.msra.mxu0 0.0
        %2946 = vmatprep.subr.mxu0 0.0
        %2947 = vmatpush1.msra.mxu0 0.0
        %2948 = vmatprep.subr.mxu0 0.0
        %2949 = vmatpush1.msra.mxu0 0.0
        %2950 = vmatprep.subr.mxu0 0.0
        %2951 = vmatpush1.msra.mxu0 0.0
        %2952 = vmatprep.subr.mxu0 0.0
        %2953 = vmatpush1.msra.mxu0 0.0
        %2954 = vmatprep.subr.mxu0 0.0
        %2955 = vmatpush1.msra.mxu0 0.0
        %2956 = vmatprep.subr.mxu0 0.0
        %2957 = vmatpush1.msra.mxu0 0.0
        %2958 = vmatprep.subr.mxu0 0.0
        %2959 = vmatpush1.msra.mxu0 0.0
        %2960 = vmatprep.subr.mxu0 0.0
        %2961 = vmatpush1.msra.mxu0 0.0
        %2962 = vmatprep.subr.mxu0 0.0
        %2963 = vmatpush1.msra.mxu0 0.0
        %2964 = vmatprep.subr.mxu0 0.0
        %2965 = vmatpush1.msra.mxu0 0.0
        %2966 = vmatprep.subr.mxu0 0.0
        %2967 = vmatpush1.msra.mxu0 0.0
        %2968 = vmatprep.subr.mxu0 0.0
        %2969 = vmatpush1.msra.mxu0 0.0
        %2970 = vmatprep.subr.mxu0 0.0
        %2971 = vmatpush1.msra.mxu0 0.0
        %2972 = vmatprep.subr.mxu0 0.0
        %2973 = vmatpush1.msra.mxu0 0.0
        %2974 = vmatprep.subr.mxu0 0.0
        %2975 = vmatpush1.msra.mxu0 0.0
        %2976 = vmatprep.subr.mxu0 0.0
        %2977 = vmatpush1.msra.mxu0 0.0
        %2978 = vmatprep.subr.mxu0 0.0
        %2979 = vmatpush1.msra.mxu0 0.0
        %2980 = vmatprep.subr.mxu0 0.0
        %2981 = vmatpush1.msra.mxu0 0.0
        %2982 = vmatprep.subr.mxu0 0.0
        %2983 = vmatpush1.msra.mxu0 0.0
        %2984 = vmatprep.subr.mxu0 0.0
        %2985 = vmatpush1.msra.mxu0 0.0
        %2986 = vmatprep.subr.mxu0 0.0
        %2987 = vmatpush1.msra.mxu0 0.0
        %2988 = vmatprep.subr.mxu0 0.0
        %2989 = vmatpush1.msra.mxu0 0.0
        %2990 = vmatprep.subr.mxu0 0.0
        %2991 = vmatpush1.msra.mxu0 0.0
        %2992 = vmatprep.subr.mxu0 0.0
        %2993 = vmatpush1.msra.mxu0 0.0
        %2994 = vmatprep.mubr.f32.mxu0 0.0
        %2995 = vmatmul.mubr.f32.gmra.mrb[0].mxu0 %v2913
        %v2996 = vpop.f32.mrb[0].mxu0
        %v2997 = vadd.f32 %v2911, %v2996
        %v2998 = vpop.f32.mrb[0].mxu0
        %2999 = vmatprep.mubr.f32.mxu0 0.0
        %3000 = vmatmul.mubr.f32.gmra.mrb[0].mxu0 %v2916
        %v3001 = vpop.f32.mrb[0].mxu0
        %v3002 = vadd.f32 %v2911, %v3001
        %v3003 = vpop.f32.mrb[0].mxu0
        %3004 = vmatprep.mubr.f32.mxu0 0.0
        %3005 = vmatmul.mubr.f32.gmra.mrb[0].mxu0 %v2919
        %v3006 = vpop.f32.mrb[0].mxu0
        %v3007 = vadd.f32 %v2911, %v3006
        %v3008 = vpop.f32.mrb[0].mxu0
        %3009 = vmatprep.mubr.f32.mxu0 0.0
        %3010 = vmatmul.mubr.f32.gmra.mrb[0].mxu0 %v2922
        %v3011 = vpop.f32.mrb[0].mxu0
        %v3012 = vadd.f32 %v2911, %v3011
        %v3013 = vpop.f32.mrb[0].mxu0
        %3014 = vmatprep.mubr.f32.mxu0 0.0
        %3015 = vmatmul.mubr.f32.gmra.mrb[0].mxu0 %v2925
        %v3016 = vpop.f32.mrb[0].mxu0
        %v3017 = vadd.f32 %v2911, %v3016
        %v3018 = vpop.f32.mrb[0].mxu0
        %3019 = vmatprep.mubr.f32.mxu0 0.0
        %3020 = vmatmul.mubr.f32.gmra.mrb[0].mxu0 %v2928
        %v3021 = vpop.f32.mrb[0].mxu0
        %v3022 = vadd.f32 %v2911, %v3021
        %v3023 = vpop.f32.mrb[0].mxu0
        %3024 = vdwg.mxu0
        %v3025 = vxor.u32 %v2997, 2147483648
        %v3026 = vxor.u32 %v3002, 2147483648
        %v3027 = vxor.u32 %v3007, 2147483648
        %v3028 = vxor.u32 %v3012, 2147483648
        %v3029 = vxor.u32 %v3017, 2147483648
        %v3030 = vxor.u32 %v3022, 2147483648
        %v3031 = vmul.f32 %v3025, 1.442695
        %v3032 = vpow.pop %v3031
        %v3033 = vmul.f32 %v3026, 1.442695
        %v3034 = vpow.pop %v3033
        %v3035 = vmul.f32 %v3027, 1.442695
        %v3036 = vpow.pop %v3035
        %v3037 = vmul.f32 %v3028, 1.442695
        %v3038 = vpow.pop %v3037
        %v3039 = vmul.f32 %v3029, 1.442695
        %v3040 = vpow.pop %v3039
        %v3041 = vmul.f32 %v3030, 1.442695
        %v3042 = vpow.pop %v3041
        %v3043 = vadd.f32 %v3032, 1.0
        %v3044 = vadd.f32 %v3034, 1.0
        %v3045 = vadd.f32 %v3036, 1.0
        %v3046 = vadd.f32 %v3038, 1.0
        %v3047 = vadd.f32 %v3040, 1.0
        %v3048 = vadd.f32 %v3042, 1.0
        %v3049 = vrcp.pop %v3043
        %v3050 = vmul.f32 1.0, %v3049
        %v3051 = vrcp.pop %v3044
        %v3052 = vmul.f32 1.0, %v3051
        %v3053 = vrcp.pop %v3045
        %v3054 = vmul.f32 1.0, %v3053
        %v3055 = vrcp.pop %v3046
        %v3056 = vmul.f32 1.0, %v3055
        %v3057 = vrcp.pop %v3047
        %v3058 = vmul.f32 1.0, %v3057
        %v3059 = vrcp.pop %v3048
        %v3060 = vmul.f32 1.0, %v3059
        %v3061 = vmul.f32 %v2997, %v3050
        %v3062 = vmul.f32 %v3002, %v3052
        %v3063 = vmul.f32 %v3007, %v3054
        %v3064 = vmul.f32 %v3012, %v3056
        %v3065 = vmul.f32 %v3017, %v3058
        %v3066 = vmul.f32 %v3022, %v3060
        %v3067 = vld [vmem:[%s5 + $0x1e0] sm:$0x1]
        %v3068 = vlaneseq
        %v3069 = vshrl.u32 %v3068, 7
        %v3070 = vsub.s32 0, %v3069
        %v3071 = vrot.slane %v3067, %v3070
        %v3072 = vmul.f32 %v3061, %v3071
        %v3073 = vmul.f32 %v3062, %v3071
        %v3074 = vmul.f32 %v3063, %v3071
        %v3075 = vmul.f32 %v3064, %v3071
        %v3076 = vmul.f32 %v3065, %v3071
        %v3077 = vmul.f32 %v3066, %v3071
        %v3078 = vsel %vm565, %v3072, 0.0
        %3079 = vadd.xlane.f32.xlu0 %v3078
        %v3080 = vpop.xlane.xlu0 %3079
        %v3081 = vsel %vm565, %v3073, 0.0
        %3082 = vadd.xlane.f32.xlu0 %v3081
        %v3083 = vpop.xlane.xlu0 %3082
        %v3084 = vsel %vm565, %v3074, 0.0
        %3085 = vadd.xlane.f32.xlu0 %v3084
        %v3086 = vpop.xlane.xlu0 %3085
        %v3087 = vsel %vm565, %v3075, 0.0
        %3088 = vadd.xlane.f32.xlu0 %v3087
        %v3089 = vpop.xlane.xlu0 %3088
        %v3090 = vsel %vm565, %v3076, 0.0
        %3091 = vadd.xlane.f32.xlu0 %v3090
        %v3092 = vpop.xlane.xlu0 %3091
        %v3093 = vsel %vm565, %v3077, 0.0
        %3094 = vadd.xlane.f32.xlu0 %v3093
        %v3095 = vpop.xlane.xlu0 %3094
        %v3096 = vtanh.pop %v3080
        %v3097 = vtanh.pop %v3083
        %v3098 = vtanh.pop %v3086
        %v3099 = vtanh.pop %v3089
        %v3100 = vtanh.pop %v3092
        %v3101 = vtanh.pop %v3095
        %v3102 = vmul.f32 %v2319, %v3096
        %v3103 = vmul.f32 %v2321, %v3097
        %v3104 = vmul.f32 %v2323, %v3098
        %v3105 = vmul.f32 %v2325, %v3099
        %v3106 = vmul.f32 %v2327, %v3100
        %v3107 = vmul.f32 %v2329, %v3101
        %v3108 = vsel %vm565, %v2897, %v3102
        %v3109 = vsel %vm565, %v2898, %v3103
        %v3110 = vsel %vm565, %v2899, %v3104
        %v3111 = vsel %vm565, %v2900, %v3105
        %v3112 = vsel %vm565, %v2901, %v3106
        %v3113 = vsel %vm565, %v2902, %v3107
        %3114 = vmatprep.subr.mxu0 0.0
        %3115 = vmatpush1.msra.mxu0 %v3108
        %3116 = vmatprep.subr.mxu0 0.0
        %3117 = vmatpush1.msra.mxu0 %v3109
        %3118 = vmatprep.subr.mxu0 0.0
        %3119 = vmatpush1.msra.mxu0 %v3110
        %3120 = vmatprep.subr.mxu0 0.0
        %3121 = vmatpush1.msra.mxu0 %v3111
        %3122 = vmatprep.subr.mxu0 0.0
        %3123 = vmatpush1.msra.mxu0 %v3112
        %3124 = vmatprep.subr.mxu0 0.0
        %3125 = vmatpush1.msra.mxu0 %v3113
        %3126 = vmatprep.subr.mxu0 0.0
        %3127 = vmatpush1.msra.mxu0 0.0
        %3128 = vmatprep.subr.mxu0 0.0
        %3129 = vmatpush1.msra.mxu0 0.0
        %3130 = vmatprep.subr.mxu0 0.0
        %3131 = vmatpush1.msra.mxu0 0.0
        %3132 = vmatprep.subr.mxu0 0.0
        %3133 = vmatpush1.msra.mxu0 0.0
        %3134 = vmatprep.subr.mxu0 0.0
        %3135 = vmatpush1.msra.mxu0 0.0
        %3136 = vmatprep.subr.mxu0 0.0
        %3137 = vmatpush1.msra.mxu0 0.0
        %3138 = vmatprep.subr.mxu0 0.0
        %3139 = vmatpush1.msra.mxu0 0.0
        %3140 = vmatprep.subr.mxu0 0.0
        %3141 = vmatpush1.msra.mxu0 0.0
        %3142 = vmatprep.subr.mxu0 0.0
        %3143 = vmatpush1.msra.mxu0 0.0
        %3144 = vmatprep.subr.mxu0 0.0
        %3145 = vmatpush1.msra.mxu0 0.0
        %3146 = vmatprep.subr.mxu0 0.0
        %3147 = vmatpush1.msra.mxu0 0.0
        %3148 = vmatprep.subr.mxu0 0.0
        %3149 = vmatpush1.msra.mxu0 0.0
        %3150 = vmatprep.subr.mxu0 0.0
        %3151 = vmatpush1.msra.mxu0 0.0
        %3152 = vmatprep.subr.mxu0 0.0
        %3153 = vmatpush1.msra.mxu0 0.0
        %3154 = vmatprep.subr.mxu0 0.0
        %3155 = vmatpush1.msra.mxu0 0.0
        %3156 = vmatprep.subr.mxu0 0.0
        %3157 = vmatpush1.msra.mxu0 0.0
        %3158 = vmatprep.subr.mxu0 0.0
        %3159 = vmatpush1.msra.mxu0 0.0
        %3160 = vmatprep.subr.mxu0 0.0
        %3161 = vmatpush1.msra.mxu0 0.0
        %3162 = vmatprep.subr.mxu0 0.0
        %3163 = vmatpush1.msra.mxu0 0.0
        %3164 = vmatprep.subr.mxu0 0.0
        %3165 = vmatpush1.msra.mxu0 0.0
        %3166 = vmatprep.subr.mxu0 0.0
        %3167 = vmatpush1.msra.mxu0 0.0
        %3168 = vmatprep.subr.mxu0 0.0
        %3169 = vmatpush1.msra.mxu0 0.0
        %3170 = vmatprep.subr.mxu0 0.0
        %3171 = vmatpush1.msra.mxu0 0.0
        %3172 = vmatprep.subr.mxu0 0.0
        %3173 = vmatpush1.msra.mxu0 0.0
        %3174 = vmatprep.subr.mxu0 0.0
        %3175 = vmatpush1.msra.mxu0 0.0
        %3176 = vmatprep.subr.mxu0 0.0
        %3177 = vmatpush1.msra.mxu0 0.0
        %3178 = vmatprep.mubr.f32.mxu0 0.0
        %3179 = vmatmul.mubr.f32.gmra.mrb[0].mxu0 %v1682
        %v3180 = vpop.f32.mrb[0].mxu0
        %v3181 = vadd.f32 0.0, %v3180
        %v3182 = vpop.f32.mrb[0].mxu0
        %3183 = vmatprep.mubr.f32.mxu0 0.0
        %3184 = vmatmul.mubr.f32.gmra.mrb[0].mxu0 %v1685
        %v3185 = vpop.f32.mrb[0].mxu0
        %v3186 = vadd.f32 0.0, %v3185
        %v3187 = vpop.f32.mrb[0].mxu0
        %3188 = vdwg.mxu0
        %v3189 = vmul.f32 %v3181, %v1765
        %v3190 = vmul.f32 %v3186, %v1770
        %3193 = vrot.lane.b32.xlu0 %v3189, 96
        %v3194 = vpop.permute.xlu0 %3193
        %3195 = vrot.lane.b32.xlu0 %v3190, 96
        %v3196 = vpop.permute.xlu0 %3195
        %v3199 = vadd.f32 %v1782, %v3194
        %v3200 = vadd.f32 %v1783, %v3196
        %v3201 = vld [vmem:[%s5 + $0x1e8] sm:$0xff]
        %v3202 = vld [vmem:[%s5 + $0x1f0] sm:$0xff]
        %v3203 = vld [vmem:[%s5 + $0x1f8] sm:$0xff]
        %v3204 = vld [vmem:[%s5 + $0x200] sm:$0xff]
        %v3205 = vld [vmem:[%s5 + $0x208] sm:$0xff]
        %v3206 = vld [vmem:[%s5 + $0x210] sm:$0xff]
        %v3207 = vld [vmem:[%s5 + $0x218] sm:$0xff]
        %v3208 = vld [vmem:[%s5 + $0x220] sm:$0xff]
        %v3210 = vsel %vm565, %v3181, 0
        %v3213 = vsel %vm565, %v3186, 0
        %3215 = vmatprep.subr.mxu0 0.0
        %3216 = vmatpush1.msra.mxu0 %v3205
        %3217 = vmatprep.subr.mxu0 0.0
        %3218 = vmatpush1.msra.mxu0 %v3206
        %3219 = vmatprep.subr.mxu0 0.0
        %3220 = vmatpush1.msra.mxu0 %v3207
        %3221 = vmatprep.subr.mxu0 0.0
        %3222 = vmatpush1.msra.mxu0 %v3208
        %3223 = vmatprep.subr.mxu0 0.0
        %3224 = vmatpush1.msra.mxu0 0.0
        %3225 = vmatprep.subr.mxu0 0.0
        %3226 = vmatpush1.msra.mxu0 0.0
        %3227 = vmatprep.subr.mxu0 0.0
        %3228 = vmatpush1.msra.mxu0 0.0
        %3229 = vmatprep.subr.mxu0 0.0
        %3230 = vmatpush1.msra.mxu0 0.0
        %3231 = vmatprep.subr.mxu0 0.0
        %3232 = vmatpush1.msra.mxu0 0.0
        %3233 = vmatprep.subr.mxu0 0.0
        %3234 = vmatpush1.msra.mxu0 0.0
        %3235 = vmatprep.subr.mxu0 0.0
        %3236 = vmatpush1.msra.mxu0 0.0
        %3237 = vmatprep.subr.mxu0 0.0
        %3238 = vmatpush1.msra.mxu0 0.0
        %3239 = vmatprep.subr.mxu0 0.0
        %3240 = vmatpush1.msra.mxu0 0.0
        %3241 = vmatprep.subr.mxu0 0.0
        %3242 = vmatpush1.msra.mxu0 0.0
        %3243 = vmatprep.subr.mxu0 0.0
        %3244 = vmatpush1.msra.mxu0 0.0
        %3245 = vmatprep.subr.mxu0 0.0
        %3246 = vmatpush1.msra.mxu0 0.0
        %3247 = vmatprep.subr.mxu0 0.0
        %3248 = vmatpush1.msra.mxu0 0.0
        %3249 = vmatprep.subr.mxu0 0.0
        %3250 = vmatpush1.msra.mxu0 0.0
        %3251 = vmatprep.subr.mxu0 0.0
        %3252 = vmatpush1.msra.mxu0 0.0
        %3253 = vmatprep.subr.mxu0 0.0
        %3254 = vmatpush1.msra.mxu0 0.0
        %3255 = vmatprep.subr.mxu0 0.0
        %3256 = vmatpush1.msra.mxu0 0.0
        %3257 = vmatprep.subr.mxu0 0.0
        %3258 = vmatpush1.msra.mxu0 0.0
        %3259 = vmatprep.subr.mxu0 0.0
        %3260 = vmatpush1.msra.mxu0 0.0
        %3261 = vmatprep.subr.mxu0 0.0
        %3262 = vmatpush1.msra.mxu0 0.0
        %3263 = vmatprep.subr.mxu0 0.0
        %3264 = vmatpush1.msra.mxu0 0.0
        %3265 = vmatprep.subr.mxu0 0.0
        %3266 = vmatpush1.msra.mxu0 0.0
        %3267 = vmatprep.subr.mxu0 0.0
        %3268 = vmatpush1.msra.mxu0 0.0
        %3269 = vmatprep.subr.mxu0 0.0
        %3270 = vmatpush1.msra.mxu0 0.0
        %3271 = vmatprep.subr.mxu0 0.0
        %3272 = vmatpush1.msra.mxu0 0.0
        %3273 = vmatprep.subr.mxu0 0.0
        %3274 = vmatpush1.msra.mxu0 0.0
        %3275 = vmatprep.subr.mxu0 0.0
        %3276 = vmatpush1.msra.mxu0 0.0
        %3277 = vmatprep.subr.mxu0 0.0
        %3278 = vmatpush1.msra.mxu0 0.0
        %3279 = vmatprep.mubr.f32.mxu0 0.0
        %3280 = vmatmul.mubr.f32.gmra.mrb[0].mxu0 %v3210
        %v3281 = vpop.f32.mrb[0].mxu0
        %v3282 = vadd.f32 0.0, %v3281
        %v3283 = vpop.f32.mrb[0].mxu0
        %3284 = vmatprep.mubr.f32.mxu0 0.0
        %3285 = vmatmul.mubr.f32.gmra.mrb[0].mxu0 %v3213
        %v3286 = vpop.f32.mrb[0].mxu0
        %v3287 = vadd.f32 0.0, %v3286
        %v3288 = vpop.f32.mrb[0].mxu0
        %3289 = vdwg.mxu0
        %v3291 = vsel %vm565, %v2079, 0
        %v3294 = vsel %vm565, %v2080, 0
        %3296 = vmatprep.subr.mxu0 0.0
        %3297 = vmatpush1.msra.mxu0 %v3201
        %3298 = vmatprep.subr.mxu0 0.0
        %3299 = vmatpush1.msra.mxu0 %v3202
        %3300 = vmatprep.subr.mxu0 0.0
        %3301 = vmatpush1.msra.mxu0 %v3203
        %3302 = vmatprep.subr.mxu0 0.0
        %3303 = vmatpush1.msra.mxu0 %v3204
        %3304 = vmatprep.subr.mxu0 0.0
        %3305 = vmatpush1.msra.mxu0 0.0
        %3306 = vmatprep.subr.mxu0 0.0
        %3307 = vmatpush1.msra.mxu0 0.0
        %3308 = vmatprep.subr.mxu0 0.0
        %3309 = vmatpush1.msra.mxu0 0.0
        %3310 = vmatprep.subr.mxu0 0.0
        %3311 = vmatpush1.msra.mxu0 0.0
        %3312 = vmatprep.subr.mxu0 0.0
        %3313 = vmatpush1.msra.mxu0 0.0
        %3314 = vmatprep.subr.mxu0 0.0
        %3315 = vmatpush1.msra.mxu0 0.0
        %3316 = vmatprep.subr.mxu0 0.0
        %3317 = vmatpush1.msra.mxu0 0.0
        %3318 = vmatprep.subr.mxu0 0.0
        %3319 = vmatpush1.msra.mxu0 0.0
        %3320 = vmatprep.subr.mxu0 0.0
        %3321 = vmatpush1.msra.mxu0 0.0
        %3322 = vmatprep.subr.mxu0 0.0
        %3323 = vmatpush1.msra.mxu0 0.0
        %3324 = vmatprep.subr.mxu0 0.0
        %3325 = vmatpush1.msra.mxu0 0.0
        %3326 = vmatprep.subr.mxu0 0.0
        %3327 = vmatpush1.msra.mxu0 0.0
        %3328 = vmatprep.subr.mxu0 0.0
        %3329 = vmatpush1.msra.mxu0 0.0
        %3330 = vmatprep.subr.mxu0 0.0
        %3331 = vmatpush1.msra.mxu0 0.0
        %3332 = vmatprep.subr.mxu0 0.0
        %3333 = vmatpush1.msra.mxu0 0.0
        %3334 = vmatprep.subr.mxu0 0.0
        %3335 = vmatpush1.msra.mxu0 0.0
        %3336 = vmatprep.subr.mxu0 0.0
        %3337 = vmatpush1.msra.mxu0 0.0
        %3338 = vmatprep.subr.mxu0 0.0
        %3339 = vmatpush1.msra.mxu0 0.0
        %3340 = vmatprep.subr.mxu0 0.0
        %3341 = vmatpush1.msra.mxu0 0.0
        %3342 = vmatprep.subr.mxu0 0.0
        %3343 = vmatpush1.msra.mxu0 0.0
        %3344 = vmatprep.subr.mxu0 0.0
        %3345 = vmatpush1.msra.mxu0 0.0
        %3346 = vmatprep.subr.mxu0 0.0
        %3347 = vmatpush1.msra.mxu0 0.0
        %3348 = vmatprep.subr.mxu0 0.0
        %3349 = vmatpush1.msra.mxu0 0.0
        %3350 = vmatprep.subr.mxu0 0.0
        %3351 = vmatpush1.msra.mxu0 0.0
        %3352 = vmatprep.subr.mxu0 0.0
        %3353 = vmatpush1.msra.mxu0 0.0
        %3354 = vmatprep.subr.mxu0 0.0
        %3355 = vmatpush1.msra.mxu0 0.0
        %3356 = vmatprep.subr.mxu0 0.0
        %3357 = vmatpush1.msra.mxu0 0.0
        %3358 = vmatprep.subr.mxu0 0.0
        %3359 = vmatpush1.msra.mxu0 0.0
        %3360 = vmatprep.mubr.f32.mxu0 0.0
        %3361 = vmatmul.mubr.f32.gmra.mrb[0].mxu0 %v3291
        %v3362 = vpop.f32.mrb[0].mxu0
        %v3363 = vadd.f32 %v3282, %v3362
        %v3364 = vpop.f32.mrb[0].mxu0
        %3365 = vmatprep.mubr.f32.mxu0 0.0
        %3366 = vmatmul.mubr.f32.gmra.mrb[0].mxu0 %v3294
        %v3367 = vpop.f32.mrb[0].mxu0
        %v3368 = vadd.f32 %v3287, %v3367
        %v3369 = vpop.f32.mrb[0].mxu0
        %3370 = vdwg.mxu0
        %v3371 = vld [vmem:[%s5 + $0x228] sm:$0x1]
        %v3372 = vlaneseq
        %v3373 = vshrl.u32 %v3372, 7
        %v3374 = vsub.s32 0, %v3373
        %v3375 = vrot.slane %v3371, %v3374
        %v3376 = vadd.f32 %v3363, %v3375
        %v3377 = vadd.f32 %v3368, %v3375
        %v3378 = vxor.u32 %v3376, 2147483648
        %v3379 = vxor.u32 %v3377, 2147483648
        %v3380 = vmul.f32 %v3378, 1.442695
        %v3381 = vpow.pop %v3380
        %v3382 = vmul.f32 %v3379, 1.442695
        %v3383 = vpow.pop %v3382
        %v3384 = vadd.f32 %v3381, 1.0
        %v3385 = vadd.f32 %v3383, 1.0
        %v3386 = vrcp.pop %v3384
        %v3387 = vmul.f32 1.0, %v3386
        %v3388 = vrcp.pop %v3385
        %v3389 = vmul.f32 1.0, %v3388
        %v3390 = vmul.f32 %v3376, %v3387
        %v3391 = vmul.f32 %v3377, %v3389
        %v3392 = vld [vmem:[%s5 + $0x230] sm:$0xff]
        %v3393 = vld [vmem:[%s5 + $0x238] sm:$0xff]
        %v3394 = vld [vmem:[%s5 + $0x240] sm:$0xff]
        %v3395 = vld [vmem:[%s5 + $0x248] sm:$0xff]
        %v3396 = vld [vmem:[%s5 + $0x250] sm:$0x1]
        %v3397 = vlaneseq
        %v3398 = vshrl.u32 %v3397, 7
        %v3399 = vsub.s32 0, %v3398
        %v3400 = vrot.slane %v3396, %v3399
        %v3402 = vsel %vm565, %v3390, 0
        %v3405 = vsel %vm565, %v3391, 0
        %3407 = vmatprep.subr.mxu0 0.0
        %3408 = vmatpush1.msra.mxu0 %v3392
        %3409 = vmatprep.subr.mxu0 0.0
        %3410 = vmatpush1.msra.mxu0 %v3393
        %3411 = vmatprep.subr.mxu0 0.0
        %3412 = vmatpush1.msra.mxu0 %v3394
        %3413 = vmatprep.subr.mxu0 0.0
        %3414 = vmatpush1.msra.mxu0 %v3395
        %3415 = vmatprep.subr.mxu0 0.0
        %3416 = vmatpush1.msra.mxu0 0.0
        %3417 = vmatprep.subr.mxu0 0.0
        %3418 = vmatpush1.msra.mxu0 0.0
        %3419 = vmatprep.subr.mxu0 0.0
        %3420 = vmatpush1.msra.mxu0 0.0
        %3421 = vmatprep.subr.mxu0 0.0
        %3422 = vmatpush1.msra.mxu0 0.0
        %3423 = vmatprep.subr.mxu0 0.0
        %3424 = vmatpush1.msra.mxu0 0.0
        %3425 = vmatprep.subr.mxu0 0.0
        %3426 = vmatpush1.msra.mxu0 0.0
        %3427 = vmatprep.subr.mxu0 0.0
        %3428 = vmatpush1.msra.mxu0 0.0
        %3429 = vmatprep.subr.mxu0 0.0
        %3430 = vmatpush1.msra.mxu0 0.0
        %3431 = vmatprep.subr.mxu0 0.0
        %3432 = vmatpush1.msra.mxu0 0.0
        %3433 = vmatprep.subr.mxu0 0.0
        %3434 = vmatpush1.msra.mxu0 0.0
        %3435 = vmatprep.subr.mxu0 0.0
        %3436 = vmatpush1.msra.mxu0 0.0
        %3437 = vmatprep.subr.mxu0 0.0
        %3438 = vmatpush1.msra.mxu0 0.0
        %3439 = vmatprep.subr.mxu0 0.0
        %3440 = vmatpush1.msra.mxu0 0.0
        %3441 = vmatprep.subr.mxu0 0.0
        %3442 = vmatpush1.msra.mxu0 0.0
        %3443 = vmatprep.subr.mxu0 0.0
        %3444 = vmatpush1.msra.mxu0 0.0
        %3445 = vmatprep.subr.mxu0 0.0
        %3446 = vmatpush1.msra.mxu0 0.0
        %3447 = vmatprep.subr.mxu0 0.0
        %3448 = vmatpush1.msra.mxu0 0.0
        %3449 = vmatprep.subr.mxu0 0.0
        %3450 = vmatpush1.msra.mxu0 0.0
        %3451 = vmatprep.subr.mxu0 0.0
        %3452 = vmatpush1.msra.mxu0 0.0
        %3453 = vmatprep.subr.mxu0 0.0
        %3454 = vmatpush1.msra.mxu0 0.0
        %3455 = vmatprep.subr.mxu0 0.0
        %3456 = vmatpush1.msra.mxu0 0.0
        %3457 = vmatprep.subr.mxu0 0.0
        %3458 = vmatpush1.msra.mxu0 0.0
        %3459 = vmatprep.subr.mxu0 0.0
        %3460 = vmatpush1.msra.mxu0 0.0
        %3461 = vmatprep.subr.mxu0 0.0
        %3462 = vmatpush1.msra.mxu0 0.0
        %3463 = vmatprep.subr.mxu0 0.0
        %3464 = vmatpush1.msra.mxu0 0.0
        %3465 = vmatprep.subr.mxu0 0.0
        %3466 = vmatpush1.msra.mxu0 0.0
        %3467 = vmatprep.subr.mxu0 0.0
        %3468 = vmatpush1.msra.mxu0 0.0
        %3469 = vmatprep.subr.mxu0 0.0
        %3470 = vmatpush1.msra.mxu0 0.0
        %3471 = vmatprep.mubr.f32.mxu0 0.0
        %3472 = vmatmul.mubr.f32.gmra.mrb[0].mxu0 %v3402
        %v3473 = vpop.f32.mrb[0].mxu0
        %v3474 = vadd.f32 %v3400, %v3473
        %v3475 = vpop.f32.mrb[0].mxu0
        %3476 = vmatprep.mubr.f32.mxu0 0.0
        %3477 = vmatmul.mubr.f32.gmra.mrb[0].mxu0 %v3405
        %v3478 = vpop.f32.mrb[0].mxu0
        %v3479 = vadd.f32 %v3400, %v3478
        %v3480 = vpop.f32.mrb[0].mxu0
        %3481 = vdwg.mxu0
        %v3482 = vadd.f32 %v3474, %v2079
        %v3483 = vadd.f32 %v3479, %v2080
        %v3484 = vxor.u32 %v3482, 2147483648
        %v3485 = vxor.u32 %v3483, 2147483648
        %v3486 = vmul.f32 %v3484, 1.442695
        %v3487 = vpow.pop %v3486
        %v3488 = vmul.f32 %v3485, 1.442695
        %v3489 = vpow.pop %v3488
        %v3490 = vadd.f32 %v3487, 1.0
        %v3491 = vadd.f32 %v3489, 1.0
        %v3492 = vrcp.pop %v3490
        %v3493 = vmul.f32 1.0, %v3492
        %v3494 = vrcp.pop %v3491
        %v3495 = vmul.f32 1.0, %v3494
        %v3496 = vmul.f32 %v3482, %v3493
        %v3497 = vmul.f32 %v3483, %v3495
        %3500 = vrot.lane.b32.xlu0 %v3199, 32
        %v3501 = vpop.permute.xlu0 %3500
        %3502 = vrot.lane.b32.xlu0 %v3200, 32
        %v3503 = vpop.permute.xlu0 %3502
        %v3506 = vsel %vm565, %v3496, %v3501
        %v3507 = vsel %vm565, %v3497, %v3503
        %3508 = vmatprep.subr.mxu0 0.0
        %3509 = vmatpush1.msra.mxu0 %v3506
        %3510 = vmatprep.subr.mxu0 0.0
        %3511 = vmatpush1.msra.mxu0 %v3507
        %3512 = vmatprep.subr.mxu0 0.0
        %3513 = vmatpush1.msra.mxu0 0.0
        %3514 = vmatprep.subr.mxu0 0.0
        %3515 = vmatpush1.msra.mxu0 0.0
        %3516 = vmatprep.subr.mxu0 0.0
        %3517 = vmatpush1.msra.mxu0 0.0
        %3518 = vmatprep.subr.mxu0 0.0
        %3519 = vmatpush1.msra.mxu0 0.0
        %3520 = vmatprep.subr.mxu0 0.0
        %3521 = vmatpush1.msra.mxu0 0.0
        %3522 = vmatprep.subr.mxu0 0.0
        %3523 = vmatpush1.msra.mxu0 0.0
        %3524 = vmatprep.subr.mxu0 0.0
        %3525 = vmatpush1.msra.mxu0 0.0
        %3526 = vmatprep.subr.mxu0 0.0
        %3527 = vmatpush1.msra.mxu0 0.0
        %3528 = vmatprep.subr.mxu0 0.0
        %3529 = vmatpush1.msra.mxu0 0.0
        %3530 = vmatprep.subr.mxu0 0.0
        %3531 = vmatpush1.msra.mxu0 0.0
        %3532 = vmatprep.subr.mxu0 0.0
        %3533 = vmatpush1.msra.mxu0 0.0
        %3534 = vmatprep.subr.mxu0 0.0
        %3535 = vmatpush1.msra.mxu0 0.0
        %3536 = vmatprep.subr.mxu0 0.0
        %3537 = vmatpush1.msra.mxu0 0.0
        %3538 = vmatprep.subr.mxu0 0.0
        %3539 = vmatpush1.msra.mxu0 0.0
        %3540 = vmatprep.subr.mxu0 0.0
        %3541 = vmatpush1.msra.mxu0 0.0
        %3542 = vmatprep.subr.mxu0 0.0
        %3543 = vmatpush1.msra.mxu0 0.0
        %3544 = vmatprep.subr.mxu0 0.0
        %3545 = vmatpush1.msra.mxu0 0.0
        %3546 = vmatprep.subr.mxu0 0.0
        %3547 = vmatpush1.msra.mxu0 0.0
        %3548 = vmatprep.subr.mxu0 0.0
        %3549 = vmatpush1.msra.mxu0 0.0
        %3550 = vmatprep.subr.mxu0 0.0
        %3551 = vmatpush1.msra.mxu0 0.0
        %3552 = vmatprep.subr.mxu0 0.0
        %3553 = vmatpush1.msra.mxu0 0.0
        %3554 = vmatprep.subr.mxu0 0.0
        %3555 = vmatpush1.msra.mxu0 0.0
        %3556 = vmatprep.subr.mxu0 0.0
        %3557 = vmatpush1.msra.mxu0 0.0
        %3558 = vmatprep.subr.mxu0 0.0
        %3559 = vmatpush1.msra.mxu0 0.0
        %3560 = vmatprep.subr.mxu0 0.0
        %3561 = vmatpush1.msra.mxu0 0.0
        %3562 = vmatprep.subr.mxu0 0.0
        %3563 = vmatpush1.msra.mxu0 0.0
        %3564 = vmatprep.subr.mxu0 0.0
        %3565 = vmatpush1.msra.mxu0 0.0
        %3566 = vmatprep.subr.mxu0 0.0
        %3567 = vmatpush1.msra.mxu0 0.0
        %3568 = vmatprep.subr.mxu0 0.0
        %3569 = vmatpush1.msra.mxu0 0.0
        %3570 = vmatprep.subr.mxu0 0.0
        %3571 = vmatpush1.msra.mxu0 0.0
        %3572 = vmatprep.mubr.f32.mxu0 0.0
        %3573 = vmatmul.mubr.f32.gmra.mrb[0].mxu0 %v569
        %v3574 = vpop.f32.mrb[0].mxu0
        %v3575 = vadd.f32 0.0, %v3574
        %v3576 = vpop.f32.mrb[0].mxu0
        %3577 = vmatprep.mubr.f32.mxu0 0.0
        %3578 = vmatmul.mubr.f32.gmra.mrb[0].mxu0 %v572
        %v3579 = vpop.f32.mrb[0].mxu0
        %v3580 = vadd.f32 0.0, %v3579
        %v3581 = vpop.f32.mrb[0].mxu0
        %3582 = vmatprep.mubr.f32.mxu0 0.0
        %3583 = vmatmul.mubr.f32.gmra.mrb[0].mxu0 %v575
        %v3584 = vpop.f32.mrb[0].mxu0
        %v3585 = vadd.f32 0.0, %v3584
        %v3586 = vpop.f32.mrb[0].mxu0
        %3587 = vmatprep.mubr.f32.mxu0 0.0
        %3588 = vmatmul.mubr.f32.gmra.mrb[0].mxu0 %v578
        %v3589 = vpop.f32.mrb[0].mxu0
        %v3590 = vadd.f32 0.0, %v3589
        %v3591 = vpop.f32.mrb[0].mxu0
        %3592 = vmatprep.mubr.f32.mxu0 0.0
        %3593 = vmatmul.mubr.f32.gmra.mrb[0].mxu0 %v581
        %v3594 = vpop.f32.mrb[0].mxu0
        %v3595 = vadd.f32 0.0, %v3594
        %v3596 = vpop.f32.mrb[0].mxu0
        %3597 = vmatprep.mubr.f32.mxu0 0.0
        %3598 = vmatmul.mubr.f32.gmra.mrb[0].mxu0 %v584
        %v3599 = vpop.f32.mrb[0].mxu0
        %v3600 = vadd.f32 0.0, %v3599
        %v3601 = vpop.f32.mrb[0].mxu0
        %3602 = vmatprep.mubr.f32.mxu0 0.0
        %3603 = vmatmul.mubr.f32.gmra.mrb[0].mxu0 %v587
        %v3604 = vpop.f32.mrb[0].mxu0
        %v3605 = vadd.f32 0.0, %v3604
        %v3606 = vpop.f32.mrb[0].mxu0
        %3607 = vmatprep.mubr.f32.mxu0 0.0
        %3608 = vmatmul.mubr.f32.gmra.mrb[0].mxu0 %v590
        %v3609 = vpop.f32.mrb[0].mxu0
        %v3610 = vadd.f32 0.0, %v3609
        %v3611 = vpop.f32.mrb[0].mxu0
        %3612 = vmatprep.mubr.f32.mxu0 0.0
        %3613 = vmatmul.mubr.f32.gmra.mrb[0].mxu0 %v593
        %v3614 = vpop.f32.mrb[0].mxu0
        %v3615 = vadd.f32 0.0, %v3614
        %v3616 = vpop.f32.mrb[0].mxu0
        %3617 = vmatprep.mubr.f32.mxu0 0.0
        %3618 = vmatmul.mubr.f32.gmra.mrb[0].mxu0 %v596
        %v3619 = vpop.f32.mrb[0].mxu0
        %v3620 = vadd.f32 0.0, %v3619
        %v3621 = vpop.f32.mrb[0].mxu0
        %3622 = vmatprep.mubr.f32.mxu0 0.0
        %3623 = vmatmul.mubr.f32.gmra.mrb[0].mxu0 %v599
        %v3624 = vpop.f32.mrb[0].mxu0
        %v3625 = vadd.f32 0.0, %v3624
        %v3626 = vpop.f32.mrb[0].mxu0
        %3627 = vmatprep.mubr.f32.mxu0 0.0
        %3628 = vmatmul.mubr.f32.gmra.mrb[0].mxu0 %v602
        %v3629 = vpop.f32.mrb[0].mxu0
        %v3630 = vadd.f32 0.0, %v3629
        %v3631 = vpop.f32.mrb[0].mxu0
        %3632 = vdwg.mxu0
        %v3633 = vsub.f32 %v3575, %v3605
        %v3634 = vsub.f32 %v3580, %v3610
        %v3635 = vsub.f32 %v3585, %v3615
        %v3636 = vsub.f32 %v3590, %v3620
        %v3637 = vsub.f32 %v3595, %v3625
        %v3638 = vsub.f32 %v3600, %v3630
        %v3639 = vmul.f32 %v3633, %v3633
        %v3640 = vmul.f32 %v3634, %v3634
        %v3641 = vmul.f32 %v3635, %v3635
        %v3642 = vmul.f32 %v3636, %v3636
        %v3643 = vmul.f32 %v3637, %v3637
        %v3644 = vmul.f32 %v3638, %v3638
        %3651 = vrot.lane.b32.xlu0 %v3639, 96
        %v3652 = vpop.permute.xlu0 %3651
        %3653 = vrot.lane.b32.xlu0 %v3640, 96
        %v3654 = vpop.permute.xlu0 %3653
        %3655 = vrot.lane.b32.xlu0 %v3641, 96
        %v3656 = vpop.permute.xlu0 %3655
        %3657 = vrot.lane.b32.xlu0 %v3642, 96
        %v3658 = vpop.permute.xlu0 %3657
        %3659 = vrot.lane.b32.xlu0 %v3643, 96
        %v3660 = vpop.permute.xlu0 %3659
        %3661 = vrot.lane.b32.xlu0 %v3644, 96
        %v3662 = vpop.permute.xlu0 %3661
        %v3669 = vsel %vm765, %v3652, 0.0
        %3670 = vadd.xlane.f32.xlu0 %v3669
        %v3671 = vpop.xlane.xlu0 %3670
        %v3672 = vsel %vm765, %v3654, 0.0
        %3673 = vadd.xlane.f32.xlu0 %v3672
        %v3674 = vpop.xlane.xlu0 %3673
        %v3675 = vsel %vm765, %v3656, 0.0
        %3676 = vadd.xlane.f32.xlu0 %v3675
        %v3677 = vpop.xlane.xlu0 %3676
        %v3678 = vsel %vm765, %v3658, 0.0
        %3679 = vadd.xlane.f32.xlu0 %v3678
        %v3680 = vpop.xlane.xlu0 %3679
        %v3681 = vsel %vm765, %v3660, 0.0
        %3682 = vadd.xlane.f32.xlu0 %v3681
        %v3683 = vpop.xlane.xlu0 %3682
        %v3684 = vsel %vm765, %v3662, 0.0
        %3685 = vadd.xlane.f32.xlu0 %v3684
        %v3686 = vpop.xlane.xlu0 %3685
        %v3687 = vrsqrt.pop %v3671
        %v3688 = vmul.f32 %v3671, %v3687
        %vm3689 = vcmp.eq.f32.partialorder %v3671, inf
        %v3690 = vsel %vm3689, %v3671, %v3688
        %vm3691 = vcmp.eq.f32.partialorder %v3671, 0.0
        %v3692 = vand.u32 %v3671, 2147483648
        %v3693 = vsel %vm3691, %v3692, %v3690
        %v3694 = vrsqrt.pop %v3674
        %v3695 = vmul.f32 %v3674, %v3694
        %vm3696 = vcmp.eq.f32.partialorder %v3674, inf
        %v3697 = vsel %vm3696, %v3674, %v3695
        %vm3698 = vcmp.eq.f32.partialorder %v3674, 0.0
        %v3699 = vand.u32 %v3674, 2147483648
        %v3700 = vsel %vm3698, %v3699, %v3697
        %v3701 = vrsqrt.pop %v3677
        %v3702 = vmul.f32 %v3677, %v3701
        %vm3703 = vcmp.eq.f32.partialorder %v3677, inf
        %v3704 = vsel %vm3703, %v3677, %v3702
        %vm3705 = vcmp.eq.f32.partialorder %v3677, 0.0
        %v3706 = vand.u32 %v3677, 2147483648
        %v3707 = vsel %vm3705, %v3706, %v3704
        %v3708 = vrsqrt.pop %v3680
        %v3709 = vmul.f32 %v3680, %v3708
        %vm3710 = vcmp.eq.f32.partialorder %v3680, inf
        %v3711 = vsel %vm3710, %v3680, %v3709
        %vm3712 = vcmp.eq.f32.partialorder %v3680, 0.0
        %v3713 = vand.u32 %v3680, 2147483648
        %v3714 = vsel %vm3712, %v3713, %v3711
        %v3715 = vrsqrt.pop %v3683
        %v3716 = vmul.f32 %v3683, %v3715
        %vm3717 = vcmp.eq.f32.partialorder %v3683, inf
        %v3718 = vsel %vm3717, %v3683, %v3716
        %vm3719 = vcmp.eq.f32.partialorder %v3683, 0.0
        %v3720 = vand.u32 %v3683, 2147483648
        %v3721 = vsel %vm3719, %v3720, %v3718
        %v3722 = vrsqrt.pop %v3686
        %v3723 = vmul.f32 %v3686, %v3722
        %vm3724 = vcmp.eq.f32.partialorder %v3686, inf
        %v3725 = vsel %vm3724, %v3686, %v3723
        %vm3726 = vcmp.eq.f32.partialorder %v3686, 0.0
        %v3727 = vand.u32 %v3686, 2147483648
        %v3728 = vsel %vm3726, %v3727, %v3725
        %v3729 = vadd.f32 %v3693, 1e-08
        %v3730 = vadd.f32 %v3700, 1e-08
        %v3731 = vadd.f32 %v3707, 1e-08
        %v3732 = vadd.f32 %v3714, 1e-08
        %v3733 = vadd.f32 %v3721, 1e-08
        %v3734 = vadd.f32 %v3728, 1e-08
        %v3735 = vrcp.pop %v3729
        %v3736 = vmul.f32 %v3633, %v3735
        %v3737 = vrcp.pop %v3730
        %v3738 = vmul.f32 %v3634, %v3737
        %v3739 = vrcp.pop %v3731
        %v3740 = vmul.f32 %v3635, %v3739
        %v3741 = vrcp.pop %v3732
        %v3742 = vmul.f32 %v3636, %v3741
        %v3743 = vrcp.pop %v3733
        %v3744 = vmul.f32 %v3637, %v3743
        %v3745 = vrcp.pop %v3734
        %v3746 = vmul.f32 %v3638, %v3745
        %v3747 = vld [vmem:[%s5 + $0x258] sm:$0xff]
        %v3748 = vld [vmem:[%s5 + $0x260] sm:$0xff]
        %v3749 = vld [vmem:[%s5 + $0x268] sm:$0xff]
        %v3750 = vld [vmem:[%s5 + $0x270] sm:$0xff]
        %v3751 = vld [vmem:[%s5 + $0x278] sm:$0xff]
        %v3752 = vld [vmem:[%s5 + $0x280] sm:$0xff]
        %v3753 = vld [vmem:[%s5 + $0x288] sm:$0xff]
        %v3754 = vld [vmem:[%s5 + $0x290] sm:$0xff]
        %v3756 = vsel %vm565, %v3605, 0
        %v3759 = vsel %vm565, %v3610, 0
        %v3762 = vsel %vm565, %v3615, 0
        %v3765 = vsel %vm565, %v3620, 0
        %v3768 = vsel %vm565, %v3625, 0
        %v3771 = vsel %vm565, %v3630, 0
        %3773 = vmatprep.subr.mxu0 0.0
        %3774 = vmatpush1.msra.mxu0 %v3751
        %3775 = vmatprep.subr.mxu0 0.0
        %3776 = vmatpush1.msra.mxu0 %v3752
        %3777 = vmatprep.subr.mxu0 0.0
        %3778 = vmatpush1.msra.mxu0 %v3753
        %3779 = vmatprep.subr.mxu0 0.0
        %3780 = vmatpush1.msra.mxu0 %v3754
        %3781 = vmatprep.subr.mxu0 0.0
        %3782 = vmatpush1.msra.mxu0 0.0
        %3783 = vmatprep.subr.mxu0 0.0
        %3784 = vmatpush1.msra.mxu0 0.0
        %3785 = vmatprep.subr.mxu0 0.0
        %3786 = vmatpush1.msra.mxu0 0.0
        %3787 = vmatprep.subr.mxu0 0.0
        %3788 = vmatpush1.msra.mxu0 0.0
        %3789 = vmatprep.subr.mxu0 0.0
        %3790 = vmatpush1.msra.mxu0 0.0
        %3791 = vmatprep.subr.mxu0 0.0
        %3792 = vmatpush1.msra.mxu0 0.0
        %3793 = vmatprep.subr.mxu0 0.0
        %3794 = vmatpush1.msra.mxu0 0.0
        %3795 = vmatprep.subr.mxu0 0.0
        %3796 = vmatpush1.msra.mxu0 0.0
        %3797 = vmatprep.subr.mxu0 0.0
        %3798 = vmatpush1.msra.mxu0 0.0
        %3799 = vmatprep.subr.mxu0 0.0
        %3800 = vmatpush1.msra.mxu0 0.0
        %3801 = vmatprep.subr.mxu0 0.0
        %3802 = vmatpush1.msra.mxu0 0.0
        %3803 = vmatprep.subr.mxu0 0.0
        %3804 = vmatpush1.msra.mxu0 0.0
        %3805 = vmatprep.subr.mxu0 0.0
        %3806 = vmatpush1.msra.mxu0 0.0
        %3807 = vmatprep.subr.mxu0 0.0
        %3808 = vmatpush1.msra.mxu0 0.0
        %3809 = vmatprep.subr.mxu0 0.0
        %3810 = vmatpush1.msra.mxu0 0.0
        %3811 = vmatprep.subr.mxu0 0.0
        %3812 = vmatpush1.msra.mxu0 0.0
        %3813 = vmatprep.subr.mxu0 0.0
        %3814 = vmatpush1.msra.mxu0 0.0
        %3815 = vmatprep.subr.mxu0 0.0
        %3816 = vmatpush1.msra.mxu0 0.0
        %3817 = vmatprep.subr.mxu0 0.0
        %3818 = vmatpush1.msra.mxu0 0.0
        %3819 = vmatprep.subr.mxu0 0.0
        %3820 = vmatpush1.msra.mxu0 0.0
        %3821 = vmatprep.subr.mxu0 0.0
        %3822 = vmatpush1.msra.mxu0 0.0
        %3823 = vmatprep.subr.mxu0 0.0
        %3824 = vmatpush1.msra.mxu0 0.0
        %3825 = vmatprep.subr.mxu0 0.0
        %3826 = vmatpush1.msra.mxu0 0.0
        %3827 = vmatprep.subr.mxu0 0.0
        %3828 = vmatpush1.msra.mxu0 0.0
        %3829 = vmatprep.subr.mxu0 0.0
        %3830 = vmatpush1.msra.mxu0 0.0
        %3831 = vmatprep.subr.mxu0 0.0
        %3832 = vmatpush1.msra.mxu0 0.0
        %3833 = vmatprep.subr.mxu0 0.0
        %3834 = vmatpush1.msra.mxu0 0.0
        %3835 = vmatprep.subr.mxu0 0.0
        %3836 = vmatpush1.msra.mxu0 0.0
        %3837 = vmatprep.mubr.f32.mxu0 0.0
        %3838 = vmatmul.mubr.f32.gmra.mrb[0].mxu0 %v3756
        %v3839 = vpop.f32.mrb[0].mxu0
        %v3840 = vadd.f32 0.0, %v3839
        %v3841 = vpop.f32.mrb[0].mxu0
        %3842 = vmatprep.mubr.f32.mxu0 0.0
        %3843 = vmatmul.mubr.f32.gmra.mrb[0].mxu0 %v3759
        %v3844 = vpop.f32.mrb[0].mxu0
        %v3845 = vadd.f32 0.0, %v3844
        %v3846 = vpop.f32.mrb[0].mxu0
        %3847 = vmatprep.mubr.f32.mxu0 0.0
        %3848 = vmatmul.mubr.f32.gmra.mrb[0].mxu0 %v3762
        %v3849 = vpop.f32.mrb[0].mxu0
        %v3850 = vadd.f32 0.0, %v3849
        %v3851 = vpop.f32.mrb[0].mxu0
        %3852 = vmatprep.mubr.f32.mxu0 0.0
        %3853 = vmatmul.mubr.f32.gmra.mrb[0].mxu0 %v3765
        %v3854 = vpop.f32.mrb[0].mxu0
        %v3855 = vadd.f32 0.0, %v3854
        %v3856 = vpop.f32.mrb[0].mxu0
        %3857 = vmatprep.mubr.f32.mxu0 0.0
        %3858 = vmatmul.mubr.f32.gmra.mrb[0].mxu0 %v3768
        %v3859 = vpop.f32.mrb[0].mxu0
        %v3860 = vadd.f32 0.0, %v3859
        %v3861 = vpop.f32.mrb[0].mxu0
        %3862 = vmatprep.mubr.f32.mxu0 0.0
        %3863 = vmatmul.mubr.f32.gmra.mrb[0].mxu0 %v3771
        %v3864 = vpop.f32.mrb[0].mxu0
        %v3865 = vadd.f32 0.0, %v3864
        %v3866 = vpop.f32.mrb[0].mxu0
        %3867 = vdwg.mxu0
        %v3869 = vsel %vm565, %v3575, 0
        %v3872 = vsel %vm565, %v3580, 0
        %v3875 = vsel %vm565, %v3585, 0
        %v3878 = vsel %vm565, %v3590, 0
        %v3881 = vsel %vm565, %v3595, 0
        %v3884 = vsel %vm565, %v3600, 0
        %3886 = vmatprep.subr.mxu0 0.0
        %3887 = vmatpush1.msra.mxu0 %v3747
        %3888 = vmatprep.subr.mxu0 0.0
        %3889 = vmatpush1.msra.mxu0 %v3748
        %3890 = vmatprep.subr.mxu0 0.0
        %3891 = vmatpush1.msra.mxu0 %v3749
        %3892 = vmatprep.subr.mxu0 0.0
        %3893 = vmatpush1.msra.mxu0 %v3750
        %3894 = vmatprep.subr.mxu0 0.0
        %3895 = vmatpush1.msra.mxu0 0.0
        %3896 = vmatprep.subr.mxu0 0.0
        %3897 = vmatpush1.msra.mxu0 0.0
        %3898 = vmatprep.subr.mxu0 0.0
        %3899 = vmatpush1.msra.mxu0 0.0
        %3900 = vmatprep.subr.mxu0 0.0
        %3901 = vmatpush1.msra.mxu0 0.0
        %3902 = vmatprep.subr.mxu0 0.0
        %3903 = vmatpush1.msra.mxu0 0.0
        %3904 = vmatprep.subr.mxu0 0.0
        %3905 = vmatpush1.msra.mxu0 0.0
        %3906 = vmatprep.subr.mxu0 0.0
        %3907 = vmatpush1.msra.mxu0 0.0
        %3908 = vmatprep.subr.mxu0 0.0
        %3909 = vmatpush1.msra.mxu0 0.0
        %3910 = vmatprep.subr.mxu0 0.0
        %3911 = vmatpush1.msra.mxu0 0.0
        %3912 = vmatprep.subr.mxu0 0.0
        %3913 = vmatpush1.msra.mxu0 0.0
        %3914 = vmatprep.subr.mxu0 0.0
        %3915 = vmatpush1.msra.mxu0 0.0
        %3916 = vmatprep.subr.mxu0 0.0
        %3917 = vmatpush1.msra.mxu0 0.0
        %3918 = vmatprep.subr.mxu0 0.0
        %3919 = vmatpush1.msra.mxu0 0.0
        %3920 = vmatprep.subr.mxu0 0.0
        %3921 = vmatpush1.msra.mxu0 0.0
        %3922 = vmatprep.subr.mxu0 0.0
        %3923 = vmatpush1.msra.mxu0 0.0
        %3924 = vmatprep.subr.mxu0 0.0
        %3925 = vmatpush1.msra.mxu0 0.0
        %3926 = vmatprep.subr.mxu0 0.0
        %3927 = vmatpush1.msra.mxu0 0.0
        %3928 = vmatprep.subr.mxu0 0.0
        %3929 = vmatpush1.msra.mxu0 0.0
        %3930 = vmatprep.subr.mxu0 0.0
        %3931 = vmatpush1.msra.mxu0 0.0
        %3932 = vmatprep.subr.mxu0 0.0
        %3933 = vmatpush1.msra.mxu0 0.0
        %3934 = vmatprep.subr.mxu0 0.0
        %3935 = vmatpush1.msra.mxu0 0.0
        %3936 = vmatprep.subr.mxu0 0.0
        %3937 = vmatpush1.msra.mxu0 0.0
        %3938 = vmatprep.subr.mxu0 0.0
        %3939 = vmatpush1.msra.mxu0 0.0
        %3940 = vmatprep.subr.mxu0 0.0
        %3941 = vmatpush1.msra.mxu0 0.0
        %3942 = vmatprep.subr.mxu0 0.0
        %3943 = vmatpush1.msra.mxu0 0.0
        %3944 = vmatprep.subr.mxu0 0.0
        %3945 = vmatpush1.msra.mxu0 0.0
        %3946 = vmatprep.subr.mxu0 0.0
        %3947 = vmatpush1.msra.mxu0 0.0
        %3948 = vmatprep.subr.mxu0 0.0
        %3949 = vmatpush1.msra.mxu0 0.0
        %3950 = vmatprep.mubr.f32.mxu0 0.0
        %3951 = vmatmul.mubr.f32.gmra.mrb[0].mxu0 %v3869
        %v3952 = vpop.f32.mrb[0].mxu0
        %v3953 = vadd.f32 %v3840, %v3952
        %v3954 = vpop.f32.mrb[0].mxu0
        %3955 = vmatprep.mubr.f32.mxu0 0.0
        %3956 = vmatmul.mubr.f32.gmra.mrb[0].mxu0 %v3872
        %v3957 = vpop.f32.mrb[0].mxu0
        %v3958 = vadd.f32 %v3845, %v3957
        %v3959 = vpop.f32.mrb[0].mxu0
        %3960 = vmatprep.mubr.f32.mxu0 0.0
        %3961 = vmatmul.mubr.f32.gmra.mrb[0].mxu0 %v3875
        %v3962 = vpop.f32.mrb[0].mxu0
        %v3963 = vadd.f32 %v3850, %v3962
        %v3964 = vpop.f32.mrb[0].mxu0
        %3965 = vmatprep.mubr.f32.mxu0 0.0
        %3966 = vmatmul.mubr.f32.gmra.mrb[0].mxu0 %v3878
        %v3967 = vpop.f32.mrb[0].mxu0
        %v3968 = vadd.f32 %v3855, %v3967
        %v3969 = vpop.f32.mrb[0].mxu0
        %3970 = vmatprep.mubr.f32.mxu0 0.0
        %3971 = vmatmul.mubr.f32.gmra.mrb[0].mxu0 %v3881
        %v3972 = vpop.f32.mrb[0].mxu0
        %v3973 = vadd.f32 %v3860, %v3972
        %v3974 = vpop.f32.mrb[0].mxu0
        %3975 = vmatprep.mubr.f32.mxu0 0.0
        %3976 = vmatmul.mubr.f32.gmra.mrb[0].mxu0 %v3884
        %v3977 = vpop.f32.mrb[0].mxu0
        %v3978 = vadd.f32 %v3865, %v3977
        %v3979 = vpop.f32.mrb[0].mxu0
        %3980 = vdwg.mxu0
        %v3981 = vld [vmem:[%s5 + $0x2a0] sm:$0xf]
        %v3983 = vsel %vm1098, %v3981, 0
        %3985 = vmatprep.subr.mxu0 0.0
        %3986 = vmatpush1.msra.mxu0 %v3983
        %3987 = vmatprep.subr.mxu0 0.0
        %3988 = vmatpush1.msra.mxu0 0.0
        %3989 = vmatprep.subr.mxu0 0.0
        %3990 = vmatpush1.msra.mxu0 0.0
        %3991 = vmatprep.subr.mxu0 0.0
        %3992 = vmatpush1.msra.mxu0 0.0
        %3993 = vmatprep.subr.mxu0 0.0
        %3994 = vmatpush1.msra.mxu0 0.0
        %3995 = vmatprep.subr.mxu0 0.0
        %3996 = vmatpush1.msra.mxu0 0.0
        %3997 = vmatprep.subr.mxu0 0.0
        %3998 = vmatpush1.msra.mxu0 0.0
        %3999 = vmatprep.subr.mxu0 0.0
        %4000 = vmatpush1.msra.mxu0 0.0
        %4001 = vmatprep.subr.mxu0 0.0
        %4002 = vmatpush1.msra.mxu0 0.0
        %4003 = vmatprep.subr.mxu0 0.0
        %4004 = vmatpush1.msra.mxu0 0.0
        %4005 = vmatprep.subr.mxu0 0.0
        %4006 = vmatpush1.msra.mxu0 0.0
        %4007 = vmatprep.subr.mxu0 0.0
        %4008 = vmatpush1.msra.mxu0 0.0
        %4009 = vmatprep.subr.mxu0 0.0
        %4010 = vmatpush1.msra.mxu0 0.0
        %4011 = vmatprep.subr.mxu0 0.0
        %4012 = vmatpush1.msra.mxu0 0.0
        %4013 = vmatprep.subr.mxu0 0.0
        %4014 = vmatpush1.msra.mxu0 0.0
        %4015 = vmatprep.subr.mxu0 0.0
        %4016 = vmatpush1.msra.mxu0 0.0
        %4017 = vmatprep.subr.mxu0 0.0
        %4018 = vmatpush1.msra.mxu0 0.0
        %4019 = vmatprep.subr.mxu0 0.0
        %4020 = vmatpush1.msra.mxu0 0.0
        %4021 = vmatprep.subr.mxu0 0.0
        %4022 = vmatpush1.msra.mxu0 0.0
        %4023 = vmatprep.subr.mxu0 0.0
        %4024 = vmatpush1.msra.mxu0 0.0
        %4025 = vmatprep.subr.mxu0 0.0
        %4026 = vmatpush1.msra.mxu0 0.0
        %4027 = vmatprep.subr.mxu0 0.0
        %4028 = vmatpush1.msra.mxu0 0.0
        %4029 = vmatprep.subr.mxu0 0.0
        %4030 = vmatpush1.msra.mxu0 0.0
        %4031 = vmatprep.subr.mxu0 0.0
        %4032 = vmatpush1.msra.mxu0 0.0
        %4033 = vmatprep.subr.mxu0 0.0
        %4034 = vmatpush1.msra.mxu0 0.0
        %4035 = vmatprep.subr.mxu0 0.0
        %4036 = vmatpush1.msra.mxu0 0.0
        %4037 = vmatprep.subr.mxu0 0.0
        %4038 = vmatpush1.msra.mxu0 0.0
        %4039 = vmatprep.subr.mxu0 0.0
        %4040 = vmatpush1.msra.mxu0 0.0
        %4041 = vmatprep.subr.mxu0 0.0
        %4042 = vmatpush1.msra.mxu0 0.0
        %4043 = vmatprep.subr.mxu0 0.0
        %4044 = vmatpush1.msra.mxu0 0.0
        %4045 = vmatprep.subr.mxu0 0.0
        %4046 = vmatpush1.msra.mxu0 0.0
        %4047 = vmatprep.subr.mxu0 0.0
        %4048 = vmatpush1.msra.mxu0 0.0
        %4049 = vmatprep.mubr.f32.mxu0 0.0
        %4050 = vmatmul.mubr.f32.gmra.mrb[0].mxu0 %v1081
        %v4051 = vpop.f32.mrb[0].mxu0
        %v4052 = vadd.f32 0.0, %v4051
        %v4053 = vpop.f32.mrb[0].mxu0
        %4054 = vmatprep.mubr.f32.mxu0 0.0
        %4055 = vmatmul.mubr.f32.gmra.mrb[0].mxu0 %v1084
        %v4056 = vpop.f32.mrb[0].mxu0
        %v4057 = vadd.f32 0.0, %v4056
        %v4058 = vpop.f32.mrb[0].mxu0
        %4059 = vmatprep.mubr.f32.mxu0 0.0
        %4060 = vmatmul.mubr.f32.gmra.mrb[0].mxu0 %v1087
        %v4061 = vpop.f32.mrb[0].mxu0
        %v4062 = vadd.f32 0.0, %v4061
        %v4063 = vpop.f32.mrb[0].mxu0
        %4064 = vmatprep.mubr.f32.mxu0 0.0
        %4065 = vmatmul.mubr.f32.gmra.mrb[0].mxu0 %v1090
        %v4066 = vpop.f32.mrb[0].mxu0
        %v4067 = vadd.f32 0.0, %v4066
        %v4068 = vpop.f32.mrb[0].mxu0
        %4069 = vmatprep.mubr.f32.mxu0 0.0
        %4070 = vmatmul.mubr.f32.gmra.mrb[0].mxu0 %v1093
        %v4071 = vpop.f32.mrb[0].mxu0
        %v4072 = vadd.f32 0.0, %v4071
        %v4073 = vpop.f32.mrb[0].mxu0
        %4074 = vmatprep.mubr.f32.mxu0 0.0
        %4075 = vmatmul.mubr.f32.gmra.mrb[0].mxu0 %v1096
        %v4076 = vpop.f32.mrb[0].mxu0
        %v4077 = vadd.f32 0.0, %v4076
        %v4078 = vpop.f32.mrb[0].mxu0
        %4079 = vdwg.mxu0
        %v4080 = vadd.f32 %v3953, %v4052
        %v4081 = vadd.f32 %v3958, %v4057
        %v4082 = vadd.f32 %v3963, %v4062
        %v4083 = vadd.f32 %v3968, %v4067
        %v4084 = vadd.f32 %v3973, %v4072
        %v4085 = vadd.f32 %v3978, %v4077
        %v4086 = vld [vmem:[%s5 + $0x298] sm:$0x1]
        %v4087 = vlaneseq
        %v4088 = vshrl.u32 %v4087, 7
        %v4089 = vsub.s32 0, %v4088
        %v4090 = vrot.slane %v4086, %v4089
        %v4091 = vmul.f32 %v3671, %v4090
        %v4092 = vmul.f32 %v3674, %v4090
        %v4093 = vmul.f32 %v3677, %v4090
        %v4094 = vmul.f32 %v3680, %v4090
        %v4095 = vmul.f32 %v3683, %v4090
        %v4096 = vmul.f32 %v3686, %v4090
        %v4097 = vadd.f32 %v4080, %v4091
        %v4098 = vadd.f32 %v4081, %v4092
        %v4099 = vadd.f32 %v4082, %v4093
        %v4100 = vadd.f32 %v4083, %v4094
        %v4101 = vadd.f32 %v4084, %v4095
        %v4102 = vadd.f32 %v4085, %v4096
        %v4103 = vld [vmem:[%s5 + $0x2a8] sm:$0x1]
        %v4104 = vlaneseq
        %v4105 = vshrl.u32 %v4104, 7
        %v4106 = vsub.s32 0, %v4105
        %v4107 = vrot.slane %v4103, %v4106
        %v4108 = vadd.f32 %v4097, %v4107
        %v4109 = vadd.f32 %v4098, %v4107
        %v4110 = vadd.f32 %v4099, %v4107
        %v4111 = vadd.f32 %v4100, %v4107
        %v4112 = vadd.f32 %v4101, %v4107
        %v4113 = vadd.f32 %v4102, %v4107
        %v4114 = vxor.u32 %v4108, 2147483648
        %v4115 = vxor.u32 %v4109, 2147483648
        %v4116 = vxor.u32 %v4110, 2147483648
        %v4117 = vxor.u32 %v4111, 2147483648
        %v4118 = vxor.u32 %v4112, 2147483648
        %v4119 = vxor.u32 %v4113, 2147483648
        %v4120 = vmul.f32 %v4114, 1.442695
        %v4121 = vpow.pop %v4120
        %v4122 = vmul.f32 %v4115, 1.442695
        %v4123 = vpow.pop %v4122
        %v4124 = vmul.f32 %v4116, 1.442695
        %v4125 = vpow.pop %v4124
        %v4126 = vmul.f32 %v4117, 1.442695
        %v4127 = vpow.pop %v4126
        %v4128 = vmul.f32 %v4118, 1.442695
        %v4129 = vpow.pop %v4128
        %v4130 = vmul.f32 %v4119, 1.442695
        %v4131 = vpow.pop %v4130
        %v4132 = vadd.f32 %v4121, 1.0
        %v4133 = vadd.f32 %v4123, 1.0
        %v4134 = vadd.f32 %v4125, 1.0
        %v4135 = vadd.f32 %v4127, 1.0
        %v4136 = vadd.f32 %v4129, 1.0
        %v4137 = vadd.f32 %v4131, 1.0
        %v4138 = vrcp.pop %v4132
        %v4139 = vmul.f32 1.0, %v4138
        %v4140 = vrcp.pop %v4133
        %v4141 = vmul.f32 1.0, %v4140
        %v4142 = vrcp.pop %v4134
        %v4143 = vmul.f32 1.0, %v4142
        %v4144 = vrcp.pop %v4135
        %v4145 = vmul.f32 1.0, %v4144
        %v4146 = vrcp.pop %v4136
        %v4147 = vmul.f32 1.0, %v4146
        %v4148 = vrcp.pop %v4137
        %v4149 = vmul.f32 1.0, %v4148
        %v4150 = vmul.f32 %v4108, %v4139
        %v4151 = vmul.f32 %v4109, %v4141
        %v4152 = vmul.f32 %v4110, %v4143
        %v4153 = vmul.f32 %v4111, %v4145
        %v4154 = vmul.f32 %v4112, %v4147
        %v4155 = vmul.f32 %v4113, %v4149
        %v4156 = vld [vmem:[%s5 + $0x2b0] sm:$0xff]
        %v4157 = vld [vmem:[%s5 + $0x2b8] sm:$0xff]
        %v4158 = vld [vmem:[%s5 + $0x2c0] sm:$0xff]
        %v4159 = vld [vmem:[%s5 + $0x2c8] sm:$0xff]
        %v4160 = vld [vmem:[%s5 + $0x2d0] sm:$0x1]
        %v4161 = vlaneseq
        %v4162 = vshrl.u32 %v4161, 7
        %v4163 = vsub.s32 0, %v4162
        %v4164 = vrot.slane %v4160, %v4163
        %v4166 = vsel %vm565, %v4150, 0
        %v4169 = vsel %vm565, %v4151, 0
        %v4172 = vsel %vm565, %v4152, 0
        %v4175 = vsel %vm565, %v4153, 0
        %v4178 = vsel %vm565, %v4154, 0
        %v4181 = vsel %vm565, %v4155, 0
        %4183 = vmatprep.subr.mxu0 0.0
        %4184 = vmatpush1.msra.mxu0 %v4156
        %4185 = vmatprep.subr.mxu0 0.0
        %4186 = vmatpush1.msra.mxu0 %v4157
        %4187 = vmatprep.subr.mxu0 0.0
        %4188 = vmatpush1.msra.mxu0 %v4158
        %4189 = vmatprep.subr.mxu0 0.0
        %4190 = vmatpush1.msra.mxu0 %v4159
        %4191 = vmatprep.subr.mxu0 0.0
        %4192 = vmatpush1.msra.mxu0 0.0
        %4193 = vmatprep.subr.mxu0 0.0
        %4194 = vmatpush1.msra.mxu0 0.0
        %4195 = vmatprep.subr.mxu0 0.0
        %4196 = vmatpush1.msra.mxu0 0.0
        %4197 = vmatprep.subr.mxu0 0.0
        %4198 = vmatpush1.msra.mxu0 0.0
        %4199 = vmatprep.subr.mxu0 0.0
        %4200 = vmatpush1.msra.mxu0 0.0
        %4201 = vmatprep.subr.mxu0 0.0
        %4202 = vmatpush1.msra.mxu0 0.0
        %4203 = vmatprep.subr.mxu0 0.0
        %4204 = vmatpush1.msra.mxu0 0.0
        %4205 = vmatprep.subr.mxu0 0.0
        %4206 = vmatpush1.msra.mxu0 0.0
        %4207 = vmatprep.subr.mxu0 0.0
        %4208 = vmatpush1.msra.mxu0 0.0
        %4209 = vmatprep.subr.mxu0 0.0
        %4210 = vmatpush1.msra.mxu0 0.0
        %4211 = vmatprep.subr.mxu0 0.0
        %4212 = vmatpush1.msra.mxu0 0.0
        %4213 = vmatprep.subr.mxu0 0.0
        %4214 = vmatpush1.msra.mxu0 0.0
        %4215 = vmatprep.subr.mxu0 0.0
        %4216 = vmatpush1.msra.mxu0 0.0
        %4217 = vmatprep.subr.mxu0 0.0
        %4218 = vmatpush1.msra.mxu0 0.0
        %4219 = vmatprep.subr.mxu0 0.0
        %4220 = vmatpush1.msra.mxu0 0.0
        %4221 = vmatprep.subr.mxu0 0.0
        %4222 = vmatpush1.msra.mxu0 0.0
        %4223 = vmatprep.subr.mxu0 0.0
        %4224 = vmatpush1.msra.mxu0 0.0
        %4225 = vmatprep.subr.mxu0 0.0
        %4226 = vmatpush1.msra.mxu0 0.0
        %4227 = vmatprep.subr.mxu0 0.0
        %4228 = vmatpush1.msra.mxu0 0.0
        %4229 = vmatprep.subr.mxu0 0.0
        %4230 = vmatpush1.msra.mxu0 0.0
        %4231 = vmatprep.subr.mxu0 0.0
        %4232 = vmatpush1.msra.mxu0 0.0
        %4233 = vmatprep.subr.mxu0 0.0
        %4234 = vmatpush1.msra.mxu0 0.0
        %4235 = vmatprep.subr.mxu0 0.0
        %4236 = vmatpush1.msra.mxu0 0.0
        %4237 = vmatprep.subr.mxu0 0.0
        %4238 = vmatpush1.msra.mxu0 0.0
        %4239 = vmatprep.subr.mxu0 0.0
        %4240 = vmatpush1.msra.mxu0 0.0
        %4241 = vmatprep.subr.mxu0 0.0
        %4242 = vmatpush1.msra.mxu0 0.0
        %4243 = vmatprep.subr.mxu0 0.0
        %4244 = vmatpush1.msra.mxu0 0.0
        %4245 = vmatprep.subr.mxu0 0.0
        %4246 = vmatpush1.msra.mxu0 0.0
        %4247 = vmatprep.mubr.f32.mxu0 0.0
        %4248 = vmatmul.mubr.f32.gmra.mrb[0].mxu0 %v4166
        %v4249 = vpop.f32.mrb[0].mxu0
        %v4250 = vadd.f32 %v4164, %v4249
        %v4251 = vpop.f32.mrb[0].mxu0
        %4252 = vmatprep.mubr.f32.mxu0 0.0
        %4253 = vmatmul.mubr.f32.gmra.mrb[0].mxu0 %v4169
        %v4254 = vpop.f32.mrb[0].mxu0
        %v4255 = vadd.f32 %v4164, %v4254
        %v4256 = vpop.f32.mrb[0].mxu0
        %4257 = vmatprep.mubr.f32.mxu0 0.0
        %4258 = vmatmul.mubr.f32.gmra.mrb[0].mxu0 %v4172
        %v4259 = vpop.f32.mrb[0].mxu0
        %v4260 = vadd.f32 %v4164, %v4259
        %v4261 = vpop.f32.mrb[0].mxu0
        %4262 = vmatprep.mubr.f32.mxu0 0.0
        %4263 = vmatmul.mubr.f32.gmra.mrb[0].mxu0 %v4175
        %v4264 = vpop.f32.mrb[0].mxu0
        %v4265 = vadd.f32 %v4164, %v4264
        %v4266 = vpop.f32.mrb[0].mxu0
        %4267 = vmatprep.mubr.f32.mxu0 0.0
        %4268 = vmatmul.mubr.f32.gmra.mrb[0].mxu0 %v4178
        %v4269 = vpop.f32.mrb[0].mxu0
        %v4270 = vadd.f32 %v4164, %v4269
        %v4271 = vpop.f32.mrb[0].mxu0
        %4272 = vmatprep.mubr.f32.mxu0 0.0
        %4273 = vmatmul.mubr.f32.gmra.mrb[0].mxu0 %v4181
        %v4274 = vpop.f32.mrb[0].mxu0
        %v4275 = vadd.f32 %v4164, %v4274
        %v4276 = vpop.f32.mrb[0].mxu0
        %4277 = vdwg.mxu0
        %v4278 = vxor.u32 %v4250, 2147483648
        %v4279 = vxor.u32 %v4255, 2147483648
        %v4280 = vxor.u32 %v4260, 2147483648
        %v4281 = vxor.u32 %v4265, 2147483648
        %v4282 = vxor.u32 %v4270, 2147483648
        %v4283 = vxor.u32 %v4275, 2147483648
        %v4284 = vmul.f32 %v4278, 1.442695
        %v4285 = vpow.pop %v4284
        %v4286 = vmul.f32 %v4279, 1.442695
        %v4287 = vpow.pop %v4286
        %v4288 = vmul.f32 %v4280, 1.442695
        %v4289 = vpow.pop %v4288
        %v4290 = vmul.f32 %v4281, 1.442695
        %v4291 = vpow.pop %v4290
        %v4292 = vmul.f32 %v4282, 1.442695
        %v4293 = vpow.pop %v4292
        %v4294 = vmul.f32 %v4283, 1.442695
        %v4295 = vpow.pop %v4294
        %v4296 = vadd.f32 %v4285, 1.0
        %v4297 = vadd.f32 %v4287, 1.0
        %v4298 = vadd.f32 %v4289, 1.0
        %v4299 = vadd.f32 %v4291, 1.0
        %v4300 = vadd.f32 %v4293, 1.0
        %v4301 = vadd.f32 %v4295, 1.0
        %v4302 = vrcp.pop %v4296
        %v4303 = vmul.f32 1.0, %v4302
        %v4304 = vrcp.pop %v4297
        %v4305 = vmul.f32 1.0, %v4304
        %v4306 = vrcp.pop %v4298
        %v4307 = vmul.f32 1.0, %v4306
        %v4308 = vrcp.pop %v4299
        %v4309 = vmul.f32 1.0, %v4308
        %v4310 = vrcp.pop %v4300
        %v4311 = vmul.f32 1.0, %v4310
        %v4312 = vrcp.pop %v4301
        %v4313 = vmul.f32 1.0, %v4312
        %v4314 = vmul.f32 %v4250, %v4303
        %v4315 = vmul.f32 %v4255, %v4305
        %v4316 = vmul.f32 %v4260, %v4307
        %v4317 = vmul.f32 %v4265, %v4309
        %v4318 = vmul.f32 %v4270, %v4311
        %v4319 = vmul.f32 %v4275, %v4313
        %v4320 = vld [vmem:[%s5 + $0x2d8] sm:$0xff]
        %v4321 = vld [vmem:[%s5 + $0x2e0] sm:$0xff]
        %v4322 = vld [vmem:[%s5 + $0x2e8] sm:$0xff]
        %v4323 = vld [vmem:[%s5 + $0x2f0] sm:$0xff]
        %v4324 = vld [vmem:[%s5 + $0x2f8] sm:$0x1]
        %v4325 = vlaneseq
        %v4326 = vshrl.u32 %v4325, 7
        %v4327 = vsub.s32 0, %v4326
        %v4328 = vrot.slane %v4324, %v4327
        %v4330 = vsel %vm565, %v4314, 0
        %v4333 = vsel %vm565, %v4315, 0
        %v4336 = vsel %vm565, %v4316, 0
        %v4339 = vsel %vm565, %v4317, 0
        %v4342 = vsel %vm565, %v4318, 0
        %v4345 = vsel %vm565, %v4319, 0
        %4347 = vmatprep.subr.mxu0 0.0
        %4348 = vmatpush1.msra.mxu0 %v4320
        %4349 = vmatprep.subr.mxu0 0.0
        %4350 = vmatpush1.msra.mxu0 %v4321
        %4351 = vmatprep.subr.mxu0 0.0
        %4352 = vmatpush1.msra.mxu0 %v4322
        %4353 = vmatprep.subr.mxu0 0.0
        %4354 = vmatpush1.msra.mxu0 %v4323
        %4355 = vmatprep.subr.mxu0 0.0
        %4356 = vmatpush1.msra.mxu0 0.0
        %4357 = vmatprep.subr.mxu0 0.0
        %4358 = vmatpush1.msra.mxu0 0.0
        %4359 = vmatprep.subr.mxu0 0.0
        %4360 = vmatpush1.msra.mxu0 0.0
        %4361 = vmatprep.subr.mxu0 0.0
        %4362 = vmatpush1.msra.mxu0 0.0
        %4363 = vmatprep.subr.mxu0 0.0
        %4364 = vmatpush1.msra.mxu0 0.0
        %4365 = vmatprep.subr.mxu0 0.0
        %4366 = vmatpush1.msra.mxu0 0.0
        %4367 = vmatprep.subr.mxu0 0.0
        %4368 = vmatpush1.msra.mxu0 0.0
        %4369 = vmatprep.subr.mxu0 0.0
        %4370 = vmatpush1.msra.mxu0 0.0
        %4371 = vmatprep.subr.mxu0 0.0
        %4372 = vmatpush1.msra.mxu0 0.0
        %4373 = vmatprep.subr.mxu0 0.0
        %4374 = vmatpush1.msra.mxu0 0.0
        %4375 = vmatprep.subr.mxu0 0.0
        %4376 = vmatpush1.msra.mxu0 0.0
        %4377 = vmatprep.subr.mxu0 0.0
        %4378 = vmatpush1.msra.mxu0 0.0
        %4379 = vmatprep.subr.mxu0 0.0
        %4380 = vmatpush1.msra.mxu0 0.0
        %4381 = vmatprep.subr.mxu0 0.0
        %4382 = vmatpush1.msra.mxu0 0.0
        %4383 = vmatprep.subr.mxu0 0.0
        %4384 = vmatpush1.msra.mxu0 0.0
        %4385 = vmatprep.subr.mxu0 0.0
        %4386 = vmatpush1.msra.mxu0 0.0
        %4387 = vmatprep.subr.mxu0 0.0
        %4388 = vmatpush1.msra.mxu0 0.0
        %4389 = vmatprep.subr.mxu0 0.0
        %4390 = vmatpush1.msra.mxu0 0.0
        %4391 = vmatprep.subr.mxu0 0.0
        %4392 = vmatpush1.msra.mxu0 0.0
        %4393 = vmatprep.subr.mxu0 0.0
        %4394 = vmatpush1.msra.mxu0 0.0
        %4395 = vmatprep.subr.mxu0 0.0
        %4396 = vmatpush1.msra.mxu0 0.0
        %4397 = vmatprep.subr.mxu0 0.0
        %4398 = vmatpush1.msra.mxu0 0.0
        %4399 = vmatprep.subr.mxu0 0.0
        %4400 = vmatpush1.msra.mxu0 0.0
        %4401 = vmatprep.subr.mxu0 0.0
        %4402 = vmatpush1.msra.mxu0 0.0
        %4403 = vmatprep.subr.mxu0 0.0
        %4404 = vmatpush1.msra.mxu0 0.0
        %4405 = vmatprep.subr.mxu0 0.0
        %4406 = vmatpush1.msra.mxu0 0.0
        %4407 = vmatprep.subr.mxu0 0.0
        %4408 = vmatpush1.msra.mxu0 0.0
        %4409 = vmatprep.subr.mxu0 0.0
        %4410 = vmatpush1.msra.mxu0 0.0
        %4411 = vmatprep.mubr.f32.mxu0 0.0
        %4412 = vmatmul.mubr.f32.gmra.mrb[0].mxu0 %v4330
        %v4413 = vpop.f32.mrb[0].mxu0
        %v4414 = vadd.f32 %v4328, %v4413
        %v4415 = vpop.f32.mrb[0].mxu0
        %4416 = vmatprep.mubr.f32.mxu0 0.0
        %4417 = vmatmul.mubr.f32.gmra.mrb[0].mxu0 %v4333
        %v4418 = vpop.f32.mrb[0].mxu0
        %v4419 = vadd.f32 %v4328, %v4418
        %v4420 = vpop.f32.mrb[0].mxu0
        %4421 = vmatprep.mubr.f32.mxu0 0.0
        %4422 = vmatmul.mubr.f32.gmra.mrb[0].mxu0 %v4336
        %v4423 = vpop.f32.mrb[0].mxu0
        %v4424 = vadd.f32 %v4328, %v4423
        %v4425 = vpop.f32.mrb[0].mxu0
        %4426 = vmatprep.mubr.f32.mxu0 0.0
        %4427 = vmatmul.mubr.f32.gmra.mrb[0].mxu0 %v4339
        %v4428 = vpop.f32.mrb[0].mxu0
        %v4429 = vadd.f32 %v4328, %v4428
        %v4430 = vpop.f32.mrb[0].mxu0
        %4431 = vmatprep.mubr.f32.mxu0 0.0
        %4432 = vmatmul.mubr.f32.gmra.mrb[0].mxu0 %v4342
        %v4433 = vpop.f32.mrb[0].mxu0
        %v4434 = vadd.f32 %v4328, %v4433
        %v4435 = vpop.f32.mrb[0].mxu0
        %4436 = vmatprep.mubr.f32.mxu0 0.0
        %4437 = vmatmul.mubr.f32.gmra.mrb[0].mxu0 %v4345
        %v4438 = vpop.f32.mrb[0].mxu0
        %v4439 = vadd.f32 %v4328, %v4438
        %v4440 = vpop.f32.mrb[0].mxu0
        %4441 = vdwg.mxu0
        %v4442 = vxor.u32 %v4414, 2147483648
        %v4443 = vxor.u32 %v4419, 2147483648
        %v4444 = vxor.u32 %v4424, 2147483648
        %v4445 = vxor.u32 %v4429, 2147483648
        %v4446 = vxor.u32 %v4434, 2147483648
        %v4447 = vxor.u32 %v4439, 2147483648
        %v4448 = vmul.f32 %v4442, 1.442695
        %v4449 = vpow.pop %v4448
        %v4450 = vmul.f32 %v4443, 1.442695
        %v4451 = vpow.pop %v4450
        %v4452 = vmul.f32 %v4444, 1.442695
        %v4453 = vpow.pop %v4452
        %v4454 = vmul.f32 %v4445, 1.442695
        %v4455 = vpow.pop %v4454
        %v4456 = vmul.f32 %v4446, 1.442695
        %v4457 = vpow.pop %v4456
        %v4458 = vmul.f32 %v4447, 1.442695
        %v4459 = vpow.pop %v4458
        %v4460 = vadd.f32 %v4449, 1.0
        %v4461 = vadd.f32 %v4451, 1.0
        %v4462 = vadd.f32 %v4453, 1.0
        %v4463 = vadd.f32 %v4455, 1.0
        %v4464 = vadd.f32 %v4457, 1.0
        %v4465 = vadd.f32 %v4459, 1.0
        %v4466 = vrcp.pop %v4460
        %v4467 = vmul.f32 1.0, %v4466
        %v4468 = vrcp.pop %v4461
        %v4469 = vmul.f32 1.0, %v4468
        %v4470 = vrcp.pop %v4462
        %v4471 = vmul.f32 1.0, %v4470
        %v4472 = vrcp.pop %v4463
        %v4473 = vmul.f32 1.0, %v4472
        %v4474 = vrcp.pop %v4464
        %v4475 = vmul.f32 1.0, %v4474
        %v4476 = vrcp.pop %v4465
        %v4477 = vmul.f32 1.0, %v4476
        %v4478 = vmul.f32 %v4414, %v4467
        %v4479 = vmul.f32 %v4419, %v4469
        %v4480 = vmul.f32 %v4424, %v4471
        %v4481 = vmul.f32 %v4429, %v4473
        %v4482 = vmul.f32 %v4434, %v4475
        %v4483 = vmul.f32 %v4439, %v4477
        %v4484 = vld [vmem:[%s5 + $0x300] sm:$0x1]
        %v4485 = vlaneseq
        %v4486 = vshrl.u32 %v4485, 7
        %v4487 = vsub.s32 0, %v4486
        %v4488 = vrot.slane %v4484, %v4487
        %v4489 = vmul.f32 %v4478, %v4488
        %v4490 = vmul.f32 %v4479, %v4488
        %v4491 = vmul.f32 %v4480, %v4488
        %v4492 = vmul.f32 %v4481, %v4488
        %v4493 = vmul.f32 %v4482, %v4488
        %v4494 = vmul.f32 %v4483, %v4488
        %v4495 = vsel %vm565, %v4489, 0.0
        %4496 = vadd.xlane.f32.xlu0 %v4495
        %v4497 = vpop.xlane.xlu0 %4496
        %v4498 = vsel %vm565, %v4490, 0.0
        %4499 = vadd.xlane.f32.xlu0 %v4498
        %v4500 = vpop.xlane.xlu0 %4499
        %v4501 = vsel %vm565, %v4491, 0.0
        %4502 = vadd.xlane.f32.xlu0 %v4501
        %v4503 = vpop.xlane.xlu0 %4502
        %v4504 = vsel %vm565, %v4492, 0.0
        %4505 = vadd.xlane.f32.xlu0 %v4504
        %v4506 = vpop.xlane.xlu0 %4505
        %v4507 = vsel %vm565, %v4493, 0.0
        %4508 = vadd.xlane.f32.xlu0 %v4507
        %v4509 = vpop.xlane.xlu0 %4508
        %v4510 = vsel %vm565, %v4494, 0.0
        %4511 = vadd.xlane.f32.xlu0 %v4510
        %v4512 = vpop.xlane.xlu0 %4511
        %v4513 = vtanh.pop %v4497
        %v4514 = vtanh.pop %v4500
        %v4515 = vtanh.pop %v4503
        %v4516 = vtanh.pop %v4506
        %v4517 = vtanh.pop %v4509
        %v4518 = vtanh.pop %v4512
        %v4519 = vmul.f32 %v3736, %v4513
        %v4520 = vmul.f32 %v3738, %v4514
        %v4521 = vmul.f32 %v3740, %v4515
        %v4522 = vmul.f32 %v3742, %v4516
        %v4523 = vmul.f32 %v3744, %v4517
        %v4524 = vmul.f32 %v3746, %v4518
        %v4525 = vsel %vm565, %v4314, %v4519
        %v4526 = vsel %vm565, %v4315, %v4520
        %v4527 = vsel %vm565, %v4316, %v4521
        %v4528 = vsel %vm565, %v4317, %v4522
        %v4529 = vsel %vm565, %v4318, %v4523
        %v4530 = vsel %vm565, %v4319, %v4524
        %4531 = vmatprep.subr.mxu0 0.0
        %4532 = vmatpush1.msra.mxu0 %v4525
        %4533 = vmatprep.subr.mxu0 0.0
        %4534 = vmatpush1.msra.mxu0 %v4526
        %4535 = vmatprep.subr.mxu0 0.0
        %4536 = vmatpush1.msra.mxu0 %v4527
        %4537 = vmatprep.subr.mxu0 0.0
        %4538 = vmatpush1.msra.mxu0 %v4528
        %4539 = vmatprep.subr.mxu0 0.0
        %4540 = vmatpush1.msra.mxu0 %v4529
        %4541 = vmatprep.subr.mxu0 0.0
        %4542 = vmatpush1.msra.mxu0 %v4530
        %4543 = vmatprep.subr.mxu0 0.0
        %4544 = vmatpush1.msra.mxu0 0.0
        %4545 = vmatprep.subr.mxu0 0.0
        %4546 = vmatpush1.msra.mxu0 0.0
        %4547 = vmatprep.subr.mxu0 0.0
        %4548 = vmatpush1.msra.mxu0 0.0
        %4549 = vmatprep.subr.mxu0 0.0
        %4550 = vmatpush1.msra.mxu0 0.0
        %4551 = vmatprep.subr.mxu0 0.0
        %4552 = vmatpush1.msra.mxu0 0.0
        %4553 = vmatprep.subr.mxu0 0.0
        %4554 = vmatpush1.msra.mxu0 0.0
        %4555 = vmatprep.subr.mxu0 0.0
        %4556 = vmatpush1.msra.mxu0 0.0
        %4557 = vmatprep.subr.mxu0 0.0
        %4558 = vmatpush1.msra.mxu0 0.0
        %4559 = vmatprep.subr.mxu0 0.0
        %4560 = vmatpush1.msra.mxu0 0.0
        %4561 = vmatprep.subr.mxu0 0.0
        %4562 = vmatpush1.msra.mxu0 0.0
        %4563 = vmatprep.subr.mxu0 0.0
        %4564 = vmatpush1.msra.mxu0 0.0
        %4565 = vmatprep.subr.mxu0 0.0
        %4566 = vmatpush1.msra.mxu0 0.0
        %4567 = vmatprep.subr.mxu0 0.0
        %4568 = vmatpush1.msra.mxu0 0.0
        %4569 = vmatprep.subr.mxu0 0.0
        %4570 = vmatpush1.msra.mxu0 0.0
        %4571 = vmatprep.subr.mxu0 0.0
        %4572 = vmatpush1.msra.mxu0 0.0
        %4573 = vmatprep.subr.mxu0 0.0
        %4574 = vmatpush1.msra.mxu0 0.0
        %4575 = vmatprep.subr.mxu0 0.0
        %4576 = vmatpush1.msra.mxu0 0.0
        %4577 = vmatprep.subr.mxu0 0.0
        %4578 = vmatpush1.msra.mxu0 0.0
        %4579 = vmatprep.subr.mxu0 0.0
        %4580 = vmatpush1.msra.mxu0 0.0
        %4581 = vmatprep.subr.mxu0 0.0
        %4582 = vmatpush1.msra.mxu0 0.0
        %4583 = vmatprep.subr.mxu0 0.0
        %4584 = vmatpush1.msra.mxu0 0.0
        %4585 = vmatprep.subr.mxu0 0.0
        %4586 = vmatpush1.msra.mxu0 0.0
        %4587 = vmatprep.subr.mxu0 0.0
        %4588 = vmatpush1.msra.mxu0 0.0
        %4589 = vmatprep.subr.mxu0 0.0
        %4590 = vmatpush1.msra.mxu0 0.0
        %4591 = vmatprep.subr.mxu0 0.0
        %4592 = vmatpush1.msra.mxu0 0.0
        %4593 = vmatprep.subr.mxu0 0.0
        %4594 = vmatpush1.msra.mxu0 0.0
        %4595 = vmatprep.mubr.f32.mxu0 0.0
        %4596 = vmatmul.mubr.f32.gmra.mrb[0].mxu0 %v1682
        %v4597 = vpop.f32.mrb[0].mxu0
        %v4598 = vadd.f32 0.0, %v4597
        %v4599 = vpop.f32.mrb[0].mxu0
        %4600 = vmatprep.mubr.f32.mxu0 0.0
        %4601 = vmatmul.mubr.f32.gmra.mrb[0].mxu0 %v1685
        %v4602 = vpop.f32.mrb[0].mxu0
        %v4603 = vadd.f32 0.0, %v4602
        %v4604 = vpop.f32.mrb[0].mxu0
        %4605 = vdwg.mxu0
        %v4606 = vmul.f32 %v4598, %v1765
        %v4607 = vmul.f32 %v4603, %v1770
        %4610 = vrot.lane.b32.xlu0 %v4606, 96
        %v4611 = vpop.permute.xlu0 %4610
        %4612 = vrot.lane.b32.xlu0 %v4607, 96
        %v4613 = vpop.permute.xlu0 %4612
        %v4616 = vadd.f32 %v3199, %v4611
        %v4617 = vadd.f32 %v3200, %v4613
        %v4618 = vld [vmem:[%s5 + $0x308] sm:$0xff]
        %v4619 = vld [vmem:[%s5 + $0x310] sm:$0xff]
        %v4620 = vld [vmem:[%s5 + $0x318] sm:$0xff]
        %v4621 = vld [vmem:[%s5 + $0x320] sm:$0xff]
        %v4622 = vld [vmem:[%s5 + $0x328] sm:$0xff]
        %v4623 = vld [vmem:[%s5 + $0x330] sm:$0xff]
        %v4624 = vld [vmem:[%s5 + $0x338] sm:$0xff]
        %v4625 = vld [vmem:[%s5 + $0x340] sm:$0xff]
        %v4627 = vsel %vm565, %v4598, 0
        %v4630 = vsel %vm565, %v4603, 0
        %4632 = vmatprep.subr.mxu0 0.0
        %4633 = vmatpush1.msra.mxu0 %v4622
        %4634 = vmatprep.subr.mxu0 0.0
        %4635 = vmatpush1.msra.mxu0 %v4623
        %4636 = vmatprep.subr.mxu0 0.0
        %4637 = vmatpush1.msra.mxu0 %v4624
        %4638 = vmatprep.subr.mxu0 0.0
        %4639 = vmatpush1.msra.mxu0 %v4625
        %4640 = vmatprep.subr.mxu0 0.0
        %4641 = vmatpush1.msra.mxu0 0.0
        %4642 = vmatprep.subr.mxu0 0.0
        %4643 = vmatpush1.msra.mxu0 0.0
        %4644 = vmatprep.subr.mxu0 0.0
        %4645 = vmatpush1.msra.mxu0 0.0
        %4646 = vmatprep.subr.mxu0 0.0
        %4647 = vmatpush1.msra.mxu0 0.0
        %4648 = vmatprep.subr.mxu0 0.0
        %4649 = vmatpush1.msra.mxu0 0.0
        %4650 = vmatprep.subr.mxu0 0.0
        %4651 = vmatpush1.msra.mxu0 0.0
        %4652 = vmatprep.subr.mxu0 0.0
        %4653 = vmatpush1.msra.mxu0 0.0
        %4654 = vmatprep.subr.mxu0 0.0
        %4655 = vmatpush1.msra.mxu0 0.0
        %4656 = vmatprep.subr.mxu0 0.0
        %4657 = vmatpush1.msra.mxu0 0.0
        %4658 = vmatprep.subr.mxu0 0.0
        %4659 = vmatpush1.msra.mxu0 0.0
        %4660 = vmatprep.subr.mxu0 0.0
        %4661 = vmatpush1.msra.mxu0 0.0
        %4662 = vmatprep.subr.mxu0 0.0
        %4663 = vmatpush1.msra.mxu0 0.0
        %4664 = vmatprep.subr.mxu0 0.0
        %4665 = vmatpush1.msra.mxu0 0.0
        %4666 = vmatprep.subr.mxu0 0.0
        %4667 = vmatpush1.msra.mxu0 0.0
        %4668 = vmatprep.subr.mxu0 0.0
        %4669 = vmatpush1.msra.mxu0 0.0
        %4670 = vmatprep.subr.mxu0 0.0
        %4671 = vmatpush1.msra.mxu0 0.0
        %4672 = vmatprep.subr.mxu0 0.0
        %4673 = vmatpush1.msra.mxu0 0.0
        %4674 = vmatprep.subr.mxu0 0.0
        %4675 = vmatpush1.msra.mxu0 0.0
        %4676 = vmatprep.subr.mxu0 0.0
        %4677 = vmatpush1.msra.mxu0 0.0
        %4678 = vmatprep.subr.mxu0 0.0
        %4679 = vmatpush1.msra.mxu0 0.0
        %4680 = vmatprep.subr.mxu0 0.0
        %4681 = vmatpush1.msra.mxu0 0.0
        %4682 = vmatprep.subr.mxu0 0.0
        %4683 = vmatpush1.msra.mxu0 0.0
        %4684 = vmatprep.subr.mxu0 0.0
        %4685 = vmatpush1.msra.mxu0 0.0
        %4686 = vmatprep.subr.mxu0 0.0
        %4687 = vmatpush1.msra.mxu0 0.0
        %4688 = vmatprep.subr.mxu0 0.0
        %4689 = vmatpush1.msra.mxu0 0.0
        %4690 = vmatprep.subr.mxu0 0.0
        %4691 = vmatpush1.msra.mxu0 0.0
        %4692 = vmatprep.subr.mxu0 0.0
        %4693 = vmatpush1.msra.mxu0 0.0
        %4694 = vmatprep.subr.mxu0 0.0
        %4695 = vmatpush1.msra.mxu0 0.0
        %4696 = vmatprep.mubr.f32.mxu0 0.0
        %4697 = vmatmul.mubr.f32.gmra.mrb[0].mxu0 %v4627
        %v4698 = vpop.f32.mrb[0].mxu0
        %v4699 = vadd.f32 0.0, %v4698
        %v4700 = vpop.f32.mrb[0].mxu0
        %4701 = vmatprep.mubr.f32.mxu0 0.0
        %4702 = vmatmul.mubr.f32.gmra.mrb[0].mxu0 %v4630
        %v4703 = vpop.f32.mrb[0].mxu0
        %v4704 = vadd.f32 0.0, %v4703
        %v4705 = vpop.f32.mrb[0].mxu0
        %4706 = vdwg.mxu0
        %v4708 = vsel %vm565, %v3496, 0
        %v4711 = vsel %vm565, %v3497, 0
        %4713 = vmatprep.subr.mxu0 0.0
        %4714 = vmatpush1.msra.mxu0 %v4618
        %4715 = vmatprep.subr.mxu0 0.0
        %4716 = vmatpush1.msra.mxu0 %v4619
        %4717 = vmatprep.subr.mxu0 0.0
        %4718 = vmatpush1.msra.mxu0 %v4620
        %4719 = vmatprep.subr.mxu0 0.0
        %4720 = vmatpush1.msra.mxu0 %v4621
        %4721 = vmatprep.subr.mxu0 0.0
        %4722 = vmatpush1.msra.mxu0 0.0
        %4723 = vmatprep.subr.mxu0 0.0
        %4724 = vmatpush1.msra.mxu0 0.0
        %4725 = vmatprep.subr.mxu0 0.0
        %4726 = vmatpush1.msra.mxu0 0.0
        %4727 = vmatprep.subr.mxu0 0.0
        %4728 = vmatpush1.msra.mxu0 0.0
        %4729 = vmatprep.subr.mxu0 0.0
        %4730 = vmatpush1.msra.mxu0 0.0
        %4731 = vmatprep.subr.mxu0 0.0
        %4732 = vmatpush1.msra.mxu0 0.0
        %4733 = vmatprep.subr.mxu0 0.0
        %4734 = vmatpush1.msra.mxu0 0.0
        %4735 = vmatprep.subr.mxu0 0.0
        %4736 = vmatpush1.msra.mxu0 0.0
        %4737 = vmatprep.subr.mxu0 0.0
        %4738 = vmatpush1.msra.mxu0 0.0
        %4739 = vmatprep.subr.mxu0 0.0
        %4740 = vmatpush1.msra.mxu0 0.0
        %4741 = vmatprep.subr.mxu0 0.0
        %4742 = vmatpush1.msra.mxu0 0.0
        %4743 = vmatprep.subr.mxu0 0.0
        %4744 = vmatpush1.msra.mxu0 0.0
        %4745 = vmatprep.subr.mxu0 0.0
        %4746 = vmatpush1.msra.mxu0 0.0
        %4747 = vmatprep.subr.mxu0 0.0
        %4748 = vmatpush1.msra.mxu0 0.0
        %4749 = vmatprep.subr.mxu0 0.0
        %4750 = vmatpush1.msra.mxu0 0.0
        %4751 = vmatprep.subr.mxu0 0.0
        %4752 = vmatpush1.msra.mxu0 0.0
        %4753 = vmatprep.subr.mxu0 0.0
        %4754 = vmatpush1.msra.mxu0 0.0
        %4755 = vmatprep.subr.mxu0 0.0
        %4756 = vmatpush1.msra.mxu0 0.0
        %4757 = vmatprep.subr.mxu0 0.0
        %4758 = vmatpush1.msra.mxu0 0.0
        %4759 = vmatprep.subr.mxu0 0.0
        %4760 = vmatpush1.msra.mxu0 0.0
        %4761 = vmatprep.subr.mxu0 0.0
        %4762 = vmatpush1.msra.mxu0 0.0
        %4763 = vmatprep.subr.mxu0 0.0
        %4764 = vmatpush1.msra.mxu0 0.0
        %4765 = vmatprep.subr.mxu0 0.0
        %4766 = vmatpush1.msra.mxu0 0.0
        %4767 = vmatprep.subr.mxu0 0.0
        %4768 = vmatpush1.msra.mxu0 0.0
        %4769 = vmatprep.subr.mxu0 0.0
        %4770 = vmatpush1.msra.mxu0 0.0
        %4771 = vmatprep.subr.mxu0 0.0
        %4772 = vmatpush1.msra.mxu0 0.0
        %4773 = vmatprep.subr.mxu0 0.0
        %4774 = vmatpush1.msra.mxu0 0.0
        %4775 = vmatprep.subr.mxu0 0.0
        %4776 = vmatpush1.msra.mxu0 0.0
        %4777 = vmatprep.mubr.f32.mxu0 0.0
        %4778 = vmatmul.mubr.f32.gmra.mrb[0].mxu0 %v4708
        %v4779 = vpop.f32.mrb[0].mxu0
        %v4780 = vadd.f32 %v4699, %v4779
        %v4781 = vpop.f32.mrb[0].mxu0
        %4782 = vmatprep.mubr.f32.mxu0 0.0
        %4783 = vmatmul.mubr.f32.gmra.mrb[0].mxu0 %v4711
        %v4784 = vpop.f32.mrb[0].mxu0
        %v4785 = vadd.f32 %v4704, %v4784
        %v4786 = vpop.f32.mrb[0].mxu0
        %4787 = vdwg.mxu0
        %v4788 = vld [vmem:[%s5 + $0x348] sm:$0x1]
        %v4789 = vlaneseq
        %v4790 = vshrl.u32 %v4789, 7
        %v4791 = vsub.s32 0, %v4790
        %v4792 = vrot.slane %v4788, %v4791
        %v4793 = vadd.f32 %v4780, %v4792
        %v4794 = vadd.f32 %v4785, %v4792
        %v4795 = vxor.u32 %v4793, 2147483648
        %v4796 = vxor.u32 %v4794, 2147483648
        %v4797 = vmul.f32 %v4795, 1.442695
        %v4798 = vpow.pop %v4797
        %v4799 = vmul.f32 %v4796, 1.442695
        %v4800 = vpow.pop %v4799
        %v4801 = vadd.f32 %v4798, 1.0
        %v4802 = vadd.f32 %v4800, 1.0
        %v4803 = vrcp.pop %v4801
        %v4804 = vmul.f32 1.0, %v4803
        %v4805 = vrcp.pop %v4802
        %v4806 = vmul.f32 1.0, %v4805
        %v4807 = vmul.f32 %v4793, %v4804
        %v4808 = vmul.f32 %v4794, %v4806
        %v4809 = vld [vmem:[%s5 + $0x350] sm:$0xff]
        %v4810 = vld [vmem:[%s5 + $0x358] sm:$0xff]
        %v4811 = vld [vmem:[%s5 + $0x360] sm:$0xff]
        %v4812 = vld [vmem:[%s5 + $0x368] sm:$0xff]
        %v4813 = vld [vmem:[%s5 + $0x370] sm:$0x1]
        %v4814 = vlaneseq
        %v4815 = vshrl.u32 %v4814, 7
        %v4816 = vsub.s32 0, %v4815
        %v4817 = vrot.slane %v4813, %v4816
        %v4819 = vsel %vm565, %v4807, 0
        %v4822 = vsel %vm565, %v4808, 0
        %4824 = vmatprep.subr.mxu0 0.0
        %4825 = vmatpush1.msra.mxu0 %v4809
        %4826 = vmatprep.subr.mxu0 0.0
        %4827 = vmatpush1.msra.mxu0 %v4810
        %4828 = vmatprep.subr.mxu0 0.0
        %4829 = vmatpush1.msra.mxu0 %v4811
        %4830 = vmatprep.subr.mxu0 0.0
        %4831 = vmatpush1.msra.mxu0 %v4812
        %4832 = vmatprep.subr.mxu0 0.0
        %4833 = vmatpush1.msra.mxu0 0.0
        %4834 = vmatprep.subr.mxu0 0.0
        %4835 = vmatpush1.msra.mxu0 0.0
        %4836 = vmatprep.subr.mxu0 0.0
        %4837 = vmatpush1.msra.mxu0 0.0
        %4838 = vmatprep.subr.mxu0 0.0
        %4839 = vmatpush1.msra.mxu0 0.0
        %4840 = vmatprep.subr.mxu0 0.0
        %4841 = vmatpush1.msra.mxu0 0.0
        %4842 = vmatprep.subr.mxu0 0.0
        %4843 = vmatpush1.msra.mxu0 0.0
        %4844 = vmatprep.subr.mxu0 0.0
        %4845 = vmatpush1.msra.mxu0 0.0
        %4846 = vmatprep.subr.mxu0 0.0
        %4847 = vmatpush1.msra.mxu0 0.0
        %4848 = vmatprep.subr.mxu0 0.0
        %4849 = vmatpush1.msra.mxu0 0.0
        %4850 = vmatprep.subr.mxu0 0.0
        %4851 = vmatpush1.msra.mxu0 0.0
        %4852 = vmatprep.subr.mxu0 0.0
        %4853 = vmatpush1.msra.mxu0 0.0
        %4854 = vmatprep.subr.mxu0 0.0
        %4855 = vmatpush1.msra.mxu0 0.0
        %4856 = vmatprep.subr.mxu0 0.0
        %4857 = vmatpush1.msra.mxu0 0.0
        %4858 = vmatprep.subr.mxu0 0.0
        %4859 = vmatpush1.msra.mxu0 0.0
        %4860 = vmatprep.subr.mxu0 0.0
        %4861 = vmatpush1.msra.mxu0 0.0
        %4862 = vmatprep.subr.mxu0 0.0
        %4863 = vmatpush1.msra.mxu0 0.0
        %4864 = vmatprep.subr.mxu0 0.0
        %4865 = vmatpush1.msra.mxu0 0.0
        %4866 = vmatprep.subr.mxu0 0.0
        %4867 = vmatpush1.msra.mxu0 0.0
        %4868 = vmatprep.subr.mxu0 0.0
        %4869 = vmatpush1.msra.mxu0 0.0
        %4870 = vmatprep.subr.mxu0 0.0
        %4871 = vmatpush1.msra.mxu0 0.0
        %4872 = vmatprep.subr.mxu0 0.0
        %4873 = vmatpush1.msra.mxu0 0.0
        %4874 = vmatprep.subr.mxu0 0.0
        %4875 = vmatpush1.msra.mxu0 0.0
        %4876 = vmatprep.subr.mxu0 0.0
        %4877 = vmatpush1.msra.mxu0 0.0
        %4878 = vmatprep.subr.mxu0 0.0
        %4879 = vmatpush1.msra.mxu0 0.0
        %4880 = vmatprep.subr.mxu0 0.0
        %4881 = vmatpush1.msra.mxu0 0.0
        %4882 = vmatprep.subr.mxu0 0.0
        %4883 = vmatpush1.msra.mxu0 0.0
        %4884 = vmatprep.subr.mxu0 0.0
        %4885 = vmatpush1.msra.mxu0 0.0
        %4886 = vmatprep.subr.mxu0 0.0
        %4887 = vmatpush1.msra.mxu0 0.0
        %4888 = vmatprep.mubr.f32.mxu0 0.0
        %4889 = vmatmul.mubr.f32.gmra.mrb[0].mxu0 %v4819
        %v4890 = vpop.f32.mrb[0].mxu0
        %v4891 = vadd.f32 %v4817, %v4890
        %v4892 = vpop.f32.mrb[0].mxu0
        %4893 = vmatprep.mubr.f32.mxu0 0.0
        %4894 = vmatmul.mubr.f32.gmra.mrb[0].mxu0 %v4822
        %v4895 = vpop.f32.mrb[0].mxu0
        %v4896 = vadd.f32 %v4817, %v4895
        %v4897 = vpop.f32.mrb[0].mxu0
        %4898 = vdwg.mxu0
        %v4899 = vadd.f32 %v4891, %v3496
        %v4900 = vadd.f32 %v4896, %v3497
        %4901 = vst.msk [vmem:[%s332] sm:$0xff] %vm565, %v4899
        %4902 = vst.msk [vmem:[%s332 + $0x8] sm:$0xff] %vm565, %v4900
        %4903 = vst.msk [vmem:[%s369] sm:$0xff] %vm765, %v4616
        %4904 = vst.msk [vmem:[%s369 + $0x8] sm:$0xff] %vm765, %v4617
        %s4905 = sand.u32 %s181, 1
        %s4906 = scalar_lea.sflag [#allocation3], %s4905
        %s4907 = sand.u32 %s181, 1
        %s4908 = smul.addr %s4907, 16
        %s4909 = scalar_lea.vmem [#allocation2], %s4908
        %p4910 = scmp.lt.s32.totalorder %s22, 1
        %s4911 = scalar_select %p4910, %s22, 1
        %s4912 = smul.addr %s4911, 2
        %s4913 = smul.addr %s4912, 8
        %s4914 = scalar_lea.vmem %s7, %s4913
        // Predicated region
        $region45: #{forward.1} parent=43 // pred_check
          %p4915 = pneg %p191
        $region46: #{forward.1} parent=43 // pred_check_branch
          %4917 = sbr.rel (%p4915) target = $region48
        $region47: #{forward.1} parent=43 // pred_region
          %s4919 = ssub.s32 256, 256
          %4920 = vsyncadd %s4906, %s4919
          %s4921 = smul.addr %s22, 2
          %s4922 = smul.addr %s4921, 128
          %s4923 = scalar_lea.hbm %s6, %s4922
          %s4924 = sshll.u32 %s4909, 4
          %s4925 = int_to_ptr.vmem [resolvable:$true] %s4924
          %4930 = dma.vmem_to_hbm [thread:$0]  %s4925, 256, %s4923, %s4906, 128, 128, 8
        $region48: #{forward.1} parent=43 // pred_fallthru
          _
        // Predicated region
        $region49: #{forward.1} parent=43 // pred_check
          %p4931 = pneg %p217
        $region50: #{forward.1} parent=43 // pred_check_branch
          %4933 = sbr.rel (%p4931) target = $region52
        $region51: #{forward.1} parent=43 // pred_region
          _
        $region52: #{forward.1} parent=43 // pred_fallthru
          _
      $region44: #{forward.1} parent=5 // pred_fallthru
        _
      %p4934 = scmp.le.s32.totalorder 2, %s17
      // Predicated region
      $region53: #{forward.1} parent=5 // pred_check
        %p4935 = pneg %p4934
      $region54: #{forward.1} parent=5 // pred_check_branch
        %4937 = sbr.rel (%p4935) target = $region56
      $region55: #{forward.1} parent=5 // pred_region
        %s4938 = ssub.s32 %s17, 2
        // Predicated region
        $region57: #{forward.1} parent=55 // pred_check
          %p4939 = pneg %p197
        $region58: #{forward.1} parent=55 // pred_check_branch
          %4941 = sbr.rel (%p4939) target = $region60
        $region59: #{forward.1} parent=55 // pred_region
          %s4942 = sand.u32 %s182, 1
          %s4943 = scalar_lea.sflag [#allocation3], %s4942
          %s4944 = sand.u32 %s182, 1
          %s4945 = smul.addr %s4944, 16
          %s4946 = scalar_lea.vmem [#allocation2], %s4945
          %4947 = dma.done %s4943, 256
        $region60: #{forward.1} parent=55 // pred_fallthru
          _
        // Predicated region
        $region61: #{forward.1} parent=55 // pred_check
          %p4948 = pneg %p223
        $region62: #{forward.1} parent=55 // pred_check_branch
          %4950 = sbr.rel (%p4948) target = $region64
        $region63: #{forward.1} parent=55 // pred_region
          %p4951 = scmp.lt.s32.totalorder %s23, 1
          %s4952 = scalar_select %p4951, %s23, 1
          %s4953 = smul.addr %s4952, 2
          %s4954 = smul.addr %s4953, 8
          %s4955 = scalar_lea.vmem %s7, %s4954
        $region64: #{forward.1} parent=55 // pred_fallthru
          _
      $region56: #{forward.1} parent=5 // pred_fallthru
        _
    $region6: #{forward.1} parent=1 // loop_footer
      %s21 = sadd.s32 1, %s17
    $region7: #{forward.1} parent=1 // loop_footer_branch
      %16 = sbr.rel target = $region3
    $region8: #{forward.1} parent=1 // loop_exit
      _
    %4956 = vsyncpa [#allocation3], 1
    %s4957 = scalar_lea.sflag [#allocation3], 1
    %4958 = vsyncpa %s4957, 1

</llo_original>
